<compile_context>
chip_gen: v7x
topology: tpu7x:2x2x1
jax: 0.10.0
libtpu: 0.0.40
codegen_flags: <defaults>
</compile_context>

<pallas_src>
import jax
import jax.numpy as jnp
from jax.experimental import pallas as pl
from jax.experimental.pallas import tpu as pltpu


def _basic_block_kernel(x_ref, w1_ref, b1_ref, w2_ref, b2_ref, out_ref,
                        xpad, o1pad):
    # x_ref  : (H, W, C)        f32   full input image for this batch element
    # w*_ref : (9C, C)          bf16  conv taps with BN scale folded, rows = (kh, kw, cin)
    # b*_ref : (1, C)           f32   folded BN bias
    # out_ref: (TH, W, C)       f32   output row tile (rows [j*TH, j*TH+TH))
    # xpad   : (TH+4, W+2, C)   bf16  zero-padded input rows [j*TH-2, j*TH+TH+2)
    # o1pad  : (TH+2, W+2, C)   bf16  zero-padded conv1 rows [j*TH-1, j*TH+TH+1)
    TH, W, C = out_ref.shape
    j = pl.program_id(1)
    nj = pl.num_programs(1)
    r0 = pl.multiple_of(j * TH, TH)

    # ---- Stage haloed input rows into the padded bf16 scratch. ------------------
    # Halo strips are rewritten every step; correctness never depends on what a
    # previous grid step left in the scratch (safe under any core sharding).
    zcol_x = jnp.zeros((TH + 4, 1, C), jnp.bfloat16)
    xpad[:, 0:1, :] = zcol_x                      # conv1 zero padding, left column
    xpad[:, W + 1:W + 2, :] = zcol_x              # conv1 zero padding, right column

    x_center = x_ref[pl.ds(r0, TH), :, :]         # (TH, W, C) f32 — also the residual
    xpad[2:2 + TH, 1:1 + W, :] = x_center.astype(jnp.bfloat16)

    zrow2 = jnp.zeros((2, W, C), jnp.bfloat16)

    @pl.when(j == 0)
    def _():                                      # image top: zero-pad rows
        xpad[0:2, 1:1 + W, :] = zrow2

    @pl.when(j > 0)
    def _():                                      # interior: real 2-row top halo
        xpad[0:2, 1:1 + W, :] = x_ref[pl.ds(r0 - 2, 2), :, :].astype(jnp.bfloat16)

    @pl.when(j == nj - 1)
    def _():                                      # image bottom: zero-pad rows
        xpad[TH + 2:TH + 4, 1:1 + W, :] = zrow2

    @pl.when(j < nj - 1)
    def _():                                      # interior: real 2-row bottom halo
        xpad[TH + 2:TH + 4, 1:1 + W, :] = x_ref[pl.ds(r0 + TH, 2), :, :].astype(jnp.bfloat16)

    # ---- 3x3 conv as 9 accumulated MXU dots (no im2col slab). -------------------
    def conv3x3(pad, n_rows, w_ref, b_ref):
        acc = None
        for kh in range(3):
            for kw in range(3):
                t = kh * 3 + kw
                win = pad[kh:kh + n_rows, kw:kw + W, :]              # (n_rows, W, C) bf16
                d = jnp.dot(win.reshape(n_rows * W, C),
                            w_ref[t * C:(t + 1) * C, :],
                            preferred_element_type=jnp.float32)
                acc = d if acc is None else acc + d
        return acc + b_ref[...]                                      # (n_rows*W, C) f32

    # conv1 + bn1 + relu over TH+2 rows (1-row halo each side needed by conv2).
    out1 = jnp.maximum(conv3x3(xpad, TH + 2, w1_ref, b1_ref), 0.0)

    zcol_1 = jnp.zeros((TH + 2, 1, C), jnp.bfloat16)
    o1pad[:, 0:1, :] = zcol_1                     # conv2 zero padding, left column
    o1pad[:, W + 1:W + 2, :] = zcol_1             # conv2 zero padding, right column
    o1pad[:, 1:1 + W, :] = out1.reshape(TH + 2, W, C).astype(jnp.bfloat16)

    zrow1 = jnp.zeros((1, W + 2, C), jnp.bfloat16)

    @pl.when(j == 0)
    def _():                                      # conv1 row -1 does not exist -> zero pad
        o1pad[0:1, :, :] = zrow1

    @pl.when(j == nj - 1)
    def _():                                      # conv1 row H does not exist -> zero pad
        o1pad[TH + 1:TH + 2, :, :] = zrow1

    # conv2 + bn2 + residual + relu (identity from the unmodified f32 input rows).
    out2 = conv3x3(o1pad, TH, w2_ref, b2_ref)                        # (TH*W, C) f32
    out2 = out2 + x_center.reshape(TH * W, C)
    out_ref[...] = jnp.maximum(out2, 0.0).reshape(TH, W, C).astype(out_ref.dtype)


def _choose_row_tile(h):
    # Largest row tile in {32, 16, 8} that divides H and yields >= 2 row steps;
    # fall back to the full image when H is small / indivisible.
    for th in (32, 16, 8):
        if h % th == 0 and h // th >= 2:
            return th
    return h


def basic_block_forward(x_nchw, w1, g1, be1, m1, v1, w2, g2, be2, m2, v2, eps=1e-5):
    """BasicBlock forward (stride=1, no downsample).  x_nchw: (N, C, H, W) f32 -> NCHW."""
    assert w1.shape[0] == w1.shape[1] == x_nchw.shape[1], "inplanes == planes required"

    x = jnp.transpose(x_nchw, (0, 2, 3, 1))        # NHWC (channels-last compute layout)
    N, H, W, C = x.shape

    # Fold BN (inference): y = conv(x; w * scale) + bias.
    def fold(w, g, be, m, v):
        inv = g / jnp.sqrt(v + eps)                                  # (Cout,)
        w_r = jnp.transpose(w, (2, 3, 1, 0)).reshape(9 * C, C)       # rows = (kh, kw, cin)
        w_r = (w_r * inv[None, :]).astype(jnp.bfloat16)              # scale folded, bf16
        b = (be - m * inv).reshape(1, C).astype(jnp.float32)
        return w_r, b

    w1_r, b1 = fold(w1, g1, be1, m1, v1)
    w2_r, b2 = fold(w2, g2, be2, m2, v2)

    TH = _choose_row_tile(H)
    nj = H // TH

    # Explicit VMEM budget (default scoped limit is only 16/32 MiB).
    f32b, bf16b = 4, 2
    est = (2 * H * W * C * f32b                          # input image block (double-buffered)
           + 2 * TH * W * C * f32b                       # output row tiles (double-buffered)
           + 2 * (2 * 9 * C * C * bf16b + 2 * C * f32b)  # weights + biases
           + (TH + 4) * (W + 2) * C * bf16b              # xpad scratch
           + (TH + 2) * (W + 2) * C * bf16b              # o1pad scratch
           + 8 * (TH + 2) * W * C * f32b)                # f32 accumulators / temporaries
    try:  # physical VMEM: 128 MiB on v5e/v6e, 64 MiB per TensorCore on v7x
        phys = getattr(pltpu.get_tpu_info(), "vmem_capacity_bytes", 64 * 1024 * 1024)
    except Exception:
        phys = 64 * 1024 * 1024
    vmem_limit = int(min(phys * 3 // 4, max(2 * est, 16 * 1024 * 1024)))

    out_nhwc = pl.pallas_call(
        _basic_block_kernel,
        out_shape=jax.ShapeDtypeStruct((N, H, W, C), x.dtype),
        grid_spec=pltpu.PrefetchScalarGridSpec(
            num_scalar_prefetch=0,
            grid=(N, nj),
            in_specs=[
                # Full image per batch element; block index constant across the row
                # axis -> DMA'd once per n, resident in VMEM for all its row steps.
                pl.BlockSpec((None, H, W, C), lambda n, j: (n, 0, 0, 0)),
                pl.BlockSpec((9 * C, C), lambda n, j: (0, 0)),
                pl.BlockSpec((1, C), lambda n, j: (0, 0)),
                pl.BlockSpec((9 * C, C), lambda n, j: (0, 0)),
                pl.BlockSpec((1, C), lambda n, j: (0, 0)),
            ],
            out_specs=pl.BlockSpec((None, TH, W, C), lambda n, j: (n, j, 0, 0)),
            scratch_shapes=[
                pltpu.VMEM((TH + 4, W + 2, C), jnp.bfloat16),   # padded input rows
                pltpu.VMEM((TH + 2, W + 2, C), jnp.bfloat16),   # padded conv1 rows
            ],
        ),
        compiler_params=pltpu.CompilerParams(
            dimension_semantics=("parallel", "parallel"),
            vmem_limit_bytes=vmem_limit,
        ),
    )(x, w1_r, b1, w2_r, b2)

    return jnp.transpose(out_nhwc, (0, 3, 1, 2))         # -> NCHW


def _ref_forward_f32(x, w1, g1, be1, m1, v1, w2, g2, be2, m2, v2, eps=1e-5):
    """Pure-JAX f32 reference (NCHW, matches the PyTorch module in eval mode)."""
    def conv(a, w):
        return jax.lax.conv_general_dilated(
            a, w, window_strides=(1, 1), padding=((1, 1), (1, 1)),
            dimension_numbers=('NCHW', 'OIHW', 'NCHW'))

    def bn(a, g, b, m, v):
        sh = (1, -1, 1, 1)
        return (a - m.reshape(sh)) / jnp.sqrt(v.reshape(sh) + eps) * g.reshape(sh) + b.reshape(sh)

    out = jax.nn.relu(bn(conv(x, w1), g1, be1, m1, v1))
    out = bn(conv(out, w2), g2, be2, m2, v2)
    return jax.nn.relu(out + x)


def _ref_forward_bf16_folded(x_nchw, w1, g1, be1, m1, v1, w2, g2, be2, m2, v2, eps=1e-5):
    """Reference with the same BN folding + bf16 operand rounding as the kernel."""
    x = jnp.transpose(x_nchw, (0, 2, 3, 1))                      # NHWC

    def fold(w, g, be, m, v):
        inv = g / jnp.sqrt(v + eps)
        w_hwio = jnp.transpose(w, (2, 3, 1, 0))                  # (kh, kw, cin, cout)
        return (w_hwio * inv).astype(jnp.bfloat16), (be - m * inv).astype(jnp.float32)

    w1f, b1 = fold(w1, g1, be1, m1, v1)
    w2f, b2 = fold(w2, g2, be2, m2, v2)

    def conv(a_bf16, w):
        return jax.lax.conv_general_dilated(
            a_bf16, w, window_strides=(1, 1), padding=((1, 1), (1, 1)),
            dimension_numbers=('NHWC', 'HWIO', 'NHWC'),
            preferred_element_type=jnp.float32)

    o1 = jnp.maximum(conv(x.astype(jnp.bfloat16), w1f) + b1, 0.0)
    o2 = conv(o1.astype(jnp.bfloat16), w2f) + b2
    out = jnp.maximum(o2 + x, 0.0)
    return jnp.transpose(out, (0, 3, 1, 2))


if __name__ == "__main__":
    # small shapes: batch=2, inplanes=planes=4, spatial=16x16  (row tile TH=8 -> 2 row steps)
    N, C, H, W = 2, 4, 16, 16
    key = jax.random.PRNGKey(0)
    ks = jax.random.split(key, 11)

    x = jax.random.normal(ks[0], (N, C, H, W), jnp.float32)

    # conv weights: (Cout, Cin, 3, 3), no bias
    w1 = jax.random.normal(ks[1], (C, C, 3, 3), jnp.float32) * 0.1
    w2 = jax.random.normal(ks[2], (C, C, 3, 3), jnp.float32) * 0.1

    # BN params (gamma, beta, running_mean, running_var)
    g1 = 1.0 + 0.1 * jax.random.normal(ks[3], (C,), jnp.float32)
    be1 = 0.1 * jax.random.normal(ks[4], (C,), jnp.float32)
    m1 = 0.1 * jax.random.normal(ks[5], (C,), jnp.float32)
    v1 = jax.random.uniform(ks[6], (C,), jnp.float32, 0.5, 1.5)
    g2 = 1.0 + 0.1 * jax.random.normal(ks[7], (C,), jnp.float32)
    be2 = 0.1 * jax.random.normal(ks[8], (C,), jnp.float32)
    m2 = 0.1 * jax.random.normal(ks[9], (C,), jnp.float32)
    v2 = jax.random.uniform(ks[10], (C,), jnp.float32, 0.5, 1.5)

    out = basic_block_forward(x, w1, g1, be1, m1, v1, w2, g2, be2, m2, v2)
    out = jax.block_until_ready(out)
    assert out.shape == (N, C, H, W)

    # Loose check vs. exact f32 module semantics (kernel uses bf16 MXU operands).
    ref32 = _ref_forward_f32(x, w1, g1, be1, m1, v1, w2, g2, be2, m2, v2)
    err32 = jnp.max(jnp.abs(out - ref32))
    assert jnp.allclose(out, ref32, atol=5e-2, rtol=5e-2), f"max err vs f32 ref {err32}"

    # Tight check vs. a reference with identical BN folding + bf16 operand rounding
    # (catches halo / indexing bugs that the loose tolerance would hide).
    refbf = _ref_forward_bf16_folded(x, w1, g1, be1, m1, v1, w2, g2, be2, m2, v2)
    errbf = jnp.max(jnp.abs(out - refbf))
    assert jnp.allclose(out, refbf, atol=1e-2, rtol=1e-2), f"max err vs bf16 ref {errbf}"

    print("KERNEL_OK")
</pallas_src>

<mosaic_0001>
module attributes {stable_mosaic.version = 11 : i64} {
  func.func @_basic_block_kernel(%arg0: i32, %arg1: i32, %arg2: memref<1x16x16x4xf32, #tpu.memory_space<vmem>>, %arg3: memref<36x4xbf16, #tpu.memory_space<vmem>>, %arg4: memref<1x4xf32, #tpu.memory_space<vmem>>, %arg5: memref<36x4xbf16, #tpu.memory_space<vmem>>, %arg6: memref<1x4xf32, #tpu.memory_space<vmem>>, %arg7: memref<1x8x16x4xf32, #tpu.memory_space<vmem>>, %arg8: memref<12x18x4xbf16, #tpu.memory_space<vmem>>, %arg9: memref<10x18x4xbf16, #tpu.memory_space<vmem>>) attributes {dimension_semantics = [#tpu.dimension_semantics<parallel>, #tpu.dimension_semantics<parallel>], iteration_bounds = array<i64: 2, 2>, scalar_prefetch = 0 : i64, scratch_operands = 2 : i64, tpu.core_type = #tpu.core_type<tc>, window_params = [{transform_indices = @transform_0, window_bounds = array<i64: 1, 16, 16, 4>}, {pipeline_mode = #tpu.pipeline_mode<synchronous>, transform_indices = @transform_1, window_bounds = array<i64: 36, 4>}, {pipeline_mode = #tpu.pipeline_mode<synchronous>, transform_indices = @transform_2, window_bounds = array<i64: 1, 4>}, {pipeline_mode = #tpu.pipeline_mode<synchronous>, transform_indices = @transform_3, window_bounds = array<i64: 36, 4>}, {pipeline_mode = #tpu.pipeline_mode<synchronous>, transform_indices = @transform_4, window_bounds = array<i64: 1, 4>}, {transform_indices = @transform_5, window_bounds = array<i64: 1, 8, 16, 4>}]} {
    %c8_i32 = arith.constant 8 : i32
    %0 = arith.muli %arg1, %c8_i32 : i32
    %1 = tpu.assume_multiple %0, 8 : i32
    %cst = arith.constant 0.000000e+00 : bf16
    %2 = vector.broadcast %cst : bf16 to vector<12x1x4xbf16>
    %c0 = arith.constant 0 : index
    %c0_0 = arith.constant 0 : index
    %c0_1 = arith.constant 0 : index
    %3 = vector.load %arg8[%c0, %c0_0, %c0_1] : memref<12x18x4xbf16, #tpu.memory_space<vmem>>, vector<12x1x4xbf16>
    tpu.vector_store %arg8[%c0, %c0_0, %c0_1], %2 {strides = array<i32>} : memref<12x18x4xbf16, #tpu.memory_space<vmem>>, vector<12x1x4xbf16>,
    %c0_2 = arith.constant 0 : index
    %c17 = arith.constant 17 : index
    %c0_3 = arith.constant 0 : index
    %4 = vector.load %arg8[%c0_2, %c17, %c0_3] : memref<12x18x4xbf16, #tpu.memory_space<vmem>>, vector<12x1x4xbf16>
    tpu.vector_store %arg8[%c0_2, %c17, %c0_3], %2 {strides = array<i32>} : memref<12x18x4xbf16, #tpu.memory_space<vmem>>, vector<12x1x4xbf16>,
    %c0_4 = arith.constant 0 : index
    %5 = arith.index_cast %1 : i32 to index
    %c0_5 = arith.constant 0 : index
    %c0_6 = arith.constant 0 : index
    %6 = vector.load %arg2[%c0_4, %5, %c0_5, %c0_6] : memref<1x16x16x4xf32, #tpu.memory_space<vmem>>, vector<1x8x16x4xf32>
    %7 = vector.shape_cast %6 : vector<1x8x16x4xf32> to vector<8x16x4xf32>
    %8 = arith.truncf %7 : vector<8x16x4xf32> to vector<8x16x4xbf16>
    %c2 = arith.constant 2 : index
    %c1 = arith.constant 1 : index
    %c0_7 = arith.constant 0 : index
    %9 = vector.load %arg8[%c2, %c1, %c0_7] : memref<12x18x4xbf16, #tpu.memory_space<vmem>>, vector<8x16x4xbf16>
    tpu.vector_store %arg8[%c2, %c1, %c0_7], %8 {strides = array<i32>} : memref<12x18x4xbf16, #tpu.memory_space<vmem>>, vector<8x16x4xbf16>,
    %cst_8 = arith.constant 0.000000e+00 : bf16
    %10 = vector.broadcast %cst_8 : bf16 to vector<2x16x4xbf16>
    %c0_i32 = arith.constant 0 : i32
    %11 = arith.cmpi eq, %arg1, %c0_i32 : i32
    %12 = arith.extui %11 : i1 to i32
    %c0_i32_9 = arith.constant 0 : i32
    %13 = arith.cmpi ne, %12, %c0_i32_9 : i32
    scf.if %13 {
      %c0_140 = arith.constant 0 : index
      %c1_141 = arith.constant 1 : index
      %c0_142 = arith.constant 0 : index
      %140 = vector.load %arg8[%c0_140, %c1_141, %c0_142] : memref<12x18x4xbf16, #tpu.memory_space<vmem>>, vector<2x16x4xbf16>
      tpu.vector_store %arg8[%c0_140, %c1_141, %c0_142], %10 {strides = array<i32>} : memref<12x18x4xbf16, #tpu.memory_space<vmem>>, vector<2x16x4xbf16>,
    } else {
    }
    %c0_i32_10 = arith.constant 0 : i32
    %14 = arith.cmpi sgt, %arg1, %c0_i32_10 : i32
    %15 = arith.extui %14 : i1 to i32
    %c0_i32_11 = arith.constant 0 : i32
    %16 = arith.cmpi ne, %15, %c0_i32_11 : i32
    scf.if %16 {
      %c2_i32 = arith.constant 2 : i32
      %140 = arith.subi %1, %c2_i32 : i32
      %c0_140 = arith.constant 0 : index
      %141 = arith.index_cast %140 : i32 to index
      %c0_141 = arith.constant 0 : index
      %c0_142 = arith.constant 0 : index
      %142 = vector.load %arg2[%c0_140, %141, %c0_141, %c0_142] : memref<1x16x16x4xf32, #tpu.memory_space<vmem>>, vector<1x2x16x4xf32>
      %143 = vector.shape_cast %142 : vector<1x2x16x4xf32> to vector<2x16x4xf32>
      %144 = arith.truncf %143 : vector<2x16x4xf32> to vector<2x16x4xbf16>
      %c0_143 = arith.constant 0 : index
      %c1_144 = arith.constant 1 : index
      %c0_145 = arith.constant 0 : index
      %145 = vector.load %arg8[%c0_143, %c1_144, %c0_145] : memref<12x18x4xbf16, #tpu.memory_space<vmem>>, vector<2x16x4xbf16>
      tpu.vector_store %arg8[%c0_143, %c1_144, %c0_145], %144 {strides = array<i32>} : memref<12x18x4xbf16, #tpu.memory_space<vmem>>, vector<2x16x4xbf16>,
    } else {
    }
    %c1_i32 = arith.constant 1 : i32
    %17 = arith.cmpi eq, %arg1, %c1_i32 : i32
    %18 = arith.extui %17 : i1 to i32
    %c0_i32_12 = arith.constant 0 : i32
    %19 = arith.cmpi ne, %18, %c0_i32_12 : i32
    scf.if %19 {
      %c10 = arith.constant 10 : index
      %c1_140 = arith.constant 1 : index
      %c0_141 = arith.constant 0 : index
      %140 = vector.load %arg8[%c10, %c1_140, %c0_141] : memref<12x18x4xbf16, #tpu.memory_space<vmem>>, vector<2x16x4xbf16>
      tpu.vector_store %arg8[%c10, %c1_140, %c0_141], %10 {strides = array<i32>} : memref<12x18x4xbf16, #tpu.memory_space<vmem>>, vector<2x16x4xbf16>,
    } else {
    }
    %c1_i32_13 = arith.constant 1 : i32
    %20 = arith.cmpi slt, %arg1, %c1_i32_13 : i32
    %21 = arith.extui %20 : i1 to i32
    %c0_i32_14 = arith.constant 0 : i32
    %22 = arith.cmpi ne, %21, %c0_i32_14 : i32
    scf.if %22 {
      %c8_i32_140 = arith.constant 8 : i32
      %140 = arith.addi %1, %c8_i32_140 : i32
      %c0_141 = arith.constant 0 : index
      %141 = arith.index_cast %140 : i32 to index
      %c0_142 = arith.constant 0 : index
      %c0_143 = arith.constant 0 : index
      %142 = vector.load %arg2[%c0_141, %141, %c0_142, %c0_143] : memref<1x16x16x4xf32, #tpu.memory_space<vmem>>, vector<1x2x16x4xf32>
      %143 = vector.shape_cast %142 : vector<1x2x16x4xf32> to vector<2x16x4xf32>
      %144 = arith.truncf %143 : vector<2x16x4xf32> to vector<2x16x4xbf16>
      %c10 = arith.constant 10 : index
      %c1_144 = arith.constant 1 : index
      %c0_145 = arith.constant 0 : index
      %145 = vector.load %arg8[%c10, %c1_144, %c0_145] : memref<12x18x4xbf16, #tpu.memory_space<vmem>>, vector<2x16x4xbf16>
      tpu.vector_store %arg8[%c10, %c1_144, %c0_145], %144 {strides = array<i32>} : memref<12x18x4xbf16, #tpu.memory_space<vmem>>, vector<2x16x4xbf16>,
    } else {
    }
    %c0_15 = arith.constant 0 : index
    %c0_16 = arith.constant 0 : index
    %c0_17 = arith.constant 0 : index
    %23 = vector.load %arg8[%c0_15, %c0_16, %c0_17] : memref<12x18x4xbf16, #tpu.memory_space<vmem>>, vector<10x16x4xbf16>
    %24 = vector.shape_cast %23 : vector<10x16x4xbf16> to vector<160x4xbf16>
    %c0_18 = arith.constant 0 : index
    %c0_19 = arith.constant 0 : index
    %25 = vector.load %arg3[%c0_18, %c0_19] : memref<36x4xbf16, #tpu.memory_space<vmem>>, vector<4x4xbf16>
    %cst_20 = arith.constant dense<0.000000e+00> : vector<160x4xf32>
    %26 = tpu.matmul %24, %25, %cst_20 {dimension_numbers = #tpu.dot_dimension_numbers<[1], [0], [0], [1], [0, 0, 1, 1], [], []>} : vector<160x4xbf16>, vector<4x4xbf16>, vector<160x4xf32> -> vector<160x4xf32>
    %c0_21 = arith.constant 0 : index
    %c1_22 = arith.constant 1 : index
    %c0_23 = arith.constant 0 : index
    %27 = vector.load %arg8[%c0_21, %c1_22, %c0_23] : memref<12x18x4xbf16, #tpu.memory_space<vmem>>, vector<10x16x4xbf16>
    %28 = vector.shape_cast %27 : vector<10x16x4xbf16> to vector<160x4xbf16>
    %c4 = arith.constant 4 : index
    %c0_24 = arith.constant 0 : index
    %29 = vector.load %arg3[%c4, %c0_24] : memref<36x4xbf16, #tpu.memory_space<vmem>>, vector<4x4xbf16>
    %cst_25 = arith.constant dense<0.000000e+00> : vector<160x4xf32>
    %30 = tpu.matmul %28, %29, %cst_25 {dimension_numbers = #tpu.dot_dimension_numbers<[1], [0], [0], [1], [0, 0, 1, 1], [], []>} : vector<160x4xbf16>, vector<4x4xbf16>, vector<160x4xf32> -> vector<160x4xf32>
    %31 = arith.addf %26, %30 : vector<160x4xf32>
    %c0_26 = arith.constant 0 : index
    %c2_27 = arith.constant 2 : index
    %c0_28 = arith.constant 0 : index
    %32 = vector.load %arg8[%c0_26, %c2_27, %c0_28] : memref<12x18x4xbf16, #tpu.memory_space<vmem>>, vector<10x16x4xbf16>
    %33 = vector.shape_cast %32 : vector<10x16x4xbf16> to vector<160x4xbf16>
    %c8 = arith.constant 8 : index
    %c0_29 = arith.constant 0 : index
    %34 = vector.load %arg3[%c8, %c0_29] : memref<36x4xbf16, #tpu.memory_space<vmem>>, vector<4x4xbf16>
    %cst_30 = arith.constant dense<0.000000e+00> : vector<160x4xf32>
    %35 = tpu.matmul %33, %34, %cst_30 {dimension_numbers = #tpu.dot_dimension_numbers<[1], [0], [0], [1], [0, 0, 1, 1], [], []>} : vector<160x4xbf16>, vector<4x4xbf16>, vector<160x4xf32> -> vector<160x4xf32>
    %36 = arith.addf %31, %35 : vector<160x4xf32>
    %c1_31 = arith.constant 1 : index
    %c0_32 = arith.constant 0 : index
    %c0_33 = arith.constant 0 : index
    %37 = vector.load %arg8[%c1_31, %c0_32, %c0_33] : memref<12x18x4xbf16, #tpu.memory_space<vmem>>, vector<10x16x4xbf16>
    %38 = vector.shape_cast %37 : vector<10x16x4xbf16> to vector<160x4xbf16>
    %c12 = arith.constant 12 : index
    %c0_34 = arith.constant 0 : index
    %39 = vector.load %arg3[%c12, %c0_34] : memref<36x4xbf16, #tpu.memory_space<vmem>>, vector<4x4xbf16>
    %cst_35 = arith.constant dense<0.000000e+00> : vector<160x4xf32>
    %40 = tpu.matmul %38, %39, %cst_35 {dimension_numbers = #tpu.dot_dimension_numbers<[1], [0], [0], [1], [0, 0, 1, 1], [], []>} : vector<160x4xbf16>, vector<4x4xbf16>, vector<160x4xf32> -> vector<160x4xf32>
    %41 = arith.addf %36, %40 : vector<160x4xf32>
    %c1_36 = arith.constant 1 : index
    %c1_37 = arith.constant 1 : index
    %c0_38 = arith.constant 0 : index
    %42 = vector.load %arg8[%c1_36, %c1_37, %c0_38] : memref<12x18x4xbf16, #tpu.memory_space<vmem>>, vector<10x16x4xbf16>
    %43 = vector.shape_cast %42 : vector<10x16x4xbf16> to vector<160x4xbf16>
    %c16 = arith.constant 16 : index
    %c0_39 = arith.constant 0 : index
    %44 = vector.load %arg3[%c16, %c0_39] : memref<36x4xbf16, #tpu.memory_space<vmem>>, vector<4x4xbf16>
    %cst_40 = arith.constant dense<0.000000e+00> : vector<160x4xf32>
    %45 = tpu.matmul %43, %44, %cst_40 {dimension_numbers = #tpu.dot_dimension_numbers<[1], [0], [0], [1], [0, 0, 1, 1], [], []>} : vector<160x4xbf16>, vector<4x4xbf16>, vector<160x4xf32> -> vector<160x4xf32>
    %46 = arith.addf %41, %45 : vector<160x4xf32>
    %c1_41 = arith.constant 1 : index
    %c2_42 = arith.constant 2 : index
    %c0_43 = arith.constant 0 : index
    %47 = vector.load %arg8[%c1_41, %c2_42, %c0_43] : memref<12x18x4xbf16, #tpu.memory_space<vmem>>, vector<10x16x4xbf16>
    %48 = vector.shape_cast %47 : vector<10x16x4xbf16> to vector<160x4xbf16>
    %c20 = arith.constant 20 : index
    %c0_44 = arith.constant 0 : index
    %49 = vector.load %arg3[%c20, %c0_44] : memref<36x4xbf16, #tpu.memory_space<vmem>>, vector<4x4xbf16>
    %cst_45 = arith.constant dense<0.000000e+00> : vector<160x4xf32>
    %50 = tpu.matmul %48, %49, %cst_45 {dimension_numbers = #tpu.dot_dimension_numbers<[1], [0], [0], [1], [0, 0, 1, 1], [], []>} : vector<160x4xbf16>, vector<4x4xbf16>, vector<160x4xf32> -> vector<160x4xf32>
    %51 = arith.addf %46, %50 : vector<160x4xf32>
    %c2_46 = arith.constant 2 : index
    %c0_47 = arith.constant 0 : index
    %c0_48 = arith.constant 0 : index
    %52 = vector.load %arg8[%c2_46, %c0_47, %c0_48] : memref<12x18x4xbf16, #tpu.memory_space<vmem>>, vector<10x16x4xbf16>
    %53 = vector.shape_cast %52 : vector<10x16x4xbf16> to vector<160x4xbf16>
    %c24 = arith.constant 24 : index
    %c0_49 = arith.constant 0 : index
    %54 = vector.load %arg3[%c24, %c0_49] : memref<36x4xbf16, #tpu.memory_space<vmem>>, vector<4x4xbf16>
    %cst_50 = arith.constant dense<0.000000e+00> : vector<160x4xf32>
    %55 = tpu.matmul %53, %54, %cst_50 {dimension_numbers = #tpu.dot_dimension_numbers<[1], [0], [0], [1], [0, 0, 1, 1], [], []>} : vector<160x4xbf16>, vector<4x4xbf16>, vector<160x4xf32> -> vector<160x4xf32>
    %56 = arith.addf %51, %55 : vector<160x4xf32>
    %c2_51 = arith.constant 2 : index
    %c1_52 = arith.constant 1 : index
    %c0_53 = arith.constant 0 : index
    %57 = vector.load %arg8[%c2_51, %c1_52, %c0_53] : memref<12x18x4xbf16, #tpu.memory_space<vmem>>, vector<10x16x4xbf16>
    %58 = vector.shape_cast %57 : vector<10x16x4xbf16> to vector<160x4xbf16>
    %c28 = arith.constant 28 : index
    %c0_54 = arith.constant 0 : index
    %59 = vector.load %arg3[%c28, %c0_54] : memref<36x4xbf16, #tpu.memory_space<vmem>>, vector<4x4xbf16>
    %cst_55 = arith.constant dense<0.000000e+00> : vector<160x4xf32>
    %60 = tpu.matmul %58, %59, %cst_55 {dimension_numbers = #tpu.dot_dimension_numbers<[1], [0], [0], [1], [0, 0, 1, 1], [], []>} : vector<160x4xbf16>, vector<4x4xbf16>, vector<160x4xf32> -> vector<160x4xf32>
    %61 = arith.addf %56, %60 : vector<160x4xf32>
    %c2_56 = arith.constant 2 : index
    %c2_57 = arith.constant 2 : index
    %c0_58 = arith.constant 0 : index
    %62 = vector.load %arg8[%c2_56, %c2_57, %c0_58] : memref<12x18x4xbf16, #tpu.memory_space<vmem>>, vector<10x16x4xbf16>
    %63 = vector.shape_cast %62 : vector<10x16x4xbf16> to vector<160x4xbf16>
    %c32 = arith.constant 32 : index
    %c0_59 = arith.constant 0 : index
    %64 = vector.load %arg3[%c32, %c0_59] : memref<36x4xbf16, #tpu.memory_space<vmem>>, vector<4x4xbf16>
    %cst_60 = arith.constant dense<0.000000e+00> : vector<160x4xf32>
    %65 = tpu.matmul %63, %64, %cst_60 {dimension_numbers = #tpu.dot_dimension_numbers<[1], [0], [0], [1], [0, 0, 1, 1], [], []>} : vector<160x4xbf16>, vector<4x4xbf16>, vector<160x4xf32> -> vector<160x4xf32>
    %66 = arith.addf %61, %65 : vector<160x4xf32>
    %c0_61 = arith.constant 0 : index
    %c0_62 = arith.constant 0 : index
    %67 = vector.load %arg4[%c0_61, %c0_62] : memref<1x4xf32, #tpu.memory_space<vmem>>, vector<1x4xf32>
    %68 = vector.broadcast %67 : vector<1x4xf32> to vector<160x4xf32>
    %69 = arith.addf %66, %68 : vector<160x4xf32>
    %cst_63 = arith.constant 0.000000e+00 : f32
    %70 = vector.broadcast %cst_63 : f32 to vector<160x4xf32>
    %71 = arith.maximumf %69, %70 : vector<160x4xf32>
    %cst_64 = arith.constant 0.000000e+00 : bf16
    %72 = vector.broadcast %cst_64 : bf16 to vector<10x1x4xbf16>
    %c0_65 = arith.constant 0 : index
    %c0_66 = arith.constant 0 : index
    %c0_67 = arith.constant 0 : index
    %73 = vector.load %arg9[%c0_65, %c0_66, %c0_67] : memref<10x18x4xbf16, #tpu.memory_space<vmem>>, vector<10x1x4xbf16>
    tpu.vector_store %arg9[%c0_65, %c0_66, %c0_67], %72 {strides = array<i32>} : memref<10x18x4xbf16, #tpu.memory_space<vmem>>, vector<10x1x4xbf16>,
    %c0_68 = arith.constant 0 : index
    %c17_69 = arith.constant 17 : index
    %c0_70 = arith.constant 0 : index
    %74 = vector.load %arg9[%c0_68, %c17_69, %c0_70] : memref<10x18x4xbf16, #tpu.memory_space<vmem>>, vector<10x1x4xbf16>
    tpu.vector_store %arg9[%c0_68, %c17_69, %c0_70], %72 {strides = array<i32>} : memref<10x18x4xbf16, #tpu.memory_space<vmem>>, vector<10x1x4xbf16>,
    %75 = vector.shape_cast %71 : vector<160x4xf32> to vector<10x16x4xf32>
    %76 = arith.truncf %75 : vector<10x16x4xf32> to vector<10x16x4xbf16>
    %c0_71 = arith.constant 0 : index
    %c1_72 = arith.constant 1 : index
    %c0_73 = arith.constant 0 : index
    %77 = vector.load %arg9[%c0_71, %c1_72, %c0_73] : memref<10x18x4xbf16, #tpu.memory_space<vmem>>, vector<10x16x4xbf16>
    tpu.vector_store %arg9[%c0_71, %c1_72, %c0_73], %76 {strides = array<i32>} : memref<10x18x4xbf16, #tpu.memory_space<vmem>>, vector<10x16x4xbf16>,
    %cst_74 = arith.constant 0.000000e+00 : bf16
    %78 = vector.broadcast %cst_74 : bf16 to vector<1x18x4xbf16>
    %c0_i32_75 = arith.constant 0 : i32
    %79 = arith.cmpi eq, %arg1, %c0_i32_75 : i32
    %80 = arith.extui %79 : i1 to i32
    %c0_i32_76 = arith.constant 0 : i32
    %81 = arith.cmpi ne, %80, %c0_i32_76 : i32
    scf.if %81 {
      %c0_140 = arith.constant 0 : index
      %c0_141 = arith.constant 0 : index
      %c0_142 = arith.constant 0 : index
      %140 = vector.load %arg9[%c0_140, %c0_141, %c0_142] : memref<10x18x4xbf16, #tpu.memory_space<vmem>>, vector<1x18x4xbf16>
      tpu.vector_store %arg9[%c0_140, %c0_141, %c0_142], %78 {strides = array<i32>} : memref<10x18x4xbf16, #tpu.memory_space<vmem>>, vector<1x18x4xbf16>,
    } else {
    }
    %c1_i32_77 = arith.constant 1 : i32
    %82 = arith.cmpi eq, %arg1, %c1_i32_77 : i32
    %83 = arith.extui %82 : i1 to i32
    %c0_i32_78 = arith.constant 0 : i32
    %84 = arith.cmpi ne, %83, %c0_i32_78 : i32
    scf.if %84 {
      %c9 = arith.constant 9 : index
      %c0_140 = arith.constant 0 : index
      %c0_141 = arith.constant 0 : index
      %140 = vector.load %arg9[%c9, %c0_140, %c0_141] : memref<10x18x4xbf16, #tpu.memory_space<vmem>>, vector<1x18x4xbf16>
      tpu.vector_store %arg9[%c9, %c0_140, %c0_141], %78 {strides = array<i32>} : memref<10x18x4xbf16, #tpu.memory_space<vmem>>, vector<1x18x4xbf16>,
    } else {
    }
    %c0_79 = arith.constant 0 : index
    %c0_80 = arith.constant 0 : index
    %c0_81 = arith.constant 0 : index
    %85 = vector.load %arg9[%c0_79, %c0_80, %c0_81] : memref<10x18x4xbf16, #tpu.memory_space<vmem>>, vector<8x16x4xbf16>
    %86 = vector.shape_cast %85 : vector<8x16x4xbf16> to vector<128x4xbf16>
    %c0_82 = arith.constant 0 : index
    %c0_83 = arith.constant 0 : index
    %87 = vector.load %arg5[%c0_82, %c0_83] : memref<36x4xbf16, #tpu.memory_space<vmem>>, vector<4x4xbf16>
    %cst_84 = arith.constant dense<0.000000e+00> : vector<128x4xf32>
    %88 = tpu.matmul %86, %87, %cst_84 {dimension_numbers = #tpu.dot_dimension_numbers<[1], [0], [0], [1], [0, 0, 1, 1], [], []>} : vector<128x4xbf16>, vector<4x4xbf16>, vector<128x4xf32> -> vector<128x4xf32>
    %c0_85 = arith.constant 0 : index
    %c1_86 = arith.constant 1 : index
    %c0_87 = arith.constant 0 : index
    %89 = vector.load %arg9[%c0_85, %c1_86, %c0_87] : memref<10x18x4xbf16, #tpu.memory_space<vmem>>, vector<8x16x4xbf16>
    %90 = vector.shape_cast %89 : vector<8x16x4xbf16> to vector<128x4xbf16>
    %c4_88 = arith.constant 4 : index
    %c0_89 = arith.constant 0 : index
    %91 = vector.load %arg5[%c4_88, %c0_89] : memref<36x4xbf16, #tpu.memory_space<vmem>>, vector<4x4xbf16>
    %cst_90 = arith.constant dense<0.000000e+00> : vector<128x4xf32>
    %92 = tpu.matmul %90, %91, %cst_90 {dimension_numbers = #tpu.dot_dimension_numbers<[1], [0], [0], [1], [0, 0, 1, 1], [], []>} : vector<128x4xbf16>, vector<4x4xbf16>, vector<128x4xf32> -> vector<128x4xf32>
    %93 = arith.addf %88, %92 : vector<128x4xf32>
    %c0_91 = arith.constant 0 : index
    %c2_92 = arith.constant 2 : index
    %c0_93 = arith.constant 0 : index
    %94 = vector.load %arg9[%c0_91, %c2_92, %c0_93] : memref<10x18x4xbf16, #tpu.memory_space<vmem>>, vector<8x16x4xbf16>
    %95 = vector.shape_cast %94 : vector<8x16x4xbf16> to vector<128x4xbf16>
    %c8_94 = arith.constant 8 : index
    %c0_95 = arith.constant 0 : index
    %96 = vector.load %arg5[%c8_94, %c0_95] : memref<36x4xbf16, #tpu.memory_space<vmem>>, vector<4x4xbf16>
    %cst_96 = arith.constant dense<0.000000e+00> : vector<128x4xf32>
    %97 = tpu.matmul %95, %96, %cst_96 {dimension_numbers = #tpu.dot_dimension_numbers<[1], [0], [0], [1], [0, 0, 1, 1], [], []>} : vector<128x4xbf16>, vector<4x4xbf16>, vector<128x4xf32> -> vector<128x4xf32>
    %98 = arith.addf %93, %97 : vector<128x4xf32>
    %c1_97 = arith.constant 1 : index
    %c0_98 = arith.constant 0 : index
    %c0_99 = arith.constant 0 : index
    %99 = vector.load %arg9[%c1_97, %c0_98, %c0_99] : memref<10x18x4xbf16, #tpu.memory_space<vmem>>, vector<8x16x4xbf16>
    %100 = vector.shape_cast %99 : vector<8x16x4xbf16> to vector<128x4xbf16>
    %c12_100 = arith.constant 12 : index
    %c0_101 = arith.constant 0 : index
    %101 = vector.load %arg5[%c12_100, %c0_101] : memref<36x4xbf16, #tpu.memory_space<vmem>>, vector<4x4xbf16>
    %cst_102 = arith.constant dense<0.000000e+00> : vector<128x4xf32>
    %102 = tpu.matmul %100, %101, %cst_102 {dimension_numbers = #tpu.dot_dimension_numbers<[1], [0], [0], [1], [0, 0, 1, 1], [], []>} : vector<128x4xbf16>, vector<4x4xbf16>, vector<128x4xf32> -> vector<128x4xf32>
    %103 = arith.addf %98, %102 : vector<128x4xf32>
    %c1_103 = arith.constant 1 : index
    %c1_104 = arith.constant 1 : index
    %c0_105 = arith.constant 0 : index
    %104 = vector.load %arg9[%c1_103, %c1_104, %c0_105] : memref<10x18x4xbf16, #tpu.memory_space<vmem>>, vector<8x16x4xbf16>
    %105 = vector.shape_cast %104 : vector<8x16x4xbf16> to vector<128x4xbf16>
    %c16_106 = arith.constant 16 : index
    %c0_107 = arith.constant 0 : index
    %106 = vector.load %arg5[%c16_106, %c0_107] : memref<36x4xbf16, #tpu.memory_space<vmem>>, vector<4x4xbf16>
    %cst_108 = arith.constant dense<0.000000e+00> : vector<128x4xf32>
    %107 = tpu.matmul %105, %106, %cst_108 {dimension_numbers = #tpu.dot_dimension_numbers<[1], [0], [0], [1], [0, 0, 1, 1], [], []>} : vector<128x4xbf16>, vector<4x4xbf16>, vector<128x4xf32> -> vector<128x4xf32>
    %108 = arith.addf %103, %107 : vector<128x4xf32>
    %c1_109 = arith.constant 1 : index
    %c2_110 = arith.constant 2 : index
    %c0_111 = arith.constant 0 : index
    %109 = vector.load %arg9[%c1_109, %c2_110, %c0_111] : memref<10x18x4xbf16, #tpu.memory_space<vmem>>, vector<8x16x4xbf16>
    %110 = vector.shape_cast %109 : vector<8x16x4xbf16> to vector<128x4xbf16>
    %c20_112 = arith.constant 20 : index
    %c0_113 = arith.constant 0 : index
    %111 = vector.load %arg5[%c20_112, %c0_113] : memref<36x4xbf16, #tpu.memory_space<vmem>>, vector<4x4xbf16>
    %cst_114 = arith.constant dense<0.000000e+00> : vector<128x4xf32>
    %112 = tpu.matmul %110, %111, %cst_114 {dimension_numbers = #tpu.dot_dimension_numbers<[1], [0], [0], [1], [0, 0, 1, 1], [], []>} : vector<128x4xbf16>, vector<4x4xbf16>, vector<128x4xf32> -> vector<128x4xf32>
    %113 = arith.addf %108, %112 : vector<128x4xf32>
    %c2_115 = arith.constant 2 : index
    %c0_116 = arith.constant 0 : index
    %c0_117 = arith.constant 0 : index
    %114 = vector.load %arg9[%c2_115, %c0_116, %c0_117] : memref<10x18x4xbf16, #tpu.memory_space<vmem>>, vector<8x16x4xbf16>
    %115 = vector.shape_cast %114 : vector<8x16x4xbf16> to vector<128x4xbf16>
    %c24_118 = arith.constant 24 : index
    %c0_119 = arith.constant 0 : index
    %116 = vector.load %arg5[%c24_118, %c0_119] : memref<36x4xbf16, #tpu.memory_space<vmem>>, vector<4x4xbf16>
    %cst_120 = arith.constant dense<0.000000e+00> : vector<128x4xf32>
    %117 = tpu.matmul %115, %116, %cst_120 {dimension_numbers = #tpu.dot_dimension_numbers<[1], [0], [0], [1], [0, 0, 1, 1], [], []>} : vector<128x4xbf16>, vector<4x4xbf16>, vector<128x4xf32> -> vector<128x4xf32>
    %118 = arith.addf %113, %117 : vector<128x4xf32>
    %c2_121 = arith.constant 2 : index
    %c1_122 = arith.constant 1 : index
    %c0_123 = arith.constant 0 : index
    %119 = vector.load %arg9[%c2_121, %c1_122, %c0_123] : memref<10x18x4xbf16, #tpu.memory_space<vmem>>, vector<8x16x4xbf16>
    %120 = vector.shape_cast %119 : vector<8x16x4xbf16> to vector<128x4xbf16>
    %c28_124 = arith.constant 28 : index
    %c0_125 = arith.constant 0 : index
    %121 = vector.load %arg5[%c28_124, %c0_125] : memref<36x4xbf16, #tpu.memory_space<vmem>>, vector<4x4xbf16>
    %cst_126 = arith.constant dense<0.000000e+00> : vector<128x4xf32>
    %122 = tpu.matmul %120, %121, %cst_126 {dimension_numbers = #tpu.dot_dimension_numbers<[1], [0], [0], [1], [0, 0, 1, 1], [], []>} : vector<128x4xbf16>, vector<4x4xbf16>, vector<128x4xf32> -> vector<128x4xf32>
    %123 = arith.addf %118, %122 : vector<128x4xf32>
    %c2_127 = arith.constant 2 : index
    %c2_128 = arith.constant 2 : index
    %c0_129 = arith.constant 0 : index
    %124 = vector.load %arg9[%c2_127, %c2_128, %c0_129] : memref<10x18x4xbf16, #tpu.memory_space<vmem>>, vector<8x16x4xbf16>
    %125 = vector.shape_cast %124 : vector<8x16x4xbf16> to vector<128x4xbf16>
    %c32_130 = arith.constant 32 : index
    %c0_131 = arith.constant 0 : index
    %126 = vector.load %arg5[%c32_130, %c0_131] : memref<36x4xbf16, #tpu.memory_space<vmem>>, vector<4x4xbf16>
    %cst_132 = arith.constant dense<0.000000e+00> : vector<128x4xf32>
    %127 = tpu.matmul %125, %126, %cst_132 {dimension_numbers = #tpu.dot_dimension_numbers<[1], [0], [0], [1], [0, 0, 1, 1], [], []>} : vector<128x4xbf16>, vector<4x4xbf16>, vector<128x4xf32> -> vector<128x4xf32>
    %128 = arith.addf %123, %127 : vector<128x4xf32>
    %c0_133 = arith.constant 0 : index
    %c0_134 = arith.constant 0 : index
    %129 = vector.load %arg6[%c0_133, %c0_134] : memref<1x4xf32, #tpu.memory_space<vmem>>, vector<1x4xf32>
    %130 = vector.broadcast %129 : vector<1x4xf32> to vector<128x4xf32>
    %131 = arith.addf %128, %130 : vector<128x4xf32>
    %132 = vector.shape_cast %7 : vector<8x16x4xf32> to vector<128x4xf32>
    %133 = arith.addf %131, %132 : vector<128x4xf32>
    %cst_135 = arith.constant 0.000000e+00 : f32
    %134 = vector.broadcast %cst_135 : f32 to vector<128x4xf32>
    %135 = arith.maximumf %133, %134 : vector<128x4xf32>
    %136 = vector.shape_cast %135 : vector<128x4xf32> to vector<8x16x4xf32>
    %c0_136 = arith.constant 0 : index
    %c0_137 = arith.constant 0 : index
    %c0_138 = arith.constant 0 : index
    %c0_139 = arith.constant 0 : index
    %137 = vector.load %arg7[%c0_136, %c0_137, %c0_138, %c0_139] : memref<1x8x16x4xf32, #tpu.memory_space<vmem>>, vector<1x8x16x4xf32>
    %138 = vector.shape_cast %137 : vector<1x8x16x4xf32> to vector<8x16x4xf32>
    %139 = vector.shape_cast %136 : vector<8x16x4xf32> to vector<1x8x16x4xf32>
    tpu.vector_store %arg7[%c0_136, %c0_137, %c0_138, %c0_139], %139 {strides = array<i32>} : memref<1x8x16x4xf32, #tpu.memory_space<vmem>>, vector<1x8x16x4xf32>,
    return
  }
  func.func @transform_0(%arg0: i32, %arg1: i32) -> (i32, i32, i32, i32) {
    %c0_i32 = arith.constant 0 : i32
    %c0_i32_0 = arith.constant 0 : i32
    %c0_i32_1 = arith.constant 0 : i32
    %c0_i32_2 = arith.constant 0 : i32
    return %arg0, %c0_i32, %c0_i32_0, %c0_i32_1 : i32, i32, i32, i32
  }
  func.func @transform_1(%arg0: i32, %arg1: i32) -> (i32, i32) {
    %c0_i32 = arith.constant 0 : i32
    %c0_i32_0 = arith.constant 0 : i32
    %c0_i32_1 = arith.constant 0 : i32
    return %c0_i32, %c0_i32_0 : i32, i32
  }
  func.func @transform_2(%arg0: i32, %arg1: i32) -> (i32, i32) {
    %c0_i32 = arith.constant 0 : i32
    %c0_i32_0 = arith.constant 0 : i32
    %c0_i32_1 = arith.constant 0 : i32
    return %c0_i32, %c0_i32_0 : i32, i32
  }
  func.func @transform_3(%arg0: i32, %arg1: i32) -> (i32, i32) {
    %c0_i32 = arith.constant 0 : i32
    %c0_i32_0 = arith.constant 0 : i32
    %c0_i32_1 = arith.constant 0 : i32
    return %c0_i32, %c0_i32_0 : i32, i32
  }
  func.func @transform_4(%arg0: i32, %arg1: i32) -> (i32, i32) {
    %c0_i32 = arith.constant 0 : i32
    %c0_i32_0 = arith.constant 0 : i32
    %c0_i32_1 = arith.constant 0 : i32
    return %c0_i32, %c0_i32_0 : i32, i32
  }
  func.func @transform_5(%arg0: i32, %arg1: i32) -> (i32, i32, i32, i32) {
    %c0_i32 = arith.constant 0 : i32
    %c0_i32_0 = arith.constant 0 : i32
    %c0_i32_1 = arith.constant 0 : i32
    return %arg0, %arg1, %c0_i32, %c0_i32_0 : i32, i32, i32, i32
  }
}

</mosaic_0001>

<llo_original>
// kernel: tpu_custom_call.1
$region0: #{tpu_custom_call.1}
  #allocation0 [shape = 'u32[]', space=smem, size = 0x4, offset = 0x4, fixed_abs, tag = 'smem constant byte address 0x4 - core index']
  #allocation1 [shape = 'u32[144,128]{1,0:T(1,128)}', space=vmem, size = 0x12000, scoped, tag = 'internal scratch']
  #allocation2 [shape = 'bf16[12,18,4]{2,1,0:T(8,128)(2,1)}', space=vmem, size = 0x12000, scoped, tag = 'scratch operand']
  #allocation3 [shape = 'bf16[10,18,4]{2,1,0:T(8,128)(2,1)}', space=vmem, size = 0xf000, scoped, tag = 'scratch operand']
  %s0 = inlined_call_operand.vmem [shape: f32[2,16,16,4], index: 0, kind: input, shape index: {}]
  %s1 = inlined_call_operand.vmem [shape: bf16[36,4], index: 1, kind: input, shape index: {}]
  %s2 = inlined_call_operand.vmem [shape: f32[1,4], index: 2, kind: input, shape index: {}]
  %s3 = inlined_call_operand.vmem [shape: bf16[36,4], index: 3, kind: input, shape index: {}]
  %s4 = inlined_call_operand.vmem [shape: f32[1,4], index: 4, kind: input, shape index: {}]
  %s5 = inlined_call_operand.vmem [shape: f32[2,16,16,4], index: 5, kind: output, shape index: {}]
  %s6 = sld [smem:[#allocation0]]
  $region77: #{tpu_custom_call.1} parent=0
    _
  %s8 = ssub.s32 1, %s6
  %s9 = scalar_select 0, %s8, %s6
  loop: start=0, step=1, limit=6
  $region2: #{tpu_custom_call.1} parent=0 // loop_pre_header
    _
  $region3: #{tpu_custom_call.1} parent=0 // loop_header
    %s11 = sphi 0, %s15
    %p12 = scmp.ge.s32.totalorder %s11, 6
    %s18 = sphi 0, %s30
    %s19 = sphi 0, %s26
    %s20 = sphi 0, %s18
    %s21 = sphi 0, %s19
    %s22 = sphi 0, %s20
    %s23 = sphi 0, %s21
    %s33 = sphi 0, %s35
    %s36 = sphi 0, %s33
    %s37 = sphi 0, %s36
    %s53 = sphi 0, %s37
    %s57 = sphi 0, %s57
    %s59 = sphi 0, %s57
    %s60 = sphi 0, %s59
    %s74 = sphi 0, %s60
    %s78 = sphi 0, %s78
    %s80 = sphi 0, %s78
    %s81 = sphi 0, %s80
    %s95 = sphi 0, %s81
    %s99 = sphi 0, %s99
    %s101 = sphi 0, %s99
    %s102 = sphi 0, %s101
    %s116 = sphi 0, %s102
    %s120 = sphi 0, %s120
    %s122 = sphi 0, %s120
    %s123 = sphi 0, %s122
    %s137 = sphi 0, %s123
    %s145 = sphi 0, %s147
    %s148 = sphi 0, %s145
    %s149 = sphi 0, %s148
    %s165 = sphi 0, %s149
  $region4: #{tpu_custom_call.1} parent=0 // loop_header_branch
    %14 = sbr.rel (%p12) target = $region8
  $region5: #{tpu_custom_call.1} parent=0 // loop_body
    %s16 = ssub.s32 %s11, 1
    %s17 = ssub.s32 %s11, 2
    %s24 = sadd.s32 1, %s19
    %p25 = scmp.ge.s32.totalorder %s24, 2
    %s26 = scalar_select %p25, 0, %s24
    %s27 = sadd.s32 1, %s18
    %s28 = scalar_select %p25, %s27, %s18
    %p29 = scmp.ge.s32.totalorder %s28, 2
    %s30 = scalar_select %p29, 0, %s28
    %s31 = ssub.s32 %s18, %s30
    %p32 = scmp.eq.s32.totalorder %s31, 0
    %s34 = sadd.s32 %s33, 1
    %s35 = scalar_select %p32, %s33, %s34
    %p38 = pneg %p32
    %p39 = scmp.eq.s32.totalorder %s11, 3
    %p40 = por %p38, %p39
    %p41 = scmp.ne.s32.totalorder %s33, %s36
    %p42 = scmp.eq.s32.totalorder %s11, 0
    %p43 = por %p41, %p42
    %p44 = scmp.ne.s32.totalorder %s33, %s36
    %p45 = scmp.eq.s32.totalorder %s16, 3
    %p46 = por %p44, %p45
    %p47 = scmp.ne.s32.totalorder %s36, %s37
    %p48 = scmp.eq.s32.totalorder %s16, 0
    %p49 = por %p47, %p48
    %p50 = scmp.ne.s32.totalorder %s36, %s37
    %p51 = scmp.eq.s32.totalorder %s17, 3
    %p52 = por %p50, %p51
    %p54 = scmp.ne.s32.totalorder %s37, %s53
    %p55 = scmp.eq.s32.totalorder %s17, 0
    %p56 = por %p54, %p55
    %s58 = sadd.s32 %s57, 1
    %p61 = scmp.eq.s32.totalorder %s11, 3
    %p62 = scmp.ne.s32.totalorder %s57, %s59
    %p63 = scmp.eq.s32.totalorder %s11, 0
    %p64 = por %p62, %p63
    %p65 = scmp.ne.s32.totalorder %s57, %s59
    %p66 = scmp.eq.s32.totalorder %s16, 3
    %p67 = por %p65, %p66
    %p68 = scmp.ne.s32.totalorder %s59, %s60
    %p69 = scmp.eq.s32.totalorder %s16, 0
    %p70 = por %p68, %p69
    %p71 = scmp.ne.s32.totalorder %s59, %s60
    %p72 = scmp.eq.s32.totalorder %s17, 3
    %p73 = por %p71, %p72
    %p75 = scmp.ne.s32.totalorder %s60, %s74
    %p76 = scmp.eq.s32.totalorder %s17, 0
    %p77 = por %p75, %p76
    %s79 = sadd.s32 %s78, 1
    %p82 = scmp.eq.s32.totalorder %s11, 3
    %p83 = scmp.ne.s32.totalorder %s78, %s80
    %p84 = scmp.eq.s32.totalorder %s11, 0
    %p85 = por %p83, %p84
    %p86 = scmp.ne.s32.totalorder %s78, %s80
    %p87 = scmp.eq.s32.totalorder %s16, 3
    %p88 = por %p86, %p87
    %p89 = scmp.ne.s32.totalorder %s80, %s81
    %p90 = scmp.eq.s32.totalorder %s16, 0
    %p91 = por %p89, %p90
    %p92 = scmp.ne.s32.totalorder %s80, %s81
    %p93 = scmp.eq.s32.totalorder %s17, 3
    %p94 = por %p92, %p93
    %p96 = scmp.ne.s32.totalorder %s81, %s95
    %p97 = scmp.eq.s32.totalorder %s17, 0
    %p98 = por %p96, %p97
    %s100 = sadd.s32 %s99, 1
    %p103 = scmp.eq.s32.totalorder %s11, 3
    %p104 = scmp.ne.s32.totalorder %s99, %s101
    %p105 = scmp.eq.s32.totalorder %s11, 0
    %p106 = por %p104, %p105
    %p107 = scmp.ne.s32.totalorder %s99, %s101
    %p108 = scmp.eq.s32.totalorder %s16, 3
    %p109 = por %p107, %p108
    %p110 = scmp.ne.s32.totalorder %s101, %s102
    %p111 = scmp.eq.s32.totalorder %s16, 0
    %p112 = por %p110, %p111
    %p113 = scmp.ne.s32.totalorder %s101, %s102
    %p114 = scmp.eq.s32.totalorder %s17, 3
    %p115 = por %p113, %p114
    %p117 = scmp.ne.s32.totalorder %s102, %s116
    %p118 = scmp.eq.s32.totalorder %s17, 0
    %p119 = por %p117, %p118
    %s121 = sadd.s32 %s120, 1
    %p124 = scmp.eq.s32.totalorder %s11, 3
    %p125 = scmp.ne.s32.totalorder %s120, %s122
    %p126 = scmp.eq.s32.totalorder %s11, 0
    %p127 = por %p125, %p126
    %p128 = scmp.ne.s32.totalorder %s120, %s122
    %p129 = scmp.eq.s32.totalorder %s16, 3
    %p130 = por %p128, %p129
    %p131 = scmp.ne.s32.totalorder %s122, %s123
    %p132 = scmp.eq.s32.totalorder %s16, 0
    %p133 = por %p131, %p132
    %p134 = scmp.ne.s32.totalorder %s122, %s123
    %p135 = scmp.eq.s32.totalorder %s17, 3
    %p136 = por %p134, %p135
    %p138 = scmp.ne.s32.totalorder %s123, %s137
    %p139 = scmp.eq.s32.totalorder %s17, 0
    %p140 = por %p138, %p139
    %s141 = ssub.s32 %s18, %s30
    %s142 = ssub.s32 %s19, %s26
    %s143 = sor.u32 %s141, %s142
    %p144 = scmp.eq.s32.totalorder %s143, 0
    %s146 = sadd.s32 %s145, 1
    %s147 = scalar_select %p144, %s145, %s146
    %p150 = pneg %p144
    %p151 = scmp.eq.s32.totalorder %s11, 3
    %p152 = por %p150, %p151
    %p153 = scmp.ne.s32.totalorder %s145, %s148
    %p154 = scmp.eq.s32.totalorder %s11, 0
    %p155 = por %p153, %p154
    %p156 = scmp.ne.s32.totalorder %s145, %s148
    %p157 = scmp.eq.s32.totalorder %s16, 3
    %p158 = por %p156, %p157
    %p159 = scmp.ne.s32.totalorder %s148, %s149
    %p160 = scmp.eq.s32.totalorder %s16, 0
    %p161 = por %p159, %p160
    %p162 = scmp.ne.s32.totalorder %s148, %s149
    %p163 = scmp.eq.s32.totalorder %s17, 3
    %p164 = por %p162, %p163
    %p166 = scmp.ne.s32.totalorder %s149, %s165
    %p167 = scmp.eq.s32.totalorder %s17, 0
    %p168 = por %p166, %p167
    %p169 = scmp.le.s32.totalorder 1, %s11
    %p170 = scmp.lt.s32.totalorder %s11, 5
    %p171 = pnand %p169, %p170
    %p172 = pneg %p171
    // Predicated region
    $region9: #{tpu_custom_call.1} parent=5 // pred_check
      _
    $region10: #{tpu_custom_call.1} parent=5 // pred_check_branch
      %174 = sbr.rel (%p171) target = $region12
    $region11: #{tpu_custom_call.1} parent=5 // pred_region
      %s175 = ssub.s32 %s11, 1
      // Predicated region
      $region13: #{tpu_custom_call.1} parent=11 // pred_check
        %p176 = pneg %p70
      $region14: #{tpu_custom_call.1} parent=11 // pred_check_branch
        %178 = sbr.rel (%p176) target = $region16
      $region15: #{tpu_custom_call.1} parent=11 // pred_region
        _
      $region16: #{tpu_custom_call.1} parent=11 // pred_fallthru
        _
      // Predicated region
      $region17: #{tpu_custom_call.1} parent=11 // pred_check
        %p179 = pneg %p91
      $region18: #{tpu_custom_call.1} parent=11 // pred_check_branch
        %181 = sbr.rel (%p179) target = $region20
      $region19: #{tpu_custom_call.1} parent=11 // pred_region
        _
      $region20: #{tpu_custom_call.1} parent=11 // pred_fallthru
        _
      // Predicated region
      $region21: #{tpu_custom_call.1} parent=11 // pred_check
        %p182 = pneg %p112
      $region22: #{tpu_custom_call.1} parent=11 // pred_check_branch
        %184 = sbr.rel (%p182) target = $region24
      $region23: #{tpu_custom_call.1} parent=11 // pred_region
        _
      $region24: #{tpu_custom_call.1} parent=11 // pred_fallthru
        _
      // Predicated region
      $region25: #{tpu_custom_call.1} parent=11 // pred_check
        %p185 = pneg %p133
      $region26: #{tpu_custom_call.1} parent=11 // pred_check_branch
        %187 = sbr.rel (%p185) target = $region28
      $region27: #{tpu_custom_call.1} parent=11 // pred_region
        _
      $region28: #{tpu_custom_call.1} parent=11 // pred_fallthru
        _
    $region12: #{tpu_custom_call.1} parent=5 // pred_fallthru
      _
    %p188 = scmp.lt.s32.totalorder %s11, 4
    // Predicated region
    $region29: #{tpu_custom_call.1} parent=5 // pred_check
      %p189 = pneg %p188
    $region30: #{tpu_custom_call.1} parent=5 // pred_check_branch
      %191 = sbr.rel (%p189) target = $region32
    $region31: #{tpu_custom_call.1} parent=5 // pred_region
      // Predicated region
      $region33: #{tpu_custom_call.1} parent=31 // pred_check
        %p192 = pneg %p43
      $region34: #{tpu_custom_call.1} parent=31 // pred_check_branch
        %194 = sbr.rel (%p192) target = $region36
      $region35: #{tpu_custom_call.1} parent=31 // pred_region
        %p195 = scmp.lt.s32.totalorder %s18, 1
        %s196 = scalar_select %p195, %s18, 1
        %s197 = smul.addr %s196, 32
        %s198 = smul.addr %s197, 8
        %s199 = scalar_lea.vmem %s0, %s198
      $region36: #{tpu_custom_call.1} parent=31 // pred_fallthru
        _
    $region32: #{tpu_custom_call.1} parent=5 // pred_fallthru
      _
    %p200 = scmp.le.s32.totalorder 1, %s11
    %p201 = scmp.lt.s32.totalorder %s11, 5
    %p202 = pnand %p200, %p201
    %p203 = pneg %p202
    // Predicated region
    $region37: #{tpu_custom_call.1} parent=5 // pred_check
      _
    $region38: #{tpu_custom_call.1} parent=5 // pred_check_branch
      %205 = sbr.rel (%p202) target = $region40
    $region39: #{tpu_custom_call.1} parent=5 // pred_region
      %s206 = ssub.s32 %s11, 1
      %p207 = scmp.lt.s32.totalorder %s20, 1
      %s208 = scalar_select %p207, %s20, 1
      %s209 = smul.addr %s208, 32
      %s210 = smul.addr %s209, 8
      %s211 = scalar_lea.vmem %s0, %s210
      %p212 = pneg %p49
      %p213 = pneg %p46
      %p214 = pneg %p70
      %p215 = pneg %p67
      %p216 = pneg %p91
      %p217 = pneg %p88
      %p218 = pneg %p112
      %p219 = pneg %p109
      %p220 = pneg %p133
      %p221 = pneg %p130
      %p222 = pneg %p161
      %p223 = pneg %p158
      %s224 = smul.u32 8, %s21
      %p225 = scmp.lt.s32.totalorder %s20, 1
      %s226 = scalar_select %p225, %s20, 1
      %p227 = scmp.lt.s32.totalorder %s224, 15
      %s228 = scalar_select %p227, %s224, 15
      %s229 = smul.addr %s228, 2
      %s230 = smul.addr %s226, 32
      %s231 = sadd.s32 %s229, %s230
      %s232 = smul.addr %s231, 8
      %s233 = scalar_lea.vmem %s5, %s232
      %p234 = scmp.lt.s32.totalorder %s20, 1
      %s235 = scalar_select %p234, %s20, 1
      %s236 = smul.addr %s235, 32
      %s237 = smul.addr %s236, 8
      %s238 = scalar_lea.vmem %s0, %s237
      %s239 = smul.u32 8, %s21
      %p240 = scmp.lt.s32.totalorder %s20, 1
      %s241 = scalar_select %p240, %s20, 1
      %p242 = scmp.lt.s32.totalorder %s239, 15
      %s243 = scalar_select %p242, %s239, 15
      %s244 = smul.addr %s243, 2
      %s245 = smul.addr %s241, 32
      %s246 = sadd.s32 %s244, %s245
      %s247 = smul.addr %s246, 8
      %s248 = scalar_lea.vmem %s5, %s247
      %s249 = smul.u32 8, %s21
      %s251 = smul.u32 %s21, 8
      %vm252 = vcmask 24576
      %vm253 = vsmask.f32 256
      %vm254 = vmand %vm252, %vm253
      %v255 = vld [vmem:[#allocation2] sm:$0x1]
      %v256 = vsel %vm254, 0, %v255
      %257 = vst [vmem:[#allocation2] sm:$0x1] %v256
      %v258 = vld [vmem:[#allocation2 + $0xc] sm:$0x1]
      %v259 = vsel %vm254, 0, %v258
      %260 = vst [vmem:[#allocation2 + $0xc] sm:$0x1] %v259
      %v261 = vld [vmem:[#allocation2 + $0x18] sm:$0x1]
      %v262 = vsel %vm254, 0, %v261
      %263 = vst [vmem:[#allocation2 + $0x18] sm:$0x1] %v262
      %v264 = vld [vmem:[#allocation2 + $0x24] sm:$0x1]
      %v265 = vsel %vm254, 0, %v264
      %266 = vst [vmem:[#allocation2 + $0x24] sm:$0x1] %v265
      %v267 = vld [vmem:[#allocation2 + $0x30] sm:$0x1]
      %v268 = vsel %vm254, 0, %v267
      %269 = vst [vmem:[#allocation2 + $0x30] sm:$0x1] %v268
      %v270 = vld [vmem:[#allocation2 + $0x3c] sm:$0x1]
      %v271 = vsel %vm254, 0, %v270
      %272 = vst [vmem:[#allocation2 + $0x3c] sm:$0x1] %v271
      %v273 = vld [vmem:[#allocation2 + $0x48] sm:$0x1]
      %v274 = vsel %vm254, 0, %v273
      %275 = vst [vmem:[#allocation2 + $0x48] sm:$0x1] %v274
      %v276 = vld [vmem:[#allocation2 + $0x54] sm:$0x1]
      %v277 = vsel %vm254, 0, %v276
      %278 = vst [vmem:[#allocation2 + $0x54] sm:$0x1] %v277
      %v279 = vld [vmem:[#allocation2 + $0x60] sm:$0x1]
      %v280 = vsel %vm254, 0, %v279
      %281 = vst [vmem:[#allocation2 + $0x60] sm:$0x1] %v280
      %v282 = vld [vmem:[#allocation2 + $0x6c] sm:$0x1]
      %v283 = vsel %vm254, 0, %v282
      %284 = vst [vmem:[#allocation2 + $0x6c] sm:$0x1] %v283
      %v285 = vld [vmem:[#allocation2 + $0x78] sm:$0x1]
      %v286 = vsel %vm254, 0, %v285
      %287 = vst [vmem:[#allocation2 + $0x78] sm:$0x1] %v286
      %v288 = vld [vmem:[#allocation2 + $0x84] sm:$0x1]
      %v289 = vsel %vm254, 0, %v288
      %290 = vst [vmem:[#allocation2 + $0x84] sm:$0x1] %v289
      %vm291 = vsmask.f32 7938
      %vm292 = vmand %vm252, %vm291
      %v293 = vld [vmem:[#allocation2 + $0x8] sm:$0x1]
      %v294 = vsel %vm292, 0, %v293
      %295 = vst [vmem:[#allocation2 + $0x8] sm:$0x1] %v294
      %v296 = vld [vmem:[#allocation2 + $0x14] sm:$0x1]
      %v297 = vsel %vm292, 0, %v296
      %298 = vst [vmem:[#allocation2 + $0x14] sm:$0x1] %v297
      %v299 = vld [vmem:[#allocation2 + $0x20] sm:$0x1]
      %v300 = vsel %vm292, 0, %v299
      %301 = vst [vmem:[#allocation2 + $0x20] sm:$0x1] %v300
      %v302 = vld [vmem:[#allocation2 + $0x2c] sm:$0x1]
      %v303 = vsel %vm292, 0, %v302
      %304 = vst [vmem:[#allocation2 + $0x2c] sm:$0x1] %v303
      %v305 = vld [vmem:[#allocation2 + $0x38] sm:$0x1]
      %v306 = vsel %vm292, 0, %v305
      %307 = vst [vmem:[#allocation2 + $0x38] sm:$0x1] %v306
      %v308 = vld [vmem:[#allocation2 + $0x44] sm:$0x1]
      %v309 = vsel %vm292, 0, %v308
      %310 = vst [vmem:[#allocation2 + $0x44] sm:$0x1] %v309
      %v311 = vld [vmem:[#allocation2 + $0x50] sm:$0x1]
      %v312 = vsel %vm292, 0, %v311
      %313 = vst [vmem:[#allocation2 + $0x50] sm:$0x1] %v312
      %v314 = vld [vmem:[#allocation2 + $0x5c] sm:$0x1]
      %v315 = vsel %vm292, 0, %v314
      %316 = vst [vmem:[#allocation2 + $0x5c] sm:$0x1] %v315
      %v317 = vld [vmem:[#allocation2 + $0x68] sm:$0x1]
      %v318 = vsel %vm292, 0, %v317
      %319 = vst [vmem:[#allocation2 + $0x68] sm:$0x1] %v318
      %v320 = vld [vmem:[#allocation2 + $0x74] sm:$0x1]
      %v321 = vsel %vm292, 0, %v320
      %322 = vst [vmem:[#allocation2 + $0x74] sm:$0x1] %v321
      %v323 = vld [vmem:[#allocation2 + $0x80] sm:$0x1]
      %v324 = vsel %vm292, 0, %v323
      %325 = vst [vmem:[#allocation2 + $0x80] sm:$0x1] %v324
      %v326 = vld [vmem:[#allocation2 + $0x8c] sm:$0x1]
      %v327 = vsel %vm292, 0, %v326
      %328 = vst [vmem:[#allocation2 + $0x8c] sm:$0x1] %v327
      %s329 = smul.u32 %s251, 16
      %s330 = scalar_lea.vmem %s238, %s329
      %v331 = vld [vmem:[%s330] sm:$0xff]
      %v332 = vld [vmem:[%s330 + $0x8] sm:$0xff]
      %v333 = vld [vmem:[%s330 + $0x10] sm:$0xff]
      %v334 = vld [vmem:[%s330 + $0x18] sm:$0xff]
      %v335 = vld [vmem:[%s330 + $0x20] sm:$0xff]
      %v336 = vld [vmem:[%s330 + $0x28] sm:$0xff]
      %v337 = vld [vmem:[%s330 + $0x30] sm:$0xff]
      %v338 = vld [vmem:[%s330 + $0x38] sm:$0xff]
      %v339 = vld [vmem:[%s330 + $0x40] sm:$0xff]
      %v340 = vld [vmem:[%s330 + $0x48] sm:$0xff]
      %v341 = vld [vmem:[%s330 + $0x50] sm:$0xff]
      %v342 = vld [vmem:[%s330 + $0x58] sm:$0xff]
      %v343 = vld [vmem:[%s330 + $0x60] sm:$0xff]
      %v344 = vld [vmem:[%s330 + $0x68] sm:$0xff]
      %v345 = vld [vmem:[%s330 + $0x70] sm:$0xff]
      %v346 = vld [vmem:[%s330 + $0x78] sm:$0xff]
      %v347 = vpack.c.bf16 %v332, %v331
      %v348 = vpack.c.bf16 %v334, %v333
      %v349 = vpack.c.bf16 %v336, %v335
      %v350 = vpack.c.bf16 %v338, %v337
      %v351 = vpack.c.bf16 %v340, %v339
      %v352 = vpack.c.bf16 %v342, %v341
      %v353 = vpack.c.bf16 %v344, %v343
      %v354 = vpack.c.bf16 %v346, %v345
      %v363 = vunpack.c.l.b16 %v347
      %v364 = vunpack.c.h.b16 %v347
      %v365 = vunpack.c.l.b16 %v348
      %v366 = vunpack.c.h.b16 %v348
      %v367 = vunpack.c.l.b16 %v349
      %v368 = vunpack.c.h.b16 %v349
      %v369 = vunpack.c.l.b16 %v350
      %v370 = vunpack.c.h.b16 %v350
      %v371 = vunpack.c.l.b16 %v351
      %v372 = vunpack.c.h.b16 %v351
      %v373 = vunpack.c.l.b16 %v352
      %v374 = vunpack.c.h.b16 %v352
      %v375 = vunpack.c.l.b16 %v353
      %v376 = vunpack.c.h.b16 %v353
      %v377 = vunpack.c.l.b16 %v354
      %v378 = vunpack.c.h.b16 %v354
      %v379 = vpack.c.b16 %v363, %v363
      %v380 = vpack.c.b16 %v364, %v364
      %v381 = vpack.c.b16 %v365, %v365
      %v382 = vpack.c.b16 %v366, %v366
      %v383 = vpack.c.b16 %v367, %v367
      %v384 = vpack.c.b16 %v368, %v368
      %v385 = vpack.c.b16 %v369, %v369
      %v386 = vpack.c.b16 %v370, %v370
      %v387 = vpack.c.b16 %v371, %v371
      %v388 = vpack.c.b16 %v372, %v372
      %v389 = vpack.c.b16 %v373, %v373
      %v390 = vpack.c.b16 %v374, %v374
      %v391 = vpack.c.b16 %v375, %v375
      %v392 = vpack.c.b16 %v376, %v376
      %v393 = vpack.c.b16 %v377, %v377
      %v394 = vpack.c.b16 %v378, %v378
      %vm395 = vsmask.f32 4368
      %vm396 = vmor %vm253, %vm395
      %v398 = vshrl.u32 %v379, 16
      %v400 = vrot.slane %v398, 7
      %v401 = vshll.u32 %v379, 16
      %v403 = vor.u32 %v400, %v401
      %v404 = vrot.slane %v400, 4
      %v406 = vshrl.u32 %v380, 16
      %v408 = vrot.slane %v406, 7
      %v409 = vshll.u32 %v380, 16
      %v411 = vor.u32 %v408, %v409
      %v412 = vsel %vm396, %v404, %v411
      %v413 = vrot.slane %v408, 4
      %v415 = vshrl.u32 %v381, 16
      %v417 = vrot.slane %v415, 7
      %v418 = vshll.u32 %v381, 16
      %v420 = vor.u32 %v417, %v418
      %v421 = vrot.slane %v417, 4
      %v423 = vshrl.u32 %v382, 16
      %v425 = vrot.slane %v423, 7
      %v426 = vshll.u32 %v382, 16
      %v428 = vor.u32 %v425, %v426
      %v429 = vsel %vm396, %v421, %v428
      %v430 = vrot.slane %v425, 4
      %v432 = vshrl.u32 %v383, 16
      %v434 = vrot.slane %v432, 7
      %v435 = vshll.u32 %v383, 16
      %v437 = vor.u32 %v434, %v435
      %v438 = vrot.slane %v434, 4
      %v440 = vshrl.u32 %v384, 16
      %v442 = vrot.slane %v440, 7
      %v443 = vshll.u32 %v384, 16
      %v445 = vor.u32 %v442, %v443
      %v446 = vsel %vm396, %v438, %v445
      %v447 = vrot.slane %v442, 4
      %v449 = vshrl.u32 %v385, 16
      %v451 = vrot.slane %v449, 7
      %v452 = vshll.u32 %v385, 16
      %v454 = vor.u32 %v451, %v452
      %v455 = vrot.slane %v451, 4
      %v457 = vshrl.u32 %v386, 16
      %v459 = vrot.slane %v457, 7
      %v460 = vshll.u32 %v386, 16
      %v462 = vor.u32 %v459, %v460
      %v463 = vsel %vm396, %v455, %v462
      %v464 = vrot.slane %v459, 4
      %v466 = vshrl.u32 %v387, 16
      %v468 = vrot.slane %v466, 7
      %v469 = vshll.u32 %v387, 16
      %v471 = vor.u32 %v468, %v469
      %v472 = vrot.slane %v468, 4
      %v474 = vshrl.u32 %v388, 16
      %v476 = vrot.slane %v474, 7
      %v477 = vshll.u32 %v388, 16
      %v479 = vor.u32 %v476, %v477
      %v480 = vsel %vm396, %v472, %v479
      %v481 = vrot.slane %v476, 4
      %v483 = vshrl.u32 %v389, 16
      %v485 = vrot.slane %v483, 7
      %v486 = vshll.u32 %v389, 16
      %v488 = vor.u32 %v485, %v486
      %v489 = vrot.slane %v485, 4
      %v491 = vshrl.u32 %v390, 16
      %v493 = vrot.slane %v491, 7
      %v494 = vshll.u32 %v390, 16
      %v496 = vor.u32 %v493, %v494
      %v497 = vsel %vm396, %v489, %v496
      %v498 = vrot.slane %v493, 4
      %v500 = vshrl.u32 %v391, 16
      %v502 = vrot.slane %v500, 7
      %v503 = vshll.u32 %v391, 16
      %v505 = vor.u32 %v502, %v503
      %v506 = vrot.slane %v502, 4
      %v508 = vshrl.u32 %v392, 16
      %v510 = vrot.slane %v508, 7
      %v511 = vshll.u32 %v392, 16
      %v513 = vor.u32 %v510, %v511
      %v514 = vsel %vm396, %v506, %v513
      %v515 = vrot.slane %v510, 4
      %v517 = vshrl.u32 %v393, 16
      %v519 = vrot.slane %v517, 7
      %v520 = vshll.u32 %v393, 16
      %v522 = vor.u32 %v519, %v520
      %v523 = vrot.slane %v519, 4
      %v525 = vshrl.u32 %v394, 16
      %v527 = vrot.slane %v525, 7
      %v528 = vshll.u32 %v394, 16
      %v530 = vor.u32 %v527, %v528
      %v531 = vsel %vm396, %v523, %v530
      %v532 = vrot.slane %v527, 4
      %s557 = scalar_lea.vmem [#allocation2], 24
      %vm558 = vcmask 27648
      %vm559 = vmand %vm558, %vm291
      %v560 = vld [vmem:[%s557] sm:$0xf]
      %v561 = vsel %vm559, %v403, %v560
      %562 = vst [vmem:[%s557] sm:$0xf] %v561
      %vm563 = vcmask 27648
      %564 = vst.msk [vmem:[%s557 + $0x4] sm:$0xf] %vm563, %v412
      %v565 = vld [vmem:[%s557 + $0x8] sm:$0x1]
      %v566 = vsel %vm254, %v413, %v565
      %567 = vst [vmem:[%s557 + $0x8] sm:$0x1] %v566
      %v568 = vld [vmem:[%s557 + $0xc] sm:$0xf]
      %v569 = vsel %vm559, %v420, %v568
      %570 = vst [vmem:[%s557 + $0xc] sm:$0xf] %v569
      %571 = vst.msk [vmem:[%s557 + $0x10] sm:$0xf] %vm563, %v429
      %v572 = vld [vmem:[%s557 + $0x14] sm:$0x1]
      %v573 = vsel %vm254, %v430, %v572
      %574 = vst [vmem:[%s557 + $0x14] sm:$0x1] %v573
      %v575 = vld [vmem:[%s557 + $0x18] sm:$0xf]
      %v576 = vsel %vm559, %v437, %v575
      %577 = vst [vmem:[%s557 + $0x18] sm:$0xf] %v576
      %578 = vst.msk [vmem:[%s557 + $0x1c] sm:$0xf] %vm563, %v446
      %v579 = vld [vmem:[%s557 + $0x20] sm:$0x1]
      %v580 = vsel %vm254, %v447, %v579
      %581 = vst [vmem:[%s557 + $0x20] sm:$0x1] %v580
      %v582 = vld [vmem:[%s557 + $0x24] sm:$0xf]
      %v583 = vsel %vm559, %v454, %v582
      %584 = vst [vmem:[%s557 + $0x24] sm:$0xf] %v583
      %585 = vst.msk [vmem:[%s557 + $0x28] sm:$0xf] %vm563, %v463
      %v586 = vld [vmem:[%s557 + $0x2c] sm:$0x1]
      %v587 = vsel %vm254, %v464, %v586
      %588 = vst [vmem:[%s557 + $0x2c] sm:$0x1] %v587
      %v589 = vld [vmem:[%s557 + $0x30] sm:$0xf]
      %v590 = vsel %vm559, %v471, %v589
      %591 = vst [vmem:[%s557 + $0x30] sm:$0xf] %v590
      %592 = vst.msk [vmem:[%s557 + $0x34] sm:$0xf] %vm563, %v480
      %v593 = vld [vmem:[%s557 + $0x38] sm:$0x1]
      %v594 = vsel %vm254, %v481, %v593
      %595 = vst [vmem:[%s557 + $0x38] sm:$0x1] %v594
      %v596 = vld [vmem:[%s557 + $0x3c] sm:$0xf]
      %v597 = vsel %vm559, %v488, %v596
      %598 = vst [vmem:[%s557 + $0x3c] sm:$0xf] %v597
      %599 = vst.msk [vmem:[%s557 + $0x40] sm:$0xf] %vm563, %v497
      %v600 = vld [vmem:[%s557 + $0x44] sm:$0x1]
      %v601 = vsel %vm254, %v498, %v600
      %602 = vst [vmem:[%s557 + $0x44] sm:$0x1] %v601
      %v603 = vld [vmem:[%s557 + $0x48] sm:$0xf]
      %v604 = vsel %vm559, %v505, %v603
      %605 = vst [vmem:[%s557 + $0x48] sm:$0xf] %v604
      %606 = vst.msk [vmem:[%s557 + $0x4c] sm:$0xf] %vm563, %v514
      %v607 = vld [vmem:[%s557 + $0x50] sm:$0x1]
      %v608 = vsel %vm254, %v515, %v607
      %609 = vst [vmem:[%s557 + $0x50] sm:$0x1] %v608
      %v610 = vld [vmem:[%s557 + $0x54] sm:$0xf]
      %v611 = vsel %vm559, %v522, %v610
      %612 = vst [vmem:[%s557 + $0x54] sm:$0xf] %v611
      %613 = vst.msk [vmem:[%s557 + $0x58] sm:$0xf] %vm563, %v531
      %v614 = vld [vmem:[%s557 + $0x5c] sm:$0x1]
      %v615 = vsel %vm254, %v532, %v614
      %616 = vst [vmem:[%s557 + $0x5c] sm:$0x1] %v615
      %p617 = scmp.eq.s32.totalorder %s21, 0
      // Predicated region
      $region41: #{tpu_custom_call.1} parent=39 // pred_check
        %p618 = pneg %p617
      $region42: #{tpu_custom_call.1} parent=39 // pred_check_branch
        %620 = sbr.rel (%p618) target = $region44
      $region43: #{tpu_custom_call.1} parent=39 // pred_region
        %v621 = vld [vmem:[#allocation2] sm:$0xf]
        %v622 = vsel %vm559, 0, %v621
        %623 = vst [vmem:[#allocation2] sm:$0xf] %v622
        %624 = vst.msk [vmem:[#allocation2 + $0x4] sm:$0xf] %vm563, 0
        %v625 = vld [vmem:[#allocation2 + $0x8] sm:$0x1]
        %v626 = vsel %vm254, 0, %v625
        %627 = vst [vmem:[#allocation2 + $0x8] sm:$0x1] %v626
        %v628 = vld [vmem:[#allocation2 + $0xc] sm:$0xf]
        %v629 = vsel %vm559, 0, %v628
        %630 = vst [vmem:[#allocation2 + $0xc] sm:$0xf] %v629
        %631 = vst.msk [vmem:[#allocation2 + $0x10] sm:$0xf] %vm563, 0
        %v632 = vld [vmem:[#allocation2 + $0x14] sm:$0x1]
        %v633 = vsel %vm254, 0, %v632
        %634 = vst [vmem:[#allocation2 + $0x14] sm:$0x1] %v633
      $region44: #{tpu_custom_call.1} parent=39 // pred_fallthru
        _
      %p635 = scmp.gt.s32.totalorder %s21, 0
      // Predicated region
      $region45: #{tpu_custom_call.1} parent=39 // pred_check
        %p636 = pneg %p635
      $region46: #{tpu_custom_call.1} parent=39 // pred_check_branch
        %638 = sbr.rel (%p636) target = $region48
      $region47: #{tpu_custom_call.1} parent=39 // pred_region
        %s639 = ssub.s32 %s251, 2
        %s640 = smul.u32 %s639, 16
        %s641 = scalar_lea.vmem %s238, %s640
        %v642 = vld [vmem:[%s641] sm:$0xff]
        %v643 = vld [vmem:[%s641 + $0x8] sm:$0xff]
        %v644 = vld [vmem:[%s641 + $0x10] sm:$0xff]
        %v645 = vld [vmem:[%s641 + $0x18] sm:$0xff]
        %v646 = vpack.c.bf16 %v643, %v642
        %v647 = vpack.c.bf16 %v645, %v644
        %v650 = vunpack.c.l.b16 %v646
        %v651 = vunpack.c.h.b16 %v646
        %v652 = vunpack.c.l.b16 %v647
        %v653 = vunpack.c.h.b16 %v647
        %v654 = vpack.c.b16 %v650, %v650
        %v655 = vpack.c.b16 %v651, %v651
        %v656 = vpack.c.b16 %v652, %v652
        %v657 = vpack.c.b16 %v653, %v653
        %v659 = vshrl.u32 %v654, 16
        %v661 = vrot.slane %v659, 7
        %v662 = vshll.u32 %v654, 16
        %v664 = vor.u32 %v661, %v662
        %v665 = vrot.slane %v661, 4
        %v667 = vshrl.u32 %v655, 16
        %v669 = vrot.slane %v667, 7
        %v670 = vshll.u32 %v655, 16
        %v672 = vor.u32 %v669, %v670
        %v673 = vsel %vm396, %v665, %v672
        %v674 = vrot.slane %v669, 4
        %v676 = vshrl.u32 %v656, 16
        %v678 = vrot.slane %v676, 7
        %v679 = vshll.u32 %v656, 16
        %v681 = vor.u32 %v678, %v679
        %v682 = vrot.slane %v678, 4
        %v684 = vshrl.u32 %v657, 16
        %v686 = vrot.slane %v684, 7
        %v687 = vshll.u32 %v657, 16
        %v689 = vor.u32 %v686, %v687
        %v690 = vsel %vm396, %v682, %v689
        %v691 = vrot.slane %v686, 4
        %v698 = vld [vmem:[#allocation2] sm:$0xf]
        %v699 = vsel %vm559, %v664, %v698
        %700 = vst [vmem:[#allocation2] sm:$0xf] %v699
        %701 = vst.msk [vmem:[#allocation2 + $0x4] sm:$0xf] %vm563, %v673
        %v702 = vld [vmem:[#allocation2 + $0x8] sm:$0x1]
        %v703 = vsel %vm254, %v674, %v702
        %704 = vst [vmem:[#allocation2 + $0x8] sm:$0x1] %v703
        %v705 = vld [vmem:[#allocation2 + $0xc] sm:$0xf]
        %v706 = vsel %vm559, %v681, %v705
        %707 = vst [vmem:[#allocation2 + $0xc] sm:$0xf] %v706
        %708 = vst.msk [vmem:[#allocation2 + $0x10] sm:$0xf] %vm563, %v690
        %v709 = vld [vmem:[#allocation2 + $0x14] sm:$0x1]
        %v710 = vsel %vm254, %v691, %v709
        %711 = vst [vmem:[#allocation2 + $0x14] sm:$0x1] %v710
      $region48: #{tpu_custom_call.1} parent=39 // pred_fallthru
        _
      %p712 = scmp.eq.s32.totalorder %s21, 1
      // Predicated region
      $region49: #{tpu_custom_call.1} parent=39 // pred_check
        %p713 = pneg %p712
      $region50: #{tpu_custom_call.1} parent=39 // pred_check_branch
        %715 = sbr.rel (%p713) target = $region52
      $region51: #{tpu_custom_call.1} parent=39 // pred_region
        %s716 = scalar_lea.vmem [#allocation2], 120
        %v717 = vld [vmem:[%s716] sm:$0xf]
        %v718 = vsel %vm559, 0, %v717
        %719 = vst [vmem:[%s716] sm:$0xf] %v718
        %720 = vst.msk [vmem:[%s716 + $0x4] sm:$0xf] %vm563, 0
        %v721 = vld [vmem:[%s716 + $0x8] sm:$0x1]
        %v722 = vsel %vm254, 0, %v721
        %723 = vst [vmem:[%s716 + $0x8] sm:$0x1] %v722
        %v724 = vld [vmem:[%s716 + $0xc] sm:$0xf]
        %v725 = vsel %vm559, 0, %v724
        %726 = vst [vmem:[%s716 + $0xc] sm:$0xf] %v725
        %727 = vst.msk [vmem:[%s716 + $0x10] sm:$0xf] %vm563, 0
        %v728 = vld [vmem:[%s716 + $0x14] sm:$0x1]
        %v729 = vsel %vm254, 0, %v728
        %730 = vst [vmem:[%s716 + $0x14] sm:$0x1] %v729
      $region52: #{tpu_custom_call.1} parent=39 // pred_fallthru
        _
      %p731 = scmp.lt.s32.totalorder %s21, 1
      // Predicated region
      $region53: #{tpu_custom_call.1} parent=39 // pred_check
        %p732 = pneg %p731
      $region54: #{tpu_custom_call.1} parent=39 // pred_check_branch
        %734 = sbr.rel (%p732) target = $region56
      $region55: #{tpu_custom_call.1} parent=39 // pred_region
        %s735 = sadd.s32 %s251, 8
        %s736 = smul.u32 %s735, 16
        %s737 = scalar_lea.vmem %s238, %s736
        %v738 = vld [vmem:[%s737] sm:$0xff]
        %v739 = vld [vmem:[%s737 + $0x8] sm:$0xff]
        %v740 = vld [vmem:[%s737 + $0x10] sm:$0xff]
        %v741 = vld [vmem:[%s737 + $0x18] sm:$0xff]
        %v742 = vpack.c.bf16 %v739, %v738
        %v743 = vpack.c.bf16 %v741, %v740
        %v746 = vunpack.c.l.b16 %v742
        %v747 = vunpack.c.h.b16 %v742
        %v748 = vunpack.c.l.b16 %v743
        %v749 = vunpack.c.h.b16 %v743
        %v750 = vpack.c.b16 %v746, %v746
        %v751 = vpack.c.b16 %v747, %v747
        %v752 = vpack.c.b16 %v748, %v748
        %v753 = vpack.c.b16 %v749, %v749
        %v755 = vshrl.u32 %v750, 16
        %v757 = vrot.slane %v755, 7
        %v758 = vshll.u32 %v750, 16
        %v760 = vor.u32 %v757, %v758
        %v761 = vrot.slane %v757, 4
        %v763 = vshrl.u32 %v751, 16
        %v765 = vrot.slane %v763, 7
        %v766 = vshll.u32 %v751, 16
        %v768 = vor.u32 %v765, %v766
        %v769 = vsel %vm396, %v761, %v768
        %v770 = vrot.slane %v765, 4
        %v772 = vshrl.u32 %v752, 16
        %v774 = vrot.slane %v772, 7
        %v775 = vshll.u32 %v752, 16
        %v777 = vor.u32 %v774, %v775
        %v778 = vrot.slane %v774, 4
        %v780 = vshrl.u32 %v753, 16
        %v782 = vrot.slane %v780, 7
        %v783 = vshll.u32 %v753, 16
        %v785 = vor.u32 %v782, %v783
        %v786 = vsel %vm396, %v778, %v785
        %v787 = vrot.slane %v782, 4
        %s794 = scalar_lea.vmem [#allocation2], 120
        %v795 = vld [vmem:[%s794] sm:$0xf]
        %v796 = vsel %vm559, %v760, %v795
        %797 = vst [vmem:[%s794] sm:$0xf] %v796
        %798 = vst.msk [vmem:[%s794 + $0x4] sm:$0xf] %vm563, %v769
        %v799 = vld [vmem:[%s794 + $0x8] sm:$0x1]
        %v800 = vsel %vm254, %v770, %v799
        %801 = vst [vmem:[%s794 + $0x8] sm:$0x1] %v800
        %v802 = vld [vmem:[%s794 + $0xc] sm:$0xf]
        %v803 = vsel %vm559, %v777, %v802
        %804 = vst [vmem:[%s794 + $0xc] sm:$0xf] %v803
        %805 = vst.msk [vmem:[%s794 + $0x10] sm:$0xf] %vm563, %v786
        %v806 = vld [vmem:[%s794 + $0x14] sm:$0x1]
        %v807 = vsel %vm254, %v787, %v806
        %808 = vst [vmem:[%s794 + $0x14] sm:$0x1] %v807
      $region56: #{tpu_custom_call.1} parent=39 // pred_fallthru
        _
      %v809 = vld [vmem:[#allocation2] sm:$0xf]
      %v810 = vld [vmem:[#allocation2 + $0x4] sm:$0xf]
      %v811 = vld [vmem:[#allocation2 + $0xc] sm:$0xf]
      %v812 = vld [vmem:[#allocation2 + $0x10] sm:$0xf]
      %v813 = vld [vmem:[#allocation2 + $0x18] sm:$0xf]
      %v814 = vld [vmem:[#allocation2 + $0x1c] sm:$0xf]
      %v815 = vld [vmem:[#allocation2 + $0x24] sm:$0xf]
      %v816 = vld [vmem:[#allocation2 + $0x28] sm:$0xf]
      %v817 = vld [vmem:[#allocation2 + $0x30] sm:$0xf]
      %v818 = vld [vmem:[#allocation2 + $0x34] sm:$0xf]
      %v819 = vld [vmem:[#allocation2 + $0x3c] sm:$0xf]
      %v820 = vld [vmem:[#allocation2 + $0x40] sm:$0xf]
      %v821 = vld [vmem:[#allocation2 + $0x48] sm:$0xf]
      %v822 = vld [vmem:[#allocation2 + $0x4c] sm:$0xf]
      %v823 = vld [vmem:[#allocation2 + $0x54] sm:$0xf]
      %v824 = vld [vmem:[#allocation2 + $0x58] sm:$0xf]
      %v825 = vld [vmem:[#allocation2 + $0x60] sm:$0xf]
      %v826 = vld [vmem:[#allocation2 + $0x64] sm:$0xf]
      %v827 = vld [vmem:[#allocation2 + $0x6c] sm:$0xf]
      %v828 = vld [vmem:[#allocation2 + $0x70] sm:$0xf]
      %v829 = vld [vmem:[%s1] sm:$0x3]
      %v830 = vld [vmem:[#allocation2 + $0x8] sm:$0x1]
      %v831 = vld [vmem:[#allocation2 + $0x14] sm:$0x1]
      %v832 = vld [vmem:[#allocation2 + $0x20] sm:$0x1]
      %v833 = vld [vmem:[#allocation2 + $0x2c] sm:$0x1]
      %v834 = vld [vmem:[#allocation2 + $0x38] sm:$0x1]
      %v835 = vld [vmem:[#allocation2 + $0x44] sm:$0x1]
      %v836 = vld [vmem:[#allocation2 + $0x50] sm:$0x1]
      %v837 = vld [vmem:[#allocation2 + $0x5c] sm:$0x1]
      %v838 = vld [vmem:[#allocation2 + $0x68] sm:$0x1]
      %v839 = vld [vmem:[#allocation2 + $0x74] sm:$0x1]
      %vm840 = vsmask.f32 3328
      %vm841 = vsmask.f32 7440
      %vm842 = vmor %vm840, %vm841
      %v844 = vshrl.u32 %v809, 16
      %v846 = vrot.slane %v844, 4
      %v847 = vshll.u32 %v809, 16
      %v849 = vrot.slane %v847, 5
      %v850 = vor.u32 %v846, %v849
      %v851 = vrot.slane %v850, 4
      %v853 = vshll.u32 %v810, 16
      %v855 = vrot.slane %v853, 5
      %v856 = vsel %vm842, %v851, %v855
      %v857 = vshrl.u32 %v810, 16
      %v859 = vrot.slane %v857, 4
      %v860 = vor.u32 %v859, %v855
      %v861 = vrot.slane %v860, 4
      %v863 = vshll.u32 %v830, 16
      %v865 = vrot.slane %v863, 5
      %v866 = vsel %vm842, %v861, %v865
      %v868 = vshrl.u32 %v811, 16
      %v870 = vrot.slane %v868, 4
      %v871 = vshll.u32 %v811, 16
      %v873 = vrot.slane %v871, 5
      %v874 = vor.u32 %v870, %v873
      %v875 = vrot.slane %v874, 4
      %v877 = vshll.u32 %v812, 16
      %v879 = vrot.slane %v877, 5
      %v880 = vsel %vm842, %v875, %v879
      %v881 = vshrl.u32 %v812, 16
      %v883 = vrot.slane %v881, 4
      %v884 = vor.u32 %v883, %v879
      %v885 = vrot.slane %v884, 4
      %v887 = vshll.u32 %v831, 16
      %v889 = vrot.slane %v887, 5
      %v890 = vsel %vm842, %v885, %v889
      %v892 = vshrl.u32 %v813, 16
      %v894 = vrot.slane %v892, 4
      %v895 = vshll.u32 %v813, 16
      %v897 = vrot.slane %v895, 5
      %v898 = vor.u32 %v894, %v897
      %v899 = vrot.slane %v898, 4
      %v901 = vshll.u32 %v814, 16
      %v903 = vrot.slane %v901, 5
      %v904 = vsel %vm842, %v899, %v903
      %v905 = vshrl.u32 %v814, 16
      %v907 = vrot.slane %v905, 4
      %v908 = vor.u32 %v907, %v903
      %v909 = vrot.slane %v908, 4
      %v911 = vshll.u32 %v832, 16
      %v913 = vrot.slane %v911, 5
      %v914 = vsel %vm842, %v909, %v913
      %v916 = vshrl.u32 %v815, 16
      %v918 = vrot.slane %v916, 4
      %v919 = vshll.u32 %v815, 16
      %v921 = vrot.slane %v919, 5
      %v922 = vor.u32 %v918, %v921
      %v923 = vrot.slane %v922, 4
      %v925 = vshll.u32 %v816, 16
      %v927 = vrot.slane %v925, 5
      %v928 = vsel %vm842, %v923, %v927
      %v929 = vshrl.u32 %v816, 16
      %v931 = vrot.slane %v929, 4
      %v932 = vor.u32 %v931, %v927
      %v933 = vrot.slane %v932, 4
      %v935 = vshll.u32 %v833, 16
      %v937 = vrot.slane %v935, 5
      %v938 = vsel %vm842, %v933, %v937
      %v940 = vshrl.u32 %v817, 16
      %v942 = vrot.slane %v940, 4
      %v943 = vshll.u32 %v817, 16
      %v945 = vrot.slane %v943, 5
      %v946 = vor.u32 %v942, %v945
      %v947 = vrot.slane %v946, 4
      %v949 = vshll.u32 %v818, 16
      %v951 = vrot.slane %v949, 5
      %v952 = vsel %vm842, %v947, %v951
      %v953 = vshrl.u32 %v818, 16
      %v955 = vrot.slane %v953, 4
      %v956 = vor.u32 %v955, %v951
      %v957 = vrot.slane %v956, 4
      %v959 = vshll.u32 %v834, 16
      %v961 = vrot.slane %v959, 5
      %v962 = vsel %vm842, %v957, %v961
      %v964 = vshrl.u32 %v819, 16
      %v966 = vrot.slane %v964, 4
      %v967 = vshll.u32 %v819, 16
      %v969 = vrot.slane %v967, 5
      %v970 = vor.u32 %v966, %v969
      %v971 = vrot.slane %v970, 4
      %v973 = vshll.u32 %v820, 16
      %v975 = vrot.slane %v973, 5
      %v976 = vsel %vm842, %v971, %v975
      %v977 = vshrl.u32 %v820, 16
      %v979 = vrot.slane %v977, 4
      %v980 = vor.u32 %v979, %v975
      %v981 = vrot.slane %v980, 4
      %v983 = vshll.u32 %v835, 16
      %v985 = vrot.slane %v983, 5
      %v986 = vsel %vm842, %v981, %v985
      %v988 = vshrl.u32 %v821, 16
      %v990 = vrot.slane %v988, 4
      %v991 = vshll.u32 %v821, 16
      %v993 = vrot.slane %v991, 5
      %v994 = vor.u32 %v990, %v993
      %v995 = vrot.slane %v994, 4
      %v997 = vshll.u32 %v822, 16
      %v999 = vrot.slane %v997, 5
      %v1000 = vsel %vm842, %v995, %v999
      %v1001 = vshrl.u32 %v822, 16
      %v1003 = vrot.slane %v1001, 4
      %v1004 = vor.u32 %v1003, %v999
      %v1005 = vrot.slane %v1004, 4
      %v1007 = vshll.u32 %v836, 16
      %v1009 = vrot.slane %v1007, 5
      %v1010 = vsel %vm842, %v1005, %v1009
      %v1012 = vshrl.u32 %v823, 16
      %v1014 = vrot.slane %v1012, 4
      %v1015 = vshll.u32 %v823, 16
      %v1017 = vrot.slane %v1015, 5
      %v1018 = vor.u32 %v1014, %v1017
      %v1019 = vrot.slane %v1018, 4
      %v1021 = vshll.u32 %v824, 16
      %v1023 = vrot.slane %v1021, 5
      %v1024 = vsel %vm842, %v1019, %v1023
      %v1025 = vshrl.u32 %v824, 16
      %v1027 = vrot.slane %v1025, 4
      %v1028 = vor.u32 %v1027, %v1023
      %v1029 = vrot.slane %v1028, 4
      %v1031 = vshll.u32 %v837, 16
      %v1033 = vrot.slane %v1031, 5
      %v1034 = vsel %vm842, %v1029, %v1033
      %v1036 = vshrl.u32 %v825, 16
      %v1038 = vrot.slane %v1036, 4
      %v1039 = vshll.u32 %v825, 16
      %v1041 = vrot.slane %v1039, 5
      %v1042 = vor.u32 %v1038, %v1041
      %v1043 = vrot.slane %v1042, 4
      %v1045 = vshll.u32 %v826, 16
      %v1047 = vrot.slane %v1045, 5
      %v1048 = vsel %vm842, %v1043, %v1047
      %v1049 = vshrl.u32 %v826, 16
      %v1051 = vrot.slane %v1049, 4
      %v1052 = vor.u32 %v1051, %v1047
      %v1053 = vrot.slane %v1052, 4
      %v1055 = vshll.u32 %v838, 16
      %v1057 = vrot.slane %v1055, 5
      %v1058 = vsel %vm842, %v1053, %v1057
      %v1060 = vshrl.u32 %v827, 16
      %v1062 = vrot.slane %v1060, 4
      %v1063 = vshll.u32 %v827, 16
      %v1065 = vrot.slane %v1063, 5
      %v1066 = vor.u32 %v1062, %v1065
      %v1067 = vrot.slane %v1066, 4
      %v1069 = vshll.u32 %v828, 16
      %v1071 = vrot.slane %v1069, 5
      %v1072 = vsel %vm842, %v1067, %v1071
      %v1073 = vshrl.u32 %v828, 16
      %v1075 = vrot.slane %v1073, 4
      %v1076 = vor.u32 %v1075, %v1071
      %v1077 = vrot.slane %v1076, 4
      %v1079 = vshll.u32 %v839, 16
      %v1081 = vrot.slane %v1079, 5
      %v1082 = vsel %vm842, %v1077, %v1081
      %v1083 = vld [vmem:[%s1] sm:$0xc]
      %v1084 = vunpack.c.l.b16 %v856
      %v1085 = vunpack.c.l.b16 %v866
      %v1086 = vunpack.c.l.b16 %v880
      %v1087 = vunpack.c.l.b16 %v890
      %v1088 = vunpack.c.l.b16 %v904
      %v1089 = vunpack.c.l.b16 %v914
      %v1090 = vunpack.c.l.b16 %v928
      %v1091 = vunpack.c.l.b16 %v938
      %v1092 = vunpack.c.l.b16 %v952
      %v1093 = vunpack.c.l.b16 %v962
      %v1094 = vunpack.c.l.b16 %v976
      %v1095 = vunpack.c.l.b16 %v986
      %v1096 = vunpack.c.l.b16 %v1000
      %v1097 = vunpack.c.l.b16 %v1010
      %v1098 = vunpack.c.l.b16 %v1024
      %v1099 = vunpack.c.l.b16 %v1034
      %v1100 = vunpack.c.l.b16 %v1048
      %v1101 = vunpack.c.l.b16 %v1058
      %v1102 = vunpack.c.l.b16 %v1072
      %v1103 = vunpack.c.l.b16 %v1082
      %v1104 = vpack.c.b16 %v1085, %v1084
      %v1105 = vpack.c.b16 %v1087, %v1086
      %v1106 = vpack.c.b16 %v1089, %v1088
      %v1107 = vpack.c.b16 %v1091, %v1090
      %v1108 = vpack.c.b16 %v1093, %v1092
      %v1109 = vpack.c.b16 %v1095, %v1094
      %v1110 = vpack.c.b16 %v1097, %v1096
      %v1111 = vpack.c.b16 %v1099, %v1098
      %v1112 = vpack.c.b16 %v1101, %v1100
      %v1113 = vpack.c.b16 %v1103, %v1102
      %v1115 = vunpack.c.l.b16 %v1083
      %v1116 = vpack.c.b16 %v1115, %v1115
      %v1117 = vrot.slane %v1116, 2
      %vm1118 = vcmask 31744
      %v1120 = vsel %vm1118, %v1104, 0
      %v1123 = vsel %vm1118, %v1105, 0
      %v1126 = vsel %vm1118, %v1106, 0
      %v1129 = vsel %vm1118, %v1107, 0
      %v1132 = vsel %vm1118, %v1108, 0
      %v1135 = vsel %vm1118, %v1109, 0
      %v1138 = vsel %vm1118, %v1110, 0
      %v1141 = vsel %vm1118, %v1111, 0
      %v1144 = vsel %vm1118, %v1112, 0
      %v1147 = vsel %vm1118, %v1113, 0
      %vm1149 = vcmask 1041408
      %v1151 = vsel %vm1149, %v1117, 0
      %1153 = vmatprep.subr.bf16.mxu0 0
      %1154 = vmatpush1.bf16.msra.mxu0 %v1151
      %1155 = vmatprep.subr.bf16.mxu0 0
      %1156 = vmatpush1.bf16.msra.mxu0 0
      %1157 = vmatprep.subr.bf16.mxu0 0
      %1158 = vmatpush1.bf16.msra.mxu0 0
      %1159 = vmatprep.subr.bf16.mxu0 0
      %1160 = vmatpush1.bf16.msra.mxu0 0
      %1161 = vmatprep.subr.bf16.mxu0 0
      %1162 = vmatpush1.bf16.msra.mxu0 0
      %1163 = vmatprep.subr.bf16.mxu0 0
      %1164 = vmatpush1.bf16.msra.mxu0 0
      %1165 = vmatprep.subr.bf16.mxu0 0
      %1166 = vmatpush1.bf16.msra.mxu0 0
      %1167 = vmatprep.subr.bf16.mxu0 0
      %1168 = vmatpush1.bf16.msra.mxu0 0
      %1169 = vmatprep.subr.bf16.mxu0 0
      %1170 = vmatpush1.bf16.msra.mxu0 0
      %1171 = vmatprep.subr.bf16.mxu0 0
      %1172 = vmatpush1.bf16.msra.mxu0 0
      %1173 = vmatprep.subr.bf16.mxu0 0
      %1174 = vmatpush1.bf16.msra.mxu0 0
      %1175 = vmatprep.subr.bf16.mxu0 0
      %1176 = vmatpush1.bf16.msra.mxu0 0
      %1177 = vmatprep.subr.bf16.mxu0 0
      %1178 = vmatpush1.bf16.msra.mxu0 0
      %1179 = vmatprep.subr.bf16.mxu0 0
      %1180 = vmatpush1.bf16.msra.mxu0 0
      %1181 = vmatprep.subr.bf16.mxu0 0
      %1182 = vmatpush1.bf16.msra.mxu0 0
      %1183 = vmatprep.subr.bf16.mxu0 0
      %1184 = vmatpush1.bf16.msra.mxu0 0
      %1185 = vmatprep.mubr.bf16.mxu0 0
      %1186 = vmatmul.mubr.bf16.gmra.mrb[0].mxu0 %v1120
      %v1187 = vpop.f32.mrb[0].mxu0
      %v1188 = vadd.f32 0.0, %v1187
      %v1189 = vpop.f32.mrb[0].mxu0
      %v1190 = vpop.f32.mrb[0].mxu0
      %v1191 = vadd.f32 0.0, %v1190
      %v1192 = vpop.f32.mrb[0].mxu0
      %1193 = vmatprep.mubr.bf16.mxu0 0
      %1194 = vmatmul.mubr.bf16.gmra.mrb[0].mxu0 %v1123
      %v1195 = vpop.f32.mrb[0].mxu0
      %v1196 = vadd.f32 0.0, %v1195
      %v1197 = vpop.f32.mrb[0].mxu0
      %v1198 = vpop.f32.mrb[0].mxu0
      %v1199 = vadd.f32 0.0, %v1198
      %v1200 = vpop.f32.mrb[0].mxu0
      %1201 = vmatprep.mubr.bf16.mxu0 0
      %1202 = vmatmul.mubr.bf16.gmra.mrb[0].mxu0 %v1126
      %v1203 = vpop.f32.mrb[0].mxu0
      %v1204 = vadd.f32 0.0, %v1203
      %v1205 = vpop.f32.mrb[0].mxu0
      %v1206 = vpop.f32.mrb[0].mxu0
      %v1207 = vadd.f32 0.0, %v1206
      %v1208 = vpop.f32.mrb[0].mxu0
      %1209 = vmatprep.mubr.bf16.mxu0 0
      %1210 = vmatmul.mubr.bf16.gmra.mrb[0].mxu0 %v1129
      %v1211 = vpop.f32.mrb[0].mxu0
      %v1212 = vadd.f32 0.0, %v1211
      %v1213 = vpop.f32.mrb[0].mxu0
      %v1214 = vpop.f32.mrb[0].mxu0
      %v1215 = vadd.f32 0.0, %v1214
      %v1216 = vpop.f32.mrb[0].mxu0
      %1217 = vmatprep.mubr.bf16.mxu0 0
      %1218 = vmatmul.mubr.bf16.gmra.mrb[0].mxu0 %v1132
      %v1219 = vpop.f32.mrb[0].mxu0
      %v1220 = vadd.f32 0.0, %v1219
      %v1221 = vpop.f32.mrb[0].mxu0
      %v1222 = vpop.f32.mrb[0].mxu0
      %v1223 = vadd.f32 0.0, %v1222
      %v1224 = vpop.f32.mrb[0].mxu0
      %1225 = vmatprep.mubr.bf16.mxu0 0
      %1226 = vmatmul.mubr.bf16.gmra.mrb[0].mxu0 %v1135
      %v1227 = vpop.f32.mrb[0].mxu0
      %v1228 = vadd.f32 0.0, %v1227
      %v1229 = vpop.f32.mrb[0].mxu0
      %v1230 = vpop.f32.mrb[0].mxu0
      %v1231 = vadd.f32 0.0, %v1230
      %v1232 = vpop.f32.mrb[0].mxu0
      %1233 = vmatprep.mubr.bf16.mxu0 0
      %1234 = vmatmul.mubr.bf16.gmra.mrb[0].mxu0 %v1138
      %v1235 = vpop.f32.mrb[0].mxu0
      %v1236 = vadd.f32 0.0, %v1235
      %v1237 = vpop.f32.mrb[0].mxu0
      %v1238 = vpop.f32.mrb[0].mxu0
      %v1239 = vadd.f32 0.0, %v1238
      %v1240 = vpop.f32.mrb[0].mxu0
      %1241 = vmatprep.mubr.bf16.mxu0 0
      %1242 = vmatmul.mubr.bf16.gmra.mrb[0].mxu0 %v1141
      %v1243 = vpop.f32.mrb[0].mxu0
      %v1244 = vadd.f32 0.0, %v1243
      %v1245 = vpop.f32.mrb[0].mxu0
      %v1246 = vpop.f32.mrb[0].mxu0
      %v1247 = vadd.f32 0.0, %v1246
      %v1248 = vpop.f32.mrb[0].mxu0
      %1249 = vmatprep.mubr.bf16.mxu0 0
      %1250 = vmatmul.mubr.bf16.gmra.mrb[0].mxu0 %v1144
      %v1251 = vpop.f32.mrb[0].mxu0
      %v1252 = vadd.f32 0.0, %v1251
      %v1253 = vpop.f32.mrb[0].mxu0
      %v1254 = vpop.f32.mrb[0].mxu0
      %v1255 = vadd.f32 0.0, %v1254
      %v1256 = vpop.f32.mrb[0].mxu0
      %1257 = vmatprep.mubr.bf16.mxu0 0
      %1258 = vmatmul.mubr.bf16.gmra.mrb[0].mxu0 %v1147
      %v1259 = vpop.f32.mrb[0].mxu0
      %v1260 = vadd.f32 0.0, %v1259
      %v1261 = vpop.f32.mrb[0].mxu0
      %v1262 = vpop.f32.mrb[0].mxu0
      %v1263 = vadd.f32 0.0, %v1262
      %v1264 = vpop.f32.mrb[0].mxu0
      %1265 = vdwg.mxu0
      %v1286 = vunpack.c.l.b16 %v809
      %v1287 = vunpack.c.l.b16 %v810
      %v1288 = vunpack.c.l.b16 %v811
      %v1289 = vunpack.c.l.b16 %v812
      %v1290 = vunpack.c.l.b16 %v813
      %v1291 = vunpack.c.l.b16 %v814
      %v1292 = vunpack.c.l.b16 %v815
      %v1293 = vunpack.c.l.b16 %v816
      %v1294 = vunpack.c.l.b16 %v817
      %v1295 = vunpack.c.l.b16 %v818
      %v1296 = vunpack.c.l.b16 %v819
      %v1297 = vunpack.c.l.b16 %v820
      %v1298 = vunpack.c.l.b16 %v821
      %v1299 = vunpack.c.l.b16 %v822
      %v1300 = vunpack.c.l.b16 %v823
      %v1301 = vunpack.c.l.b16 %v824
      %v1302 = vunpack.c.l.b16 %v825
      %v1303 = vunpack.c.l.b16 %v826
      %v1304 = vunpack.c.l.b16 %v827
      %v1305 = vunpack.c.l.b16 %v828
      %v1306 = vpack.c.b16 %v1287, %v1286
      %v1307 = vpack.c.b16 %v1289, %v1288
      %v1308 = vpack.c.b16 %v1291, %v1290
      %v1309 = vpack.c.b16 %v1293, %v1292
      %v1310 = vpack.c.b16 %v1295, %v1294
      %v1311 = vpack.c.b16 %v1297, %v1296
      %v1312 = vpack.c.b16 %v1299, %v1298
      %v1313 = vpack.c.b16 %v1301, %v1300
      %v1314 = vpack.c.b16 %v1303, %v1302
      %v1315 = vpack.c.b16 %v1305, %v1304
      %v1317 = vsel %vm1118, %v1306, 0
      %v1320 = vsel %vm1118, %v1307, 0
      %v1323 = vsel %vm1118, %v1308, 0
      %v1326 = vsel %vm1118, %v1309, 0
      %v1329 = vsel %vm1118, %v1310, 0
      %v1332 = vsel %vm1118, %v1311, 0
      %v1335 = vsel %vm1118, %v1312, 0
      %v1338 = vsel %vm1118, %v1313, 0
      %v1341 = vsel %vm1118, %v1314, 0
      %v1344 = vsel %vm1118, %v1315, 0
      %v1347 = vsel %vm1149, %v829, 0
      %1349 = vmatprep.subr.bf16.mxu0 0
      %1350 = vmatpush1.bf16.msra.mxu0 %v1347
      %1351 = vmatprep.subr.bf16.mxu0 0
      %1352 = vmatpush1.bf16.msra.mxu0 0
      %1353 = vmatprep.subr.bf16.mxu0 0
      %1354 = vmatpush1.bf16.msra.mxu0 0
      %1355 = vmatprep.subr.bf16.mxu0 0
      %1356 = vmatpush1.bf16.msra.mxu0 0
      %1357 = vmatprep.subr.bf16.mxu0 0
      %1358 = vmatpush1.bf16.msra.mxu0 0
      %1359 = vmatprep.subr.bf16.mxu0 0
      %1360 = vmatpush1.bf16.msra.mxu0 0
      %1361 = vmatprep.subr.bf16.mxu0 0
      %1362 = vmatpush1.bf16.msra.mxu0 0
      %1363 = vmatprep.subr.bf16.mxu0 0
      %1364 = vmatpush1.bf16.msra.mxu0 0
      %1365 = vmatprep.subr.bf16.mxu0 0
      %1366 = vmatpush1.bf16.msra.mxu0 0
      %1367 = vmatprep.subr.bf16.mxu0 0
      %1368 = vmatpush1.bf16.msra.mxu0 0
      %1369 = vmatprep.subr.bf16.mxu0 0
      %1370 = vmatpush1.bf16.msra.mxu0 0
      %1371 = vmatprep.subr.bf16.mxu0 0
      %1372 = vmatpush1.bf16.msra.mxu0 0
      %1373 = vmatprep.subr.bf16.mxu0 0
      %1374 = vmatpush1.bf16.msra.mxu0 0
      %1375 = vmatprep.subr.bf16.mxu0 0
      %1376 = vmatpush1.bf16.msra.mxu0 0
      %1377 = vmatprep.subr.bf16.mxu0 0
      %1378 = vmatpush1.bf16.msra.mxu0 0
      %1379 = vmatprep.subr.bf16.mxu0 0
      %1380 = vmatpush1.bf16.msra.mxu0 0
      %1381 = vmatprep.mubr.bf16.mxu0 0
      %1382 = vmatmul.mubr.bf16.gmra.mrb[0].mxu0 %v1317
      %v1383 = vpop.f32.mrb[0].mxu0
      %v1384 = vadd.f32 %v1188, %v1383
      %v1385 = vpop.f32.mrb[0].mxu0
      %v1386 = vpop.f32.mrb[0].mxu0
      %v1387 = vadd.f32 %v1191, %v1386
      %v1388 = vpop.f32.mrb[0].mxu0
      %1389 = vmatprep.mubr.bf16.mxu0 0
      %1390 = vmatmul.mubr.bf16.gmra.mrb[0].mxu0 %v1320
      %v1391 = vpop.f32.mrb[0].mxu0
      %v1392 = vadd.f32 %v1196, %v1391
      %v1393 = vpop.f32.mrb[0].mxu0
      %v1394 = vpop.f32.mrb[0].mxu0
      %v1395 = vadd.f32 %v1199, %v1394
      %v1396 = vpop.f32.mrb[0].mxu0
      %1397 = vmatprep.mubr.bf16.mxu0 0
      %1398 = vmatmul.mubr.bf16.gmra.mrb[0].mxu0 %v1323
      %v1399 = vpop.f32.mrb[0].mxu0
      %v1400 = vadd.f32 %v1204, %v1399
      %v1401 = vpop.f32.mrb[0].mxu0
      %v1402 = vpop.f32.mrb[0].mxu0
      %v1403 = vadd.f32 %v1207, %v1402
      %v1404 = vpop.f32.mrb[0].mxu0
      %1405 = vmatprep.mubr.bf16.mxu0 0
      %1406 = vmatmul.mubr.bf16.gmra.mrb[0].mxu0 %v1326
      %v1407 = vpop.f32.mrb[0].mxu0
      %v1408 = vadd.f32 %v1212, %v1407
      %v1409 = vpop.f32.mrb[0].mxu0
      %v1410 = vpop.f32.mrb[0].mxu0
      %v1411 = vadd.f32 %v1215, %v1410
      %v1412 = vpop.f32.mrb[0].mxu0
      %1413 = vmatprep.mubr.bf16.mxu0 0
      %1414 = vmatmul.mubr.bf16.gmra.mrb[0].mxu0 %v1329
      %v1415 = vpop.f32.mrb[0].mxu0
      %v1416 = vadd.f32 %v1220, %v1415
      %v1417 = vpop.f32.mrb[0].mxu0
      %v1418 = vpop.f32.mrb[0].mxu0
      %v1419 = vadd.f32 %v1223, %v1418
      %v1420 = vpop.f32.mrb[0].mxu0
      %1421 = vmatprep.mubr.bf16.mxu0 0
      %1422 = vmatmul.mubr.bf16.gmra.mrb[0].mxu0 %v1332
      %v1423 = vpop.f32.mrb[0].mxu0
      %v1424 = vadd.f32 %v1228, %v1423
      %v1425 = vpop.f32.mrb[0].mxu0
      %v1426 = vpop.f32.mrb[0].mxu0
      %v1427 = vadd.f32 %v1231, %v1426
      %v1428 = vpop.f32.mrb[0].mxu0
      %1429 = vmatprep.mubr.bf16.mxu0 0
      %1430 = vmatmul.mubr.bf16.gmra.mrb[0].mxu0 %v1335
      %v1431 = vpop.f32.mrb[0].mxu0
      %v1432 = vadd.f32 %v1236, %v1431
      %v1433 = vpop.f32.mrb[0].mxu0
      %v1434 = vpop.f32.mrb[0].mxu0
      %v1435 = vadd.f32 %v1239, %v1434
      %v1436 = vpop.f32.mrb[0].mxu0
      %1437 = vmatprep.mubr.bf16.mxu0 0
      %1438 = vmatmul.mubr.bf16.gmra.mrb[0].mxu0 %v1338
      %v1439 = vpop.f32.mrb[0].mxu0
      %v1440 = vadd.f32 %v1244, %v1439
      %v1441 = vpop.f32.mrb[0].mxu0
      %v1442 = vpop.f32.mrb[0].mxu0
      %v1443 = vadd.f32 %v1247, %v1442
      %v1444 = vpop.f32.mrb[0].mxu0
      %1445 = vmatprep.mubr.bf16.mxu0 0
      %1446 = vmatmul.mubr.bf16.gmra.mrb[0].mxu0 %v1341
      %v1447 = vpop.f32.mrb[0].mxu0
      %v1448 = vadd.f32 %v1252, %v1447
      %v1449 = vpop.f32.mrb[0].mxu0
      %v1450 = vpop.f32.mrb[0].mxu0
      %v1451 = vadd.f32 %v1255, %v1450
      %v1452 = vpop.f32.mrb[0].mxu0
      %1453 = vmatprep.mubr.bf16.mxu0 0
      %1454 = vmatmul.mubr.bf16.gmra.mrb[0].mxu0 %v1344
      %v1455 = vpop.f32.mrb[0].mxu0
      %v1456 = vadd.f32 %v1260, %v1455
      %v1457 = vpop.f32.mrb[0].mxu0
      %v1458 = vpop.f32.mrb[0].mxu0
      %v1459 = vadd.f32 %v1263, %v1458
      %v1460 = vpop.f32.mrb[0].mxu0
      %1461 = vdwg.mxu0
      %v1462 = vld [vmem:[#allocation2] sm:$0xe]
      %v1463 = vld [vmem:[#allocation2 + $0xc] sm:$0xe]
      %v1464 = vld [vmem:[#allocation2 + $0x18] sm:$0xe]
      %v1465 = vld [vmem:[#allocation2 + $0x24] sm:$0xe]
      %v1466 = vld [vmem:[#allocation2 + $0x30] sm:$0xe]
      %v1467 = vld [vmem:[#allocation2 + $0x3c] sm:$0xe]
      %v1468 = vld [vmem:[#allocation2 + $0x48] sm:$0xe]
      %v1469 = vld [vmem:[#allocation2 + $0x54] sm:$0xe]
      %v1470 = vld [vmem:[#allocation2 + $0x60] sm:$0xe]
      %v1471 = vld [vmem:[#allocation2 + $0x6c] sm:$0xe]
      %vm1492 = vcmask 1042432
      %vm1493 = vcmask 1046532
      %vm1494 = vmor %vm1492, %vm1493
      %v1495 = vrot.slane %v1462, 5
      %v1496 = vrot.slane %v1495, 4
      %v1497 = vrot.slane %v810, 5
      %v1498 = vsel %vm1494, %v1496, %v1497
      %v1499 = vrot.slane %v1497, 4
      %v1500 = vrot.slane %v830, 5
      %v1501 = vsel %vm1494, %v1499, %v1500
      %v1502 = vrot.slane %v1463, 5
      %v1503 = vrot.slane %v1502, 4
      %v1504 = vrot.slane %v812, 5
      %v1505 = vsel %vm1494, %v1503, %v1504
      %v1506 = vrot.slane %v1504, 4
      %v1507 = vrot.slane %v831, 5
      %v1508 = vsel %vm1494, %v1506, %v1507
      %v1509 = vrot.slane %v1464, 5
      %v1510 = vrot.slane %v1509, 4
      %v1511 = vrot.slane %v814, 5
      %v1512 = vsel %vm1494, %v1510, %v1511
      %v1513 = vrot.slane %v1511, 4
      %v1514 = vrot.slane %v832, 5
      %v1515 = vsel %vm1494, %v1513, %v1514
      %v1516 = vrot.slane %v1465, 5
      %v1517 = vrot.slane %v1516, 4
      %v1518 = vrot.slane %v816, 5
      %v1519 = vsel %vm1494, %v1517, %v1518
      %v1520 = vrot.slane %v1518, 4
      %v1521 = vrot.slane %v833, 5
      %v1522 = vsel %vm1494, %v1520, %v1521
      %v1523 = vrot.slane %v1466, 5
      %v1524 = vrot.slane %v1523, 4
      %v1525 = vrot.slane %v818, 5
      %v1526 = vsel %vm1494, %v1524, %v1525
      %v1527 = vrot.slane %v1525, 4
      %v1528 = vrot.slane %v834, 5
      %v1529 = vsel %vm1494, %v1527, %v1528
      %v1530 = vrot.slane %v1467, 5
      %v1531 = vrot.slane %v1530, 4
      %v1532 = vrot.slane %v820, 5
      %v1533 = vsel %vm1494, %v1531, %v1532
      %v1534 = vrot.slane %v1532, 4
      %v1535 = vrot.slane %v835, 5
      %v1536 = vsel %vm1494, %v1534, %v1535
      %v1537 = vrot.slane %v1468, 5
      %v1538 = vrot.slane %v1537, 4
      %v1539 = vrot.slane %v822, 5
      %v1540 = vsel %vm1494, %v1538, %v1539
      %v1541 = vrot.slane %v1539, 4
      %v1542 = vrot.slane %v836, 5
      %v1543 = vsel %vm1494, %v1541, %v1542
      %v1544 = vrot.slane %v1469, 5
      %v1545 = vrot.slane %v1544, 4
      %v1546 = vrot.slane %v824, 5
      %v1547 = vsel %vm1494, %v1545, %v1546
      %v1548 = vrot.slane %v1546, 4
      %v1549 = vrot.slane %v837, 5
      %v1550 = vsel %vm1494, %v1548, %v1549
      %v1551 = vrot.slane %v1470, 5
      %v1552 = vrot.slane %v1551, 4
      %v1553 = vrot.slane %v826, 5
      %v1554 = vsel %vm1494, %v1552, %v1553
      %v1555 = vrot.slane %v1553, 4
      %v1556 = vrot.slane %v838, 5
      %v1557 = vsel %vm1494, %v1555, %v1556
      %v1558 = vrot.slane %v1471, 5
      %v1559 = vrot.slane %v1558, 4
      %v1560 = vrot.slane %v828, 5
      %v1561 = vsel %vm1494, %v1559, %v1560
      %v1562 = vrot.slane %v1560, 4
      %v1563 = vrot.slane %v839, 5
      %v1564 = vsel %vm1494, %v1562, %v1563
      %v1565 = vld [vmem:[%s1 + $0x4] sm:$0x3]
      %v1566 = vunpack.c.l.b16 %v1498
      %v1567 = vunpack.c.l.b16 %v1501
      %v1568 = vunpack.c.l.b16 %v1505
      %v1569 = vunpack.c.l.b16 %v1508
      %v1570 = vunpack.c.l.b16 %v1512
      %v1571 = vunpack.c.l.b16 %v1515
      %v1572 = vunpack.c.l.b16 %v1519
      %v1573 = vunpack.c.l.b16 %v1522
      %v1574 = vunpack.c.l.b16 %v1526
      %v1575 = vunpack.c.l.b16 %v1529
      %v1576 = vunpack.c.l.b16 %v1533
      %v1577 = vunpack.c.l.b16 %v1536
      %v1578 = vunpack.c.l.b16 %v1540
      %v1579 = vunpack.c.l.b16 %v1543
      %v1580 = vunpack.c.l.b16 %v1547
      %v1581 = vunpack.c.l.b16 %v1550
      %v1582 = vunpack.c.l.b16 %v1554
      %v1583 = vunpack.c.l.b16 %v1557
      %v1584 = vunpack.c.l.b16 %v1561
      %v1585 = vunpack.c.l.b16 %v1564
      %v1586 = vpack.c.b16 %v1567, %v1566
      %v1587 = vpack.c.b16 %v1569, %v1568
      %v1588 = vpack.c.b16 %v1571, %v1570
      %v1589 = vpack.c.b16 %v1573, %v1572
      %v1590 = vpack.c.b16 %v1575, %v1574
      %v1591 = vpack.c.b16 %v1577, %v1576
      %v1592 = vpack.c.b16 %v1579, %v1578
      %v1593 = vpack.c.b16 %v1581, %v1580
      %v1594 = vpack.c.b16 %v1583, %v1582
      %v1595 = vpack.c.b16 %v1585, %v1584
      %v1597 = vsel %vm1118, %v1586, 0
      %v1600 = vsel %vm1118, %v1587, 0
      %v1603 = vsel %vm1118, %v1588, 0
      %v1606 = vsel %vm1118, %v1589, 0
      %v1609 = vsel %vm1118, %v1590, 0
      %v1612 = vsel %vm1118, %v1591, 0
      %v1615 = vsel %vm1118, %v1592, 0
      %v1618 = vsel %vm1118, %v1593, 0
      %v1621 = vsel %vm1118, %v1594, 0
      %v1624 = vsel %vm1118, %v1595, 0
      %v1627 = vsel %vm1149, %v1565, 0
      %1629 = vmatprep.subr.bf16.mxu0 0
      %1630 = vmatpush1.bf16.msra.mxu0 %v1627
      %1631 = vmatprep.subr.bf16.mxu0 0
      %1632 = vmatpush1.bf16.msra.mxu0 0
      %1633 = vmatprep.subr.bf16.mxu0 0
      %1634 = vmatpush1.bf16.msra.mxu0 0
      %1635 = vmatprep.subr.bf16.mxu0 0
      %1636 = vmatpush1.bf16.msra.mxu0 0
      %1637 = vmatprep.subr.bf16.mxu0 0
      %1638 = vmatpush1.bf16.msra.mxu0 0
      %1639 = vmatprep.subr.bf16.mxu0 0
      %1640 = vmatpush1.bf16.msra.mxu0 0
      %1641 = vmatprep.subr.bf16.mxu0 0
      %1642 = vmatpush1.bf16.msra.mxu0 0
      %1643 = vmatprep.subr.bf16.mxu0 0
      %1644 = vmatpush1.bf16.msra.mxu0 0
      %1645 = vmatprep.subr.bf16.mxu0 0
      %1646 = vmatpush1.bf16.msra.mxu0 0
      %1647 = vmatprep.subr.bf16.mxu0 0
      %1648 = vmatpush1.bf16.msra.mxu0 0
      %1649 = vmatprep.subr.bf16.mxu0 0
      %1650 = vmatpush1.bf16.msra.mxu0 0
      %1651 = vmatprep.subr.bf16.mxu0 0
      %1652 = vmatpush1.bf16.msra.mxu0 0
      %1653 = vmatprep.subr.bf16.mxu0 0
      %1654 = vmatpush1.bf16.msra.mxu0 0
      %1655 = vmatprep.subr.bf16.mxu0 0
      %1656 = vmatpush1.bf16.msra.mxu0 0
      %1657 = vmatprep.subr.bf16.mxu0 0
      %1658 = vmatpush1.bf16.msra.mxu0 0
      %1659 = vmatprep.subr.bf16.mxu0 0
      %1660 = vmatpush1.bf16.msra.mxu0 0
      %1661 = vmatprep.mubr.bf16.mxu0 0
      %1662 = vmatmul.mubr.bf16.gmra.mrb[0].mxu0 %v1597
      %v1663 = vpop.f32.mrb[0].mxu0
      %v1664 = vadd.f32 0.0, %v1663
      %v1665 = vpop.f32.mrb[0].mxu0
      %v1666 = vpop.f32.mrb[0].mxu0
      %v1667 = vadd.f32 0.0, %v1666
      %v1668 = vpop.f32.mrb[0].mxu0
      %1669 = vmatprep.mubr.bf16.mxu0 0
      %1670 = vmatmul.mubr.bf16.gmra.mrb[0].mxu0 %v1600
      %v1671 = vpop.f32.mrb[0].mxu0
      %v1672 = vadd.f32 0.0, %v1671
      %v1673 = vpop.f32.mrb[0].mxu0
      %v1674 = vpop.f32.mrb[0].mxu0
      %v1675 = vadd.f32 0.0, %v1674
      %v1676 = vpop.f32.mrb[0].mxu0
      %1677 = vmatprep.mubr.bf16.mxu0 0
      %1678 = vmatmul.mubr.bf16.gmra.mrb[0].mxu0 %v1603
      %v1679 = vpop.f32.mrb[0].mxu0
      %v1680 = vadd.f32 0.0, %v1679
      %v1681 = vpop.f32.mrb[0].mxu0
      %v1682 = vpop.f32.mrb[0].mxu0
      %v1683 = vadd.f32 0.0, %v1682
      %v1684 = vpop.f32.mrb[0].mxu0
      %1685 = vmatprep.mubr.bf16.mxu0 0
      %1686 = vmatmul.mubr.bf16.gmra.mrb[0].mxu0 %v1606
      %v1687 = vpop.f32.mrb[0].mxu0
      %v1688 = vadd.f32 0.0, %v1687
      %v1689 = vpop.f32.mrb[0].mxu0
      %v1690 = vpop.f32.mrb[0].mxu0
      %v1691 = vadd.f32 0.0, %v1690
      %v1692 = vpop.f32.mrb[0].mxu0
      %1693 = vmatprep.mubr.bf16.mxu0 0
      %1694 = vmatmul.mubr.bf16.gmra.mrb[0].mxu0 %v1609
      %v1695 = vpop.f32.mrb[0].mxu0
      %v1696 = vadd.f32 0.0, %v1695
      %v1697 = vpop.f32.mrb[0].mxu0
      %v1698 = vpop.f32.mrb[0].mxu0
      %v1699 = vadd.f32 0.0, %v1698
      %v1700 = vpop.f32.mrb[0].mxu0
      %1701 = vmatprep.mubr.bf16.mxu0 0
      %1702 = vmatmul.mubr.bf16.gmra.mrb[0].mxu0 %v1612
      %v1703 = vpop.f32.mrb[0].mxu0
      %v1704 = vadd.f32 0.0, %v1703
      %v1705 = vpop.f32.mrb[0].mxu0
      %v1706 = vpop.f32.mrb[0].mxu0
      %v1707 = vadd.f32 0.0, %v1706
      %v1708 = vpop.f32.mrb[0].mxu0
      %1709 = vmatprep.mubr.bf16.mxu0 0
      %1710 = vmatmul.mubr.bf16.gmra.mrb[0].mxu0 %v1615
      %v1711 = vpop.f32.mrb[0].mxu0
      %v1712 = vadd.f32 0.0, %v1711
      %v1713 = vpop.f32.mrb[0].mxu0
      %v1714 = vpop.f32.mrb[0].mxu0
      %v1715 = vadd.f32 0.0, %v1714
      %v1716 = vpop.f32.mrb[0].mxu0
      %1717 = vmatprep.mubr.bf16.mxu0 0
      %1718 = vmatmul.mubr.bf16.gmra.mrb[0].mxu0 %v1618
      %v1719 = vpop.f32.mrb[0].mxu0
      %v1720 = vadd.f32 0.0, %v1719
      %v1721 = vpop.f32.mrb[0].mxu0
      %v1722 = vpop.f32.mrb[0].mxu0
      %v1723 = vadd.f32 0.0, %v1722
      %v1724 = vpop.f32.mrb[0].mxu0
      %1725 = vmatprep.mubr.bf16.mxu0 0
      %1726 = vmatmul.mubr.bf16.gmra.mrb[0].mxu0 %v1621
      %v1727 = vpop.f32.mrb[0].mxu0
      %v1728 = vadd.f32 0.0, %v1727
      %v1729 = vpop.f32.mrb[0].mxu0
      %v1730 = vpop.f32.mrb[0].mxu0
      %v1731 = vadd.f32 0.0, %v1730
      %v1732 = vpop.f32.mrb[0].mxu0
      %1733 = vmatprep.mubr.bf16.mxu0 0
      %1734 = vmatmul.mubr.bf16.gmra.mrb[0].mxu0 %v1624
      %v1735 = vpop.f32.mrb[0].mxu0
      %v1736 = vadd.f32 0.0, %v1735
      %v1737 = vpop.f32.mrb[0].mxu0
      %v1738 = vpop.f32.mrb[0].mxu0
      %v1739 = vadd.f32 0.0, %v1738
      %v1740 = vpop.f32.mrb[0].mxu0
      %1741 = vdwg.mxu0
      %v1742 = vadd.f32 %v1384, %v1664
      %v1743 = vadd.f32 %v1387, %v1667
      %v1744 = vadd.f32 %v1392, %v1672
      %v1745 = vadd.f32 %v1395, %v1675
      %v1746 = vadd.f32 %v1400, %v1680
      %v1747 = vadd.f32 %v1403, %v1683
      %v1748 = vadd.f32 %v1408, %v1688
      %v1749 = vadd.f32 %v1411, %v1691
      %v1750 = vadd.f32 %v1416, %v1696
      %v1751 = vadd.f32 %v1419, %v1699
      %v1752 = vadd.f32 %v1424, %v1704
      %v1753 = vadd.f32 %v1427, %v1707
      %v1754 = vadd.f32 %v1432, %v1712
      %v1755 = vadd.f32 %v1435, %v1715
      %v1756 = vadd.f32 %v1440, %v1720
      %v1757 = vadd.f32 %v1443, %v1723
      %v1758 = vadd.f32 %v1448, %v1728
      %v1759 = vadd.f32 %v1451, %v1731
      %v1760 = vadd.f32 %v1456, %v1736
      %v1761 = vadd.f32 %v1459, %v1739
      %s1762 = scalar_lea.vmem [#allocation2], 12
      %v1763 = vld [vmem:[%s1762] sm:$0xf]
      %v1764 = vld [vmem:[%s1762 + $0x4] sm:$0xf]
      %v1765 = vld [vmem:[%s1762 + $0xc] sm:$0xf]
      %v1766 = vld [vmem:[%s1762 + $0x10] sm:$0xf]
      %v1767 = vld [vmem:[%s1762 + $0x18] sm:$0xf]
      %v1768 = vld [vmem:[%s1762 + $0x1c] sm:$0xf]
      %v1769 = vld [vmem:[%s1762 + $0x24] sm:$0xf]
      %v1770 = vld [vmem:[%s1762 + $0x28] sm:$0xf]
      %v1771 = vld [vmem:[%s1762 + $0x30] sm:$0xf]
      %v1772 = vld [vmem:[%s1762 + $0x34] sm:$0xf]
      %v1773 = vld [vmem:[%s1762 + $0x3c] sm:$0xf]
      %v1774 = vld [vmem:[%s1762 + $0x40] sm:$0xf]
      %v1775 = vld [vmem:[%s1762 + $0x48] sm:$0xf]
      %v1776 = vld [vmem:[%s1762 + $0x4c] sm:$0xf]
      %v1777 = vld [vmem:[%s1762 + $0x54] sm:$0xf]
      %v1778 = vld [vmem:[%s1762 + $0x58] sm:$0xf]
      %v1779 = vld [vmem:[%s1762 + $0x60] sm:$0xf]
      %v1780 = vld [vmem:[%s1762 + $0x64] sm:$0xf]
      %v1781 = vld [vmem:[%s1762 + $0x6c] sm:$0xf]
      %v1782 = vld [vmem:[%s1762 + $0x70] sm:$0xf]
      %v1783 = vld [vmem:[%s1 + $0x4] sm:$0xc]
      %v1804 = vunpack.c.l.b16 %v1763
      %v1805 = vunpack.c.l.b16 %v1764
      %v1806 = vunpack.c.l.b16 %v1765
      %v1807 = vunpack.c.l.b16 %v1766
      %v1808 = vunpack.c.l.b16 %v1767
      %v1809 = vunpack.c.l.b16 %v1768
      %v1810 = vunpack.c.l.b16 %v1769
      %v1811 = vunpack.c.l.b16 %v1770
      %v1812 = vunpack.c.l.b16 %v1771
      %v1813 = vunpack.c.l.b16 %v1772
      %v1814 = vunpack.c.l.b16 %v1773
      %v1815 = vunpack.c.l.b16 %v1774
      %v1816 = vunpack.c.l.b16 %v1775
      %v1817 = vunpack.c.l.b16 %v1776
      %v1818 = vunpack.c.l.b16 %v1777
      %v1819 = vunpack.c.l.b16 %v1778
      %v1820 = vunpack.c.l.b16 %v1779
      %v1821 = vunpack.c.l.b16 %v1780
      %v1822 = vunpack.c.l.b16 %v1781
      %v1823 = vunpack.c.l.b16 %v1782
      %v1824 = vpack.c.b16 %v1805, %v1804
      %v1825 = vpack.c.b16 %v1807, %v1806
      %v1826 = vpack.c.b16 %v1809, %v1808
      %v1827 = vpack.c.b16 %v1811, %v1810
      %v1828 = vpack.c.b16 %v1813, %v1812
      %v1829 = vpack.c.b16 %v1815, %v1814
      %v1830 = vpack.c.b16 %v1817, %v1816
      %v1831 = vpack.c.b16 %v1819, %v1818
      %v1832 = vpack.c.b16 %v1821, %v1820
      %v1833 = vpack.c.b16 %v1823, %v1822
      %v1835 = vunpack.c.l.b16 %v1783
      %v1836 = vpack.c.b16 %v1835, %v1835
      %v1837 = vrot.slane %v1836, 2
      %v1839 = vsel %vm1118, %v1824, 0
      %v1842 = vsel %vm1118, %v1825, 0
      %v1845 = vsel %vm1118, %v1826, 0
      %v1848 = vsel %vm1118, %v1827, 0
      %v1851 = vsel %vm1118, %v1828, 0
      %v1854 = vsel %vm1118, %v1829, 0
      %v1857 = vsel %vm1118, %v1830, 0
      %v1860 = vsel %vm1118, %v1831, 0
      %v1863 = vsel %vm1118, %v1832, 0
      %v1866 = vsel %vm1118, %v1833, 0
      %v1869 = vsel %vm1149, %v1837, 0
      %1871 = vmatprep.subr.bf16.mxu0 0
      %1872 = vmatpush1.bf16.msra.mxu0 %v1869
      %1873 = vmatprep.subr.bf16.mxu0 0
      %1874 = vmatpush1.bf16.msra.mxu0 0
      %1875 = vmatprep.subr.bf16.mxu0 0
      %1876 = vmatpush1.bf16.msra.mxu0 0
      %1877 = vmatprep.subr.bf16.mxu0 0
      %1878 = vmatpush1.bf16.msra.mxu0 0
      %1879 = vmatprep.subr.bf16.mxu0 0
      %1880 = vmatpush1.bf16.msra.mxu0 0
      %1881 = vmatprep.subr.bf16.mxu0 0
      %1882 = vmatpush1.bf16.msra.mxu0 0
      %1883 = vmatprep.subr.bf16.mxu0 0
      %1884 = vmatpush1.bf16.msra.mxu0 0
      %1885 = vmatprep.subr.bf16.mxu0 0
      %1886 = vmatpush1.bf16.msra.mxu0 0
      %1887 = vmatprep.subr.bf16.mxu0 0
      %1888 = vmatpush1.bf16.msra.mxu0 0
      %1889 = vmatprep.subr.bf16.mxu0 0
      %1890 = vmatpush1.bf16.msra.mxu0 0
      %1891 = vmatprep.subr.bf16.mxu0 0
      %1892 = vmatpush1.bf16.msra.mxu0 0
      %1893 = vmatprep.subr.bf16.mxu0 0
      %1894 = vmatpush1.bf16.msra.mxu0 0
      %1895 = vmatprep.subr.bf16.mxu0 0
      %1896 = vmatpush1.bf16.msra.mxu0 0
      %1897 = vmatprep.subr.bf16.mxu0 0
      %1898 = vmatpush1.bf16.msra.mxu0 0
      %1899 = vmatprep.subr.bf16.mxu0 0
      %1900 = vmatpush1.bf16.msra.mxu0 0
      %1901 = vmatprep.subr.bf16.mxu0 0
      %1902 = vmatpush1.bf16.msra.mxu0 0
      %1903 = vmatprep.mubr.bf16.mxu0 0
      %1904 = vmatmul.mubr.bf16.gmra.mrb[0].mxu0 %v1839
      %v1905 = vpop.f32.mrb[0].mxu0
      %v1906 = vadd.f32 0.0, %v1905
      %v1907 = vpop.f32.mrb[0].mxu0
      %v1908 = vpop.f32.mrb[0].mxu0
      %v1909 = vadd.f32 0.0, %v1908
      %v1910 = vpop.f32.mrb[0].mxu0
      %1911 = vmatprep.mubr.bf16.mxu0 0
      %1912 = vmatmul.mubr.bf16.gmra.mrb[0].mxu0 %v1842
      %v1913 = vpop.f32.mrb[0].mxu0
      %v1914 = vadd.f32 0.0, %v1913
      %v1915 = vpop.f32.mrb[0].mxu0
      %v1916 = vpop.f32.mrb[0].mxu0
      %v1917 = vadd.f32 0.0, %v1916
      %v1918 = vpop.f32.mrb[0].mxu0
      %1919 = vmatprep.mubr.bf16.mxu0 0
      %1920 = vmatmul.mubr.bf16.gmra.mrb[0].mxu0 %v1845
      %v1921 = vpop.f32.mrb[0].mxu0
      %v1922 = vadd.f32 0.0, %v1921
      %v1923 = vpop.f32.mrb[0].mxu0
      %v1924 = vpop.f32.mrb[0].mxu0
      %v1925 = vadd.f32 0.0, %v1924
      %v1926 = vpop.f32.mrb[0].mxu0
      %1927 = vmatprep.mubr.bf16.mxu0 0
      %1928 = vmatmul.mubr.bf16.gmra.mrb[0].mxu0 %v1848
      %v1929 = vpop.f32.mrb[0].mxu0
      %v1930 = vadd.f32 0.0, %v1929
      %v1931 = vpop.f32.mrb[0].mxu0
      %v1932 = vpop.f32.mrb[0].mxu0
      %v1933 = vadd.f32 0.0, %v1932
      %v1934 = vpop.f32.mrb[0].mxu0
      %1935 = vmatprep.mubr.bf16.mxu0 0
      %1936 = vmatmul.mubr.bf16.gmra.mrb[0].mxu0 %v1851
      %v1937 = vpop.f32.mrb[0].mxu0
      %v1938 = vadd.f32 0.0, %v1937
      %v1939 = vpop.f32.mrb[0].mxu0
      %v1940 = vpop.f32.mrb[0].mxu0
      %v1941 = vadd.f32 0.0, %v1940
      %v1942 = vpop.f32.mrb[0].mxu0
      %1943 = vmatprep.mubr.bf16.mxu0 0
      %1944 = vmatmul.mubr.bf16.gmra.mrb[0].mxu0 %v1854
      %v1945 = vpop.f32.mrb[0].mxu0
      %v1946 = vadd.f32 0.0, %v1945
      %v1947 = vpop.f32.mrb[0].mxu0
      %v1948 = vpop.f32.mrb[0].mxu0
      %v1949 = vadd.f32 0.0, %v1948
      %v1950 = vpop.f32.mrb[0].mxu0
      %1951 = vmatprep.mubr.bf16.mxu0 0
      %1952 = vmatmul.mubr.bf16.gmra.mrb[0].mxu0 %v1857
      %v1953 = vpop.f32.mrb[0].mxu0
      %v1954 = vadd.f32 0.0, %v1953
      %v1955 = vpop.f32.mrb[0].mxu0
      %v1956 = vpop.f32.mrb[0].mxu0
      %v1957 = vadd.f32 0.0, %v1956
      %v1958 = vpop.f32.mrb[0].mxu0
      %1959 = vmatprep.mubr.bf16.mxu0 0
      %1960 = vmatmul.mubr.bf16.gmra.mrb[0].mxu0 %v1860
      %v1961 = vpop.f32.mrb[0].mxu0
      %v1962 = vadd.f32 0.0, %v1961
      %v1963 = vpop.f32.mrb[0].mxu0
      %v1964 = vpop.f32.mrb[0].mxu0
      %v1965 = vadd.f32 0.0, %v1964
      %v1966 = vpop.f32.mrb[0].mxu0
      %1967 = vmatprep.mubr.bf16.mxu0 0
      %1968 = vmatmul.mubr.bf16.gmra.mrb[0].mxu0 %v1863
      %v1969 = vpop.f32.mrb[0].mxu0
      %v1970 = vadd.f32 0.0, %v1969
      %v1971 = vpop.f32.mrb[0].mxu0
      %v1972 = vpop.f32.mrb[0].mxu0
      %v1973 = vadd.f32 0.0, %v1972
      %v1974 = vpop.f32.mrb[0].mxu0
      %1975 = vmatprep.mubr.bf16.mxu0 0
      %1976 = vmatmul.mubr.bf16.gmra.mrb[0].mxu0 %v1866
      %v1977 = vpop.f32.mrb[0].mxu0
      %v1978 = vadd.f32 0.0, %v1977
      %v1979 = vpop.f32.mrb[0].mxu0
      %v1980 = vpop.f32.mrb[0].mxu0
      %v1981 = vadd.f32 0.0, %v1980
      %v1982 = vpop.f32.mrb[0].mxu0
      %1983 = vdwg.mxu0
      %v1984 = vadd.f32 %v1742, %v1906
      %v1985 = vadd.f32 %v1743, %v1909
      %v1986 = vadd.f32 %v1744, %v1914
      %v1987 = vadd.f32 %v1745, %v1917
      %v1988 = vadd.f32 %v1746, %v1922
      %v1989 = vadd.f32 %v1747, %v1925
      %v1990 = vadd.f32 %v1748, %v1930
      %v1991 = vadd.f32 %v1749, %v1933
      %v1992 = vadd.f32 %v1750, %v1938
      %v1993 = vadd.f32 %v1751, %v1941
      %v1994 = vadd.f32 %v1752, %v1946
      %v1995 = vadd.f32 %v1753, %v1949
      %v1996 = vadd.f32 %v1754, %v1954
      %v1997 = vadd.f32 %v1755, %v1957
      %v1998 = vadd.f32 %v1756, %v1962
      %v1999 = vadd.f32 %v1757, %v1965
      %v2000 = vadd.f32 %v1758, %v1970
      %v2001 = vadd.f32 %v1759, %v1973
      %v2002 = vadd.f32 %v1760, %v1978
      %v2003 = vadd.f32 %v1761, %v1981
      %v2004 = vld [vmem:[%s1762] sm:$0xf]
      %v2005 = vld [vmem:[%s1762 + $0x4] sm:$0xf]
      %v2006 = vld [vmem:[%s1762 + $0x8] sm:$0x1]
      %v2007 = vld [vmem:[%s1762 + $0xc] sm:$0xf]
      %v2008 = vld [vmem:[%s1762 + $0x10] sm:$0xf]
      %v2009 = vld [vmem:[%s1762 + $0x14] sm:$0x1]
      %v2010 = vld [vmem:[%s1762 + $0x18] sm:$0xf]
      %v2011 = vld [vmem:[%s1762 + $0x1c] sm:$0xf]
      %v2012 = vld [vmem:[%s1762 + $0x20] sm:$0x1]
      %v2013 = vld [vmem:[%s1762 + $0x24] sm:$0xf]
      %v2014 = vld [vmem:[%s1762 + $0x28] sm:$0xf]
      %v2015 = vld [vmem:[%s1762 + $0x2c] sm:$0x1]
      %v2016 = vld [vmem:[%s1762 + $0x30] sm:$0xf]
      %v2017 = vld [vmem:[%s1762 + $0x34] sm:$0xf]
      %v2018 = vld [vmem:[%s1762 + $0x38] sm:$0x1]
      %v2019 = vld [vmem:[%s1762 + $0x3c] sm:$0xf]
      %v2020 = vld [vmem:[%s1762 + $0x40] sm:$0xf]
      %v2021 = vld [vmem:[%s1762 + $0x44] sm:$0x1]
      %v2022 = vld [vmem:[%s1762 + $0x48] sm:$0xf]
      %v2023 = vld [vmem:[%s1762 + $0x4c] sm:$0xf]
      %v2024 = vld [vmem:[%s1762 + $0x50] sm:$0x1]
      %v2025 = vld [vmem:[%s1762 + $0x54] sm:$0xf]
      %v2026 = vld [vmem:[%s1762 + $0x58] sm:$0xf]
      %v2027 = vld [vmem:[%s1762 + $0x5c] sm:$0x1]
      %v2028 = vld [vmem:[%s1762 + $0x60] sm:$0xf]
      %v2029 = vld [vmem:[%s1762 + $0x64] sm:$0xf]
      %v2030 = vld [vmem:[%s1762 + $0x68] sm:$0x1]
      %v2031 = vld [vmem:[%s1762 + $0x6c] sm:$0xf]
      %v2032 = vld [vmem:[%s1762 + $0x70] sm:$0xf]
      %v2033 = vld [vmem:[%s1762 + $0x74] sm:$0x1]
      %v2035 = vshrl.u32 %v2004, 16
      %v2037 = vrot.slane %v2035, 4
      %v2038 = vshll.u32 %v2004, 16
      %v2040 = vrot.slane %v2038, 5
      %v2041 = vor.u32 %v2037, %v2040
      %v2042 = vrot.slane %v2041, 4
      %v2044 = vshll.u32 %v2005, 16
      %v2046 = vrot.slane %v2044, 5
      %v2047 = vsel %vm842, %v2042, %v2046
      %v2048 = vshrl.u32 %v2005, 16
      %v2050 = vrot.slane %v2048, 4
      %v2051 = vor.u32 %v2050, %v2046
      %v2052 = vrot.slane %v2051, 4
      %v2054 = vshll.u32 %v2006, 16
      %v2056 = vrot.slane %v2054, 5
      %v2057 = vsel %vm842, %v2052, %v2056
      %v2059 = vshrl.u32 %v2007, 16
      %v2061 = vrot.slane %v2059, 4
      %v2062 = vshll.u32 %v2007, 16
      %v2064 = vrot.slane %v2062, 5
      %v2065 = vor.u32 %v2061, %v2064
      %v2066 = vrot.slane %v2065, 4
      %v2068 = vshll.u32 %v2008, 16
      %v2070 = vrot.slane %v2068, 5
      %v2071 = vsel %vm842, %v2066, %v2070
      %v2072 = vshrl.u32 %v2008, 16
      %v2074 = vrot.slane %v2072, 4
      %v2075 = vor.u32 %v2074, %v2070
      %v2076 = vrot.slane %v2075, 4
      %v2078 = vshll.u32 %v2009, 16
      %v2080 = vrot.slane %v2078, 5
      %v2081 = vsel %vm842, %v2076, %v2080
      %v2083 = vshrl.u32 %v2010, 16
      %v2085 = vrot.slane %v2083, 4
      %v2086 = vshll.u32 %v2010, 16
      %v2088 = vrot.slane %v2086, 5
      %v2089 = vor.u32 %v2085, %v2088
      %v2090 = vrot.slane %v2089, 4
      %v2092 = vshll.u32 %v2011, 16
      %v2094 = vrot.slane %v2092, 5
      %v2095 = vsel %vm842, %v2090, %v2094
      %v2096 = vshrl.u32 %v2011, 16
      %v2098 = vrot.slane %v2096, 4
      %v2099 = vor.u32 %v2098, %v2094
      %v2100 = vrot.slane %v2099, 4
      %v2102 = vshll.u32 %v2012, 16
      %v2104 = vrot.slane %v2102, 5
      %v2105 = vsel %vm842, %v2100, %v2104
      %v2107 = vshrl.u32 %v2013, 16
      %v2109 = vrot.slane %v2107, 4
      %v2110 = vshll.u32 %v2013, 16
      %v2112 = vrot.slane %v2110, 5
      %v2113 = vor.u32 %v2109, %v2112
      %v2114 = vrot.slane %v2113, 4
      %v2116 = vshll.u32 %v2014, 16
      %v2118 = vrot.slane %v2116, 5
      %v2119 = vsel %vm842, %v2114, %v2118
      %v2120 = vshrl.u32 %v2014, 16
      %v2122 = vrot.slane %v2120, 4
      %v2123 = vor.u32 %v2122, %v2118
      %v2124 = vrot.slane %v2123, 4
      %v2126 = vshll.u32 %v2015, 16
      %v2128 = vrot.slane %v2126, 5
      %v2129 = vsel %vm842, %v2124, %v2128
      %v2131 = vshrl.u32 %v2016, 16
      %v2133 = vrot.slane %v2131, 4
      %v2134 = vshll.u32 %v2016, 16
      %v2136 = vrot.slane %v2134, 5
      %v2137 = vor.u32 %v2133, %v2136
      %v2138 = vrot.slane %v2137, 4
      %v2140 = vshll.u32 %v2017, 16
      %v2142 = vrot.slane %v2140, 5
      %v2143 = vsel %vm842, %v2138, %v2142
      %v2144 = vshrl.u32 %v2017, 16
      %v2146 = vrot.slane %v2144, 4
      %v2147 = vor.u32 %v2146, %v2142
      %v2148 = vrot.slane %v2147, 4
      %v2150 = vshll.u32 %v2018, 16
      %v2152 = vrot.slane %v2150, 5
      %v2153 = vsel %vm842, %v2148, %v2152
      %v2155 = vshrl.u32 %v2019, 16
      %v2157 = vrot.slane %v2155, 4
      %v2158 = vshll.u32 %v2019, 16
      %v2160 = vrot.slane %v2158, 5
      %v2161 = vor.u32 %v2157, %v2160
      %v2162 = vrot.slane %v2161, 4
      %v2164 = vshll.u32 %v2020, 16
      %v2166 = vrot.slane %v2164, 5
      %v2167 = vsel %vm842, %v2162, %v2166
      %v2168 = vshrl.u32 %v2020, 16
      %v2170 = vrot.slane %v2168, 4
      %v2171 = vor.u32 %v2170, %v2166
      %v2172 = vrot.slane %v2171, 4
      %v2174 = vshll.u32 %v2021, 16
      %v2176 = vrot.slane %v2174, 5
      %v2177 = vsel %vm842, %v2172, %v2176
      %v2179 = vshrl.u32 %v2022, 16
      %v2181 = vrot.slane %v2179, 4
      %v2182 = vshll.u32 %v2022, 16
      %v2184 = vrot.slane %v2182, 5
      %v2185 = vor.u32 %v2181, %v2184
      %v2186 = vrot.slane %v2185, 4
      %v2188 = vshll.u32 %v2023, 16
      %v2190 = vrot.slane %v2188, 5
      %v2191 = vsel %vm842, %v2186, %v2190
      %v2192 = vshrl.u32 %v2023, 16
      %v2194 = vrot.slane %v2192, 4
      %v2195 = vor.u32 %v2194, %v2190
      %v2196 = vrot.slane %v2195, 4
      %v2198 = vshll.u32 %v2024, 16
      %v2200 = vrot.slane %v2198, 5
      %v2201 = vsel %vm842, %v2196, %v2200
      %v2203 = vshrl.u32 %v2025, 16
      %v2205 = vrot.slane %v2203, 4
      %v2206 = vshll.u32 %v2025, 16
      %v2208 = vrot.slane %v2206, 5
      %v2209 = vor.u32 %v2205, %v2208
      %v2210 = vrot.slane %v2209, 4
      %v2212 = vshll.u32 %v2026, 16
      %v2214 = vrot.slane %v2212, 5
      %v2215 = vsel %vm842, %v2210, %v2214
      %v2216 = vshrl.u32 %v2026, 16
      %v2218 = vrot.slane %v2216, 4
      %v2219 = vor.u32 %v2218, %v2214
      %v2220 = vrot.slane %v2219, 4
      %v2222 = vshll.u32 %v2027, 16
      %v2224 = vrot.slane %v2222, 5
      %v2225 = vsel %vm842, %v2220, %v2224
      %v2227 = vshrl.u32 %v2028, 16
      %v2229 = vrot.slane %v2227, 4
      %v2230 = vshll.u32 %v2028, 16
      %v2232 = vrot.slane %v2230, 5
      %v2233 = vor.u32 %v2229, %v2232
      %v2234 = vrot.slane %v2233, 4
      %v2236 = vshll.u32 %v2029, 16
      %v2238 = vrot.slane %v2236, 5
      %v2239 = vsel %vm842, %v2234, %v2238
      %v2240 = vshrl.u32 %v2029, 16
      %v2242 = vrot.slane %v2240, 4
      %v2243 = vor.u32 %v2242, %v2238
      %v2244 = vrot.slane %v2243, 4
      %v2246 = vshll.u32 %v2030, 16
      %v2248 = vrot.slane %v2246, 5
      %v2249 = vsel %vm842, %v2244, %v2248
      %v2251 = vshrl.u32 %v2031, 16
      %v2253 = vrot.slane %v2251, 4
      %v2254 = vshll.u32 %v2031, 16
      %v2256 = vrot.slane %v2254, 5
      %v2257 = vor.u32 %v2253, %v2256
      %v2258 = vrot.slane %v2257, 4
      %v2260 = vshll.u32 %v2032, 16
      %v2262 = vrot.slane %v2260, 5
      %v2263 = vsel %vm842, %v2258, %v2262
      %v2264 = vshrl.u32 %v2032, 16
      %v2266 = vrot.slane %v2264, 4
      %v2267 = vor.u32 %v2266, %v2262
      %v2268 = vrot.slane %v2267, 4
      %v2270 = vshll.u32 %v2033, 16
      %v2272 = vrot.slane %v2270, 5
      %v2273 = vsel %vm842, %v2268, %v2272
      %v2274 = vld [vmem:[%s1 + $0x8] sm:$0x3]
      %v2275 = vunpack.c.l.b16 %v2047
      %v2276 = vunpack.c.l.b16 %v2057
      %v2277 = vunpack.c.l.b16 %v2071
      %v2278 = vunpack.c.l.b16 %v2081
      %v2279 = vunpack.c.l.b16 %v2095
      %v2280 = vunpack.c.l.b16 %v2105
      %v2281 = vunpack.c.l.b16 %v2119
      %v2282 = vunpack.c.l.b16 %v2129
      %v2283 = vunpack.c.l.b16 %v2143
      %v2284 = vunpack.c.l.b16 %v2153
      %v2285 = vunpack.c.l.b16 %v2167
      %v2286 = vunpack.c.l.b16 %v2177
      %v2287 = vunpack.c.l.b16 %v2191
      %v2288 = vunpack.c.l.b16 %v2201
      %v2289 = vunpack.c.l.b16 %v2215
      %v2290 = vunpack.c.l.b16 %v2225
      %v2291 = vunpack.c.l.b16 %v2239
      %v2292 = vunpack.c.l.b16 %v2249
      %v2293 = vunpack.c.l.b16 %v2263
      %v2294 = vunpack.c.l.b16 %v2273
      %v2295 = vpack.c.b16 %v2276, %v2275
      %v2296 = vpack.c.b16 %v2278, %v2277
      %v2297 = vpack.c.b16 %v2280, %v2279
      %v2298 = vpack.c.b16 %v2282, %v2281
      %v2299 = vpack.c.b16 %v2284, %v2283
      %v2300 = vpack.c.b16 %v2286, %v2285
      %v2301 = vpack.c.b16 %v2288, %v2287
      %v2302 = vpack.c.b16 %v2290, %v2289
      %v2303 = vpack.c.b16 %v2292, %v2291
      %v2304 = vpack.c.b16 %v2294, %v2293
      %v2306 = vsel %vm1118, %v2295, 0
      %v2309 = vsel %vm1118, %v2296, 0
      %v2312 = vsel %vm1118, %v2297, 0
      %v2315 = vsel %vm1118, %v2298, 0
      %v2318 = vsel %vm1118, %v2299, 0
      %v2321 = vsel %vm1118, %v2300, 0
      %v2324 = vsel %vm1118, %v2301, 0
      %v2327 = vsel %vm1118, %v2302, 0
      %v2330 = vsel %vm1118, %v2303, 0
      %v2333 = vsel %vm1118, %v2304, 0
      %v2336 = vsel %vm1149, %v2274, 0
      %2338 = vmatprep.subr.bf16.mxu0 0
      %2339 = vmatpush1.bf16.msra.mxu0 %v2336
      %2340 = vmatprep.subr.bf16.mxu0 0
      %2341 = vmatpush1.bf16.msra.mxu0 0
      %2342 = vmatprep.subr.bf16.mxu0 0
      %2343 = vmatpush1.bf16.msra.mxu0 0
      %2344 = vmatprep.subr.bf16.mxu0 0
      %2345 = vmatpush1.bf16.msra.mxu0 0
      %2346 = vmatprep.subr.bf16.mxu0 0
      %2347 = vmatpush1.bf16.msra.mxu0 0
      %2348 = vmatprep.subr.bf16.mxu0 0
      %2349 = vmatpush1.bf16.msra.mxu0 0
      %2350 = vmatprep.subr.bf16.mxu0 0
      %2351 = vmatpush1.bf16.msra.mxu0 0
      %2352 = vmatprep.subr.bf16.mxu0 0
      %2353 = vmatpush1.bf16.msra.mxu0 0
      %2354 = vmatprep.subr.bf16.mxu0 0
      %2355 = vmatpush1.bf16.msra.mxu0 0
      %2356 = vmatprep.subr.bf16.mxu0 0
      %2357 = vmatpush1.bf16.msra.mxu0 0
      %2358 = vmatprep.subr.bf16.mxu0 0
      %2359 = vmatpush1.bf16.msra.mxu0 0
      %2360 = vmatprep.subr.bf16.mxu0 0
      %2361 = vmatpush1.bf16.msra.mxu0 0
      %2362 = vmatprep.subr.bf16.mxu0 0
      %2363 = vmatpush1.bf16.msra.mxu0 0
      %2364 = vmatprep.subr.bf16.mxu0 0
      %2365 = vmatpush1.bf16.msra.mxu0 0
      %2366 = vmatprep.subr.bf16.mxu0 0
      %2367 = vmatpush1.bf16.msra.mxu0 0
      %2368 = vmatprep.subr.bf16.mxu0 0
      %2369 = vmatpush1.bf16.msra.mxu0 0
      %2370 = vmatprep.mubr.bf16.mxu0 0
      %2371 = vmatmul.mubr.bf16.gmra.mrb[0].mxu0 %v2306
      %v2372 = vpop.f32.mrb[0].mxu0
      %v2373 = vadd.f32 0.0, %v2372
      %v2374 = vpop.f32.mrb[0].mxu0
      %v2375 = vpop.f32.mrb[0].mxu0
      %v2376 = vadd.f32 0.0, %v2375
      %v2377 = vpop.f32.mrb[0].mxu0
      %2378 = vmatprep.mubr.bf16.mxu0 0
      %2379 = vmatmul.mubr.bf16.gmra.mrb[0].mxu0 %v2309
      %v2380 = vpop.f32.mrb[0].mxu0
      %v2381 = vadd.f32 0.0, %v2380
      %v2382 = vpop.f32.mrb[0].mxu0
      %v2383 = vpop.f32.mrb[0].mxu0
      %v2384 = vadd.f32 0.0, %v2383
      %v2385 = vpop.f32.mrb[0].mxu0
      %2386 = vmatprep.mubr.bf16.mxu0 0
      %2387 = vmatmul.mubr.bf16.gmra.mrb[0].mxu0 %v2312
      %v2388 = vpop.f32.mrb[0].mxu0
      %v2389 = vadd.f32 0.0, %v2388
      %v2390 = vpop.f32.mrb[0].mxu0
      %v2391 = vpop.f32.mrb[0].mxu0
      %v2392 = vadd.f32 0.0, %v2391
      %v2393 = vpop.f32.mrb[0].mxu0
      %2394 = vmatprep.mubr.bf16.mxu0 0
      %2395 = vmatmul.mubr.bf16.gmra.mrb[0].mxu0 %v2315
      %v2396 = vpop.f32.mrb[0].mxu0
      %v2397 = vadd.f32 0.0, %v2396
      %v2398 = vpop.f32.mrb[0].mxu0
      %v2399 = vpop.f32.mrb[0].mxu0
      %v2400 = vadd.f32 0.0, %v2399
      %v2401 = vpop.f32.mrb[0].mxu0
      %2402 = vmatprep.mubr.bf16.mxu0 0
      %2403 = vmatmul.mubr.bf16.gmra.mrb[0].mxu0 %v2318
      %v2404 = vpop.f32.mrb[0].mxu0
      %v2405 = vadd.f32 0.0, %v2404
      %v2406 = vpop.f32.mrb[0].mxu0
      %v2407 = vpop.f32.mrb[0].mxu0
      %v2408 = vadd.f32 0.0, %v2407
      %v2409 = vpop.f32.mrb[0].mxu0
      %2410 = vmatprep.mubr.bf16.mxu0 0
      %2411 = vmatmul.mubr.bf16.gmra.mrb[0].mxu0 %v2321
      %v2412 = vpop.f32.mrb[0].mxu0
      %v2413 = vadd.f32 0.0, %v2412
      %v2414 = vpop.f32.mrb[0].mxu0
      %v2415 = vpop.f32.mrb[0].mxu0
      %v2416 = vadd.f32 0.0, %v2415
      %v2417 = vpop.f32.mrb[0].mxu0
      %2418 = vmatprep.mubr.bf16.mxu0 0
      %2419 = vmatmul.mubr.bf16.gmra.mrb[0].mxu0 %v2324
      %v2420 = vpop.f32.mrb[0].mxu0
      %v2421 = vadd.f32 0.0, %v2420
      %v2422 = vpop.f32.mrb[0].mxu0
      %v2423 = vpop.f32.mrb[0].mxu0
      %v2424 = vadd.f32 0.0, %v2423
      %v2425 = vpop.f32.mrb[0].mxu0
      %2426 = vmatprep.mubr.bf16.mxu0 0
      %2427 = vmatmul.mubr.bf16.gmra.mrb[0].mxu0 %v2327
      %v2428 = vpop.f32.mrb[0].mxu0
      %v2429 = vadd.f32 0.0, %v2428
      %v2430 = vpop.f32.mrb[0].mxu0
      %v2431 = vpop.f32.mrb[0].mxu0
      %v2432 = vadd.f32 0.0, %v2431
      %v2433 = vpop.f32.mrb[0].mxu0
      %2434 = vmatprep.mubr.bf16.mxu0 0
      %2435 = vmatmul.mubr.bf16.gmra.mrb[0].mxu0 %v2330
      %v2436 = vpop.f32.mrb[0].mxu0
      %v2437 = vadd.f32 0.0, %v2436
      %v2438 = vpop.f32.mrb[0].mxu0
      %v2439 = vpop.f32.mrb[0].mxu0
      %v2440 = vadd.f32 0.0, %v2439
      %v2441 = vpop.f32.mrb[0].mxu0
      %2442 = vmatprep.mubr.bf16.mxu0 0
      %2443 = vmatmul.mubr.bf16.gmra.mrb[0].mxu0 %v2333
      %v2444 = vpop.f32.mrb[0].mxu0
      %v2445 = vadd.f32 0.0, %v2444
      %v2446 = vpop.f32.mrb[0].mxu0
      %v2447 = vpop.f32.mrb[0].mxu0
      %v2448 = vadd.f32 0.0, %v2447
      %v2449 = vpop.f32.mrb[0].mxu0
      %2450 = vdwg.mxu0
      %v2451 = vadd.f32 %v1984, %v2373
      %v2452 = vadd.f32 %v1985, %v2376
      %v2453 = vadd.f32 %v1986, %v2381
      %v2454 = vadd.f32 %v1987, %v2384
      %v2455 = vadd.f32 %v1988, %v2389
      %v2456 = vadd.f32 %v1989, %v2392
      %v2457 = vadd.f32 %v1990, %v2397
      %v2458 = vadd.f32 %v1991, %v2400
      %v2459 = vadd.f32 %v1992, %v2405
      %v2460 = vadd.f32 %v1993, %v2408
      %v2461 = vadd.f32 %v1994, %v2413
      %v2462 = vadd.f32 %v1995, %v2416
      %v2463 = vadd.f32 %v1996, %v2421
      %v2464 = vadd.f32 %v1997, %v2424
      %v2465 = vadd.f32 %v1998, %v2429
      %v2466 = vadd.f32 %v1999, %v2432
      %v2467 = vadd.f32 %v2000, %v2437
      %v2468 = vadd.f32 %v2001, %v2440
      %v2469 = vadd.f32 %v2002, %v2445
      %v2470 = vadd.f32 %v2003, %v2448
      %v2471 = vld [vmem:[%s1762] sm:$0xe]
      %v2472 = vld [vmem:[%s1762 + $0xc] sm:$0xe]
      %v2473 = vld [vmem:[%s1762 + $0x18] sm:$0xe]
      %v2474 = vld [vmem:[%s1762 + $0x24] sm:$0xe]
      %v2475 = vld [vmem:[%s1762 + $0x30] sm:$0xe]
      %v2476 = vld [vmem:[%s1762 + $0x3c] sm:$0xe]
      %v2477 = vld [vmem:[%s1762 + $0x48] sm:$0xe]
      %v2478 = vld [vmem:[%s1762 + $0x54] sm:$0xe]
      %v2479 = vld [vmem:[%s1762 + $0x60] sm:$0xe]
      %v2480 = vld [vmem:[%s1762 + $0x6c] sm:$0xe]
      %v2511 = vrot.slane %v2471, 5
      %v2512 = vrot.slane %v2511, 4
      %v2513 = vrot.slane %v2005, 5
      %v2514 = vsel %vm1494, %v2512, %v2513
      %v2515 = vrot.slane %v2513, 4
      %v2516 = vrot.slane %v2006, 5
      %v2517 = vsel %vm1494, %v2515, %v2516
      %v2518 = vrot.slane %v2472, 5
      %v2519 = vrot.slane %v2518, 4
      %v2520 = vrot.slane %v2008, 5
      %v2521 = vsel %vm1494, %v2519, %v2520
      %v2522 = vrot.slane %v2520, 4
      %v2523 = vrot.slane %v2009, 5
      %v2524 = vsel %vm1494, %v2522, %v2523
      %v2525 = vrot.slane %v2473, 5
      %v2526 = vrot.slane %v2525, 4
      %v2527 = vrot.slane %v2011, 5
      %v2528 = vsel %vm1494, %v2526, %v2527
      %v2529 = vrot.slane %v2527, 4
      %v2530 = vrot.slane %v2012, 5
      %v2531 = vsel %vm1494, %v2529, %v2530
      %v2532 = vrot.slane %v2474, 5
      %v2533 = vrot.slane %v2532, 4
      %v2534 = vrot.slane %v2014, 5
      %v2535 = vsel %vm1494, %v2533, %v2534
      %v2536 = vrot.slane %v2534, 4
      %v2537 = vrot.slane %v2015, 5
      %v2538 = vsel %vm1494, %v2536, %v2537
      %v2539 = vrot.slane %v2475, 5
      %v2540 = vrot.slane %v2539, 4
      %v2541 = vrot.slane %v2017, 5
      %v2542 = vsel %vm1494, %v2540, %v2541
      %v2543 = vrot.slane %v2541, 4
      %v2544 = vrot.slane %v2018, 5
      %v2545 = vsel %vm1494, %v2543, %v2544
      %v2546 = vrot.slane %v2476, 5
      %v2547 = vrot.slane %v2546, 4
      %v2548 = vrot.slane %v2020, 5
      %v2549 = vsel %vm1494, %v2547, %v2548
      %v2550 = vrot.slane %v2548, 4
      %v2551 = vrot.slane %v2021, 5
      %v2552 = vsel %vm1494, %v2550, %v2551
      %v2553 = vrot.slane %v2477, 5
      %v2554 = vrot.slane %v2553, 4
      %v2555 = vrot.slane %v2023, 5
      %v2556 = vsel %vm1494, %v2554, %v2555
      %v2557 = vrot.slane %v2555, 4
      %v2558 = vrot.slane %v2024, 5
      %v2559 = vsel %vm1494, %v2557, %v2558
      %v2560 = vrot.slane %v2478, 5
      %v2561 = vrot.slane %v2560, 4
      %v2562 = vrot.slane %v2026, 5
      %v2563 = vsel %vm1494, %v2561, %v2562
      %v2564 = vrot.slane %v2562, 4
      %v2565 = vrot.slane %v2027, 5
      %v2566 = vsel %vm1494, %v2564, %v2565
      %v2567 = vrot.slane %v2479, 5
      %v2568 = vrot.slane %v2567, 4
      %v2569 = vrot.slane %v2029, 5
      %v2570 = vsel %vm1494, %v2568, %v2569
      %v2571 = vrot.slane %v2569, 4
      %v2572 = vrot.slane %v2030, 5
      %v2573 = vsel %vm1494, %v2571, %v2572
      %v2574 = vrot.slane %v2480, 5
      %v2575 = vrot.slane %v2574, 4
      %v2576 = vrot.slane %v2032, 5
      %v2577 = vsel %vm1494, %v2575, %v2576
      %v2578 = vrot.slane %v2576, 4
      %v2579 = vrot.slane %v2033, 5
      %v2580 = vsel %vm1494, %v2578, %v2579
      %v2581 = vld [vmem:[%s1 + $0x8] sm:$0xc]
      %v2582 = vunpack.c.l.b16 %v2514
      %v2583 = vunpack.c.l.b16 %v2517
      %v2584 = vunpack.c.l.b16 %v2521
      %v2585 = vunpack.c.l.b16 %v2524
      %v2586 = vunpack.c.l.b16 %v2528
      %v2587 = vunpack.c.l.b16 %v2531
      %v2588 = vunpack.c.l.b16 %v2535
      %v2589 = vunpack.c.l.b16 %v2538
      %v2590 = vunpack.c.l.b16 %v2542
      %v2591 = vunpack.c.l.b16 %v2545
      %v2592 = vunpack.c.l.b16 %v2549
      %v2593 = vunpack.c.l.b16 %v2552
      %v2594 = vunpack.c.l.b16 %v2556
      %v2595 = vunpack.c.l.b16 %v2559
      %v2596 = vunpack.c.l.b16 %v2563
      %v2597 = vunpack.c.l.b16 %v2566
      %v2598 = vunpack.c.l.b16 %v2570
      %v2599 = vunpack.c.l.b16 %v2573
      %v2600 = vunpack.c.l.b16 %v2577
      %v2601 = vunpack.c.l.b16 %v2580
      %v2602 = vpack.c.b16 %v2583, %v2582
      %v2603 = vpack.c.b16 %v2585, %v2584
      %v2604 = vpack.c.b16 %v2587, %v2586
      %v2605 = vpack.c.b16 %v2589, %v2588
      %v2606 = vpack.c.b16 %v2591, %v2590
      %v2607 = vpack.c.b16 %v2593, %v2592
      %v2608 = vpack.c.b16 %v2595, %v2594
      %v2609 = vpack.c.b16 %v2597, %v2596
      %v2610 = vpack.c.b16 %v2599, %v2598
      %v2611 = vpack.c.b16 %v2601, %v2600
      %v2613 = vunpack.c.l.b16 %v2581
      %v2614 = vpack.c.b16 %v2613, %v2613
      %v2615 = vrot.slane %v2614, 2
      %v2617 = vsel %vm1118, %v2602, 0
      %v2620 = vsel %vm1118, %v2603, 0
      %v2623 = vsel %vm1118, %v2604, 0
      %v2626 = vsel %vm1118, %v2605, 0
      %v2629 = vsel %vm1118, %v2606, 0
      %v2632 = vsel %vm1118, %v2607, 0
      %v2635 = vsel %vm1118, %v2608, 0
      %v2638 = vsel %vm1118, %v2609, 0
      %v2641 = vsel %vm1118, %v2610, 0
      %v2644 = vsel %vm1118, %v2611, 0
      %v2647 = vsel %vm1149, %v2615, 0
      %2649 = vmatprep.subr.bf16.mxu0 0
      %2650 = vmatpush1.bf16.msra.mxu0 %v2647
      %2651 = vmatprep.subr.bf16.mxu0 0
      %2652 = vmatpush1.bf16.msra.mxu0 0
      %2653 = vmatprep.subr.bf16.mxu0 0
      %2654 = vmatpush1.bf16.msra.mxu0 0
      %2655 = vmatprep.subr.bf16.mxu0 0
      %2656 = vmatpush1.bf16.msra.mxu0 0
      %2657 = vmatprep.subr.bf16.mxu0 0
      %2658 = vmatpush1.bf16.msra.mxu0 0
      %2659 = vmatprep.subr.bf16.mxu0 0
      %2660 = vmatpush1.bf16.msra.mxu0 0
      %2661 = vmatprep.subr.bf16.mxu0 0
      %2662 = vmatpush1.bf16.msra.mxu0 0
      %2663 = vmatprep.subr.bf16.mxu0 0
      %2664 = vmatpush1.bf16.msra.mxu0 0
      %2665 = vmatprep.subr.bf16.mxu0 0
      %2666 = vmatpush1.bf16.msra.mxu0 0
      %2667 = vmatprep.subr.bf16.mxu0 0
      %2668 = vmatpush1.bf16.msra.mxu0 0
      %2669 = vmatprep.subr.bf16.mxu0 0
      %2670 = vmatpush1.bf16.msra.mxu0 0
      %2671 = vmatprep.subr.bf16.mxu0 0
      %2672 = vmatpush1.bf16.msra.mxu0 0
      %2673 = vmatprep.subr.bf16.mxu0 0
      %2674 = vmatpush1.bf16.msra.mxu0 0
      %2675 = vmatprep.subr.bf16.mxu0 0
      %2676 = vmatpush1.bf16.msra.mxu0 0
      %2677 = vmatprep.subr.bf16.mxu0 0
      %2678 = vmatpush1.bf16.msra.mxu0 0
      %2679 = vmatprep.subr.bf16.mxu0 0
      %2680 = vmatpush1.bf16.msra.mxu0 0
      %2681 = vmatprep.mubr.bf16.mxu0 0
      %2682 = vmatmul.mubr.bf16.gmra.mrb[0].mxu0 %v2617
      %v2683 = vpop.f32.mrb[0].mxu0
      %v2684 = vadd.f32 0.0, %v2683
      %v2685 = vpop.f32.mrb[0].mxu0
      %v2686 = vpop.f32.mrb[0].mxu0
      %v2687 = vadd.f32 0.0, %v2686
      %v2688 = vpop.f32.mrb[0].mxu0
      %2689 = vmatprep.mubr.bf16.mxu0 0
      %2690 = vmatmul.mubr.bf16.gmra.mrb[0].mxu0 %v2620
      %v2691 = vpop.f32.mrb[0].mxu0
      %v2692 = vadd.f32 0.0, %v2691
      %v2693 = vpop.f32.mrb[0].mxu0
      %v2694 = vpop.f32.mrb[0].mxu0
      %v2695 = vadd.f32 0.0, %v2694
      %v2696 = vpop.f32.mrb[0].mxu0
      %2697 = vmatprep.mubr.bf16.mxu0 0
      %2698 = vmatmul.mubr.bf16.gmra.mrb[0].mxu0 %v2623
      %v2699 = vpop.f32.mrb[0].mxu0
      %v2700 = vadd.f32 0.0, %v2699
      %v2701 = vpop.f32.mrb[0].mxu0
      %v2702 = vpop.f32.mrb[0].mxu0
      %v2703 = vadd.f32 0.0, %v2702
      %v2704 = vpop.f32.mrb[0].mxu0
      %2705 = vmatprep.mubr.bf16.mxu0 0
      %2706 = vmatmul.mubr.bf16.gmra.mrb[0].mxu0 %v2626
      %v2707 = vpop.f32.mrb[0].mxu0
      %v2708 = vadd.f32 0.0, %v2707
      %v2709 = vpop.f32.mrb[0].mxu0
      %v2710 = vpop.f32.mrb[0].mxu0
      %v2711 = vadd.f32 0.0, %v2710
      %v2712 = vpop.f32.mrb[0].mxu0
      %2713 = vmatprep.mubr.bf16.mxu0 0
      %2714 = vmatmul.mubr.bf16.gmra.mrb[0].mxu0 %v2629
      %v2715 = vpop.f32.mrb[0].mxu0
      %v2716 = vadd.f32 0.0, %v2715
      %v2717 = vpop.f32.mrb[0].mxu0
      %v2718 = vpop.f32.mrb[0].mxu0
      %v2719 = vadd.f32 0.0, %v2718
      %v2720 = vpop.f32.mrb[0].mxu0
      %2721 = vmatprep.mubr.bf16.mxu0 0
      %2722 = vmatmul.mubr.bf16.gmra.mrb[0].mxu0 %v2632
      %v2723 = vpop.f32.mrb[0].mxu0
      %v2724 = vadd.f32 0.0, %v2723
      %v2725 = vpop.f32.mrb[0].mxu0
      %v2726 = vpop.f32.mrb[0].mxu0
      %v2727 = vadd.f32 0.0, %v2726
      %v2728 = vpop.f32.mrb[0].mxu0
      %2729 = vmatprep.mubr.bf16.mxu0 0
      %2730 = vmatmul.mubr.bf16.gmra.mrb[0].mxu0 %v2635
      %v2731 = vpop.f32.mrb[0].mxu0
      %v2732 = vadd.f32 0.0, %v2731
      %v2733 = vpop.f32.mrb[0].mxu0
      %v2734 = vpop.f32.mrb[0].mxu0
      %v2735 = vadd.f32 0.0, %v2734
      %v2736 = vpop.f32.mrb[0].mxu0
      %2737 = vmatprep.mubr.bf16.mxu0 0
      %2738 = vmatmul.mubr.bf16.gmra.mrb[0].mxu0 %v2638
      %v2739 = vpop.f32.mrb[0].mxu0
      %v2740 = vadd.f32 0.0, %v2739
      %v2741 = vpop.f32.mrb[0].mxu0
      %v2742 = vpop.f32.mrb[0].mxu0
      %v2743 = vadd.f32 0.0, %v2742
      %v2744 = vpop.f32.mrb[0].mxu0
      %2745 = vmatprep.mubr.bf16.mxu0 0
      %2746 = vmatmul.mubr.bf16.gmra.mrb[0].mxu0 %v2641
      %v2747 = vpop.f32.mrb[0].mxu0
      %v2748 = vadd.f32 0.0, %v2747
      %v2749 = vpop.f32.mrb[0].mxu0
      %v2750 = vpop.f32.mrb[0].mxu0
      %v2751 = vadd.f32 0.0, %v2750
      %v2752 = vpop.f32.mrb[0].mxu0
      %2753 = vmatprep.mubr.bf16.mxu0 0
      %2754 = vmatmul.mubr.bf16.gmra.mrb[0].mxu0 %v2644
      %v2755 = vpop.f32.mrb[0].mxu0
      %v2756 = vadd.f32 0.0, %v2755
      %v2757 = vpop.f32.mrb[0].mxu0
      %v2758 = vpop.f32.mrb[0].mxu0
      %v2759 = vadd.f32 0.0, %v2758
      %v2760 = vpop.f32.mrb[0].mxu0
      %2761 = vdwg.mxu0
      %v2762 = vadd.f32 %v2451, %v2684
      %v2763 = vadd.f32 %v2452, %v2687
      %v2764 = vadd.f32 %v2453, %v2692
      %v2765 = vadd.f32 %v2454, %v2695
      %v2766 = vadd.f32 %v2455, %v2700
      %v2767 = vadd.f32 %v2456, %v2703
      %v2768 = vadd.f32 %v2457, %v2708
      %v2769 = vadd.f32 %v2458, %v2711
      %v2770 = vadd.f32 %v2459, %v2716
      %v2771 = vadd.f32 %v2460, %v2719
      %v2772 = vadd.f32 %v2461, %v2724
      %v2773 = vadd.f32 %v2462, %v2727
      %v2774 = vadd.f32 %v2463, %v2732
      %v2775 = vadd.f32 %v2464, %v2735
      %v2776 = vadd.f32 %v2465, %v2740
      %v2777 = vadd.f32 %v2466, %v2743
      %v2778 = vadd.f32 %v2467, %v2748
      %v2779 = vadd.f32 %v2468, %v2751
      %v2780 = vadd.f32 %v2469, %v2756
      %v2781 = vadd.f32 %v2470, %v2759
      %v2782 = vld [vmem:[%s557] sm:$0xf]
      %v2783 = vld [vmem:[%s557 + $0x4] sm:$0xf]
      %v2784 = vld [vmem:[%s557 + $0xc] sm:$0xf]
      %v2785 = vld [vmem:[%s557 + $0x10] sm:$0xf]
      %v2786 = vld [vmem:[%s557 + $0x18] sm:$0xf]
      %v2787 = vld [vmem:[%s557 + $0x1c] sm:$0xf]
      %v2788 = vld [vmem:[%s557 + $0x24] sm:$0xf]
      %v2789 = vld [vmem:[%s557 + $0x28] sm:$0xf]
      %v2790 = vld [vmem:[%s557 + $0x30] sm:$0xf]
      %v2791 = vld [vmem:[%s557 + $0x34] sm:$0xf]
      %v2792 = vld [vmem:[%s557 + $0x3c] sm:$0xf]
      %v2793 = vld [vmem:[%s557 + $0x40] sm:$0xf]
      %v2794 = vld [vmem:[%s557 + $0x48] sm:$0xf]
      %v2795 = vld [vmem:[%s557 + $0x4c] sm:$0xf]
      %v2796 = vld [vmem:[%s557 + $0x54] sm:$0xf]
      %v2797 = vld [vmem:[%s557 + $0x58] sm:$0xf]
      %v2798 = vld [vmem:[%s557 + $0x60] sm:$0xf]
      %v2799 = vld [vmem:[%s557 + $0x64] sm:$0xf]
      %v2800 = vld [vmem:[%s557 + $0x6c] sm:$0xf]
      %v2801 = vld [vmem:[%s557 + $0x70] sm:$0xf]
      %v2802 = vld [vmem:[%s1 + $0xc] sm:$0x3]
      %v2823 = vunpack.c.l.b16 %v2782
      %v2824 = vunpack.c.l.b16 %v2783
      %v2825 = vunpack.c.l.b16 %v2784
      %v2826 = vunpack.c.l.b16 %v2785
      %v2827 = vunpack.c.l.b16 %v2786
      %v2828 = vunpack.c.l.b16 %v2787
      %v2829 = vunpack.c.l.b16 %v2788
      %v2830 = vunpack.c.l.b16 %v2789
      %v2831 = vunpack.c.l.b16 %v2790
      %v2832 = vunpack.c.l.b16 %v2791
      %v2833 = vunpack.c.l.b16 %v2792
      %v2834 = vunpack.c.l.b16 %v2793
      %v2835 = vunpack.c.l.b16 %v2794
      %v2836 = vunpack.c.l.b16 %v2795
      %v2837 = vunpack.c.l.b16 %v2796
      %v2838 = vunpack.c.l.b16 %v2797
      %v2839 = vunpack.c.l.b16 %v2798
      %v2840 = vunpack.c.l.b16 %v2799
      %v2841 = vunpack.c.l.b16 %v2800
      %v2842 = vunpack.c.l.b16 %v2801
      %v2843 = vpack.c.b16 %v2824, %v2823
      %v2844 = vpack.c.b16 %v2826, %v2825
      %v2845 = vpack.c.b16 %v2828, %v2827
      %v2846 = vpack.c.b16 %v2830, %v2829
      %v2847 = vpack.c.b16 %v2832, %v2831
      %v2848 = vpack.c.b16 %v2834, %v2833
      %v2849 = vpack.c.b16 %v2836, %v2835
      %v2850 = vpack.c.b16 %v2838, %v2837
      %v2851 = vpack.c.b16 %v2840, %v2839
      %v2852 = vpack.c.b16 %v2842, %v2841
      %v2854 = vsel %vm1118, %v2843, 0
      %v2857 = vsel %vm1118, %v2844, 0
      %v2860 = vsel %vm1118, %v2845, 0
      %v2863 = vsel %vm1118, %v2846, 0
      %v2866 = vsel %vm1118, %v2847, 0
      %v2869 = vsel %vm1118, %v2848, 0
      %v2872 = vsel %vm1118, %v2849, 0
      %v2875 = vsel %vm1118, %v2850, 0
      %v2878 = vsel %vm1118, %v2851, 0
      %v2881 = vsel %vm1118, %v2852, 0
      %v2884 = vsel %vm1149, %v2802, 0
      %2886 = vmatprep.subr.bf16.mxu0 0
      %2887 = vmatpush1.bf16.msra.mxu0 %v2884
      %2888 = vmatprep.subr.bf16.mxu0 0
      %2889 = vmatpush1.bf16.msra.mxu0 0
      %2890 = vmatprep.subr.bf16.mxu0 0
      %2891 = vmatpush1.bf16.msra.mxu0 0
      %2892 = vmatprep.subr.bf16.mxu0 0
      %2893 = vmatpush1.bf16.msra.mxu0 0
      %2894 = vmatprep.subr.bf16.mxu0 0
      %2895 = vmatpush1.bf16.msra.mxu0 0
      %2896 = vmatprep.subr.bf16.mxu0 0
      %2897 = vmatpush1.bf16.msra.mxu0 0
      %2898 = vmatprep.subr.bf16.mxu0 0
      %2899 = vmatpush1.bf16.msra.mxu0 0
      %2900 = vmatprep.subr.bf16.mxu0 0
      %2901 = vmatpush1.bf16.msra.mxu0 0
      %2902 = vmatprep.subr.bf16.mxu0 0
      %2903 = vmatpush1.bf16.msra.mxu0 0
      %2904 = vmatprep.subr.bf16.mxu0 0
      %2905 = vmatpush1.bf16.msra.mxu0 0
      %2906 = vmatprep.subr.bf16.mxu0 0
      %2907 = vmatpush1.bf16.msra.mxu0 0
      %2908 = vmatprep.subr.bf16.mxu0 0
      %2909 = vmatpush1.bf16.msra.mxu0 0
      %2910 = vmatprep.subr.bf16.mxu0 0
      %2911 = vmatpush1.bf16.msra.mxu0 0
      %2912 = vmatprep.subr.bf16.mxu0 0
      %2913 = vmatpush1.bf16.msra.mxu0 0
      %2914 = vmatprep.subr.bf16.mxu0 0
      %2915 = vmatpush1.bf16.msra.mxu0 0
      %2916 = vmatprep.subr.bf16.mxu0 0
      %2917 = vmatpush1.bf16.msra.mxu0 0
      %2918 = vmatprep.mubr.bf16.mxu0 0
      %2919 = vmatmul.mubr.bf16.gmra.mrb[0].mxu0 %v2854
      %v2920 = vpop.f32.mrb[0].mxu0
      %v2921 = vadd.f32 0.0, %v2920
      %v2922 = vpop.f32.mrb[0].mxu0
      %v2923 = vpop.f32.mrb[0].mxu0
      %v2924 = vadd.f32 0.0, %v2923
      %v2925 = vpop.f32.mrb[0].mxu0
      %2926 = vmatprep.mubr.bf16.mxu0 0
      %2927 = vmatmul.mubr.bf16.gmra.mrb[0].mxu0 %v2857
      %v2928 = vpop.f32.mrb[0].mxu0
      %v2929 = vadd.f32 0.0, %v2928
      %v2930 = vpop.f32.mrb[0].mxu0
      %v2931 = vpop.f32.mrb[0].mxu0
      %v2932 = vadd.f32 0.0, %v2931
      %v2933 = vpop.f32.mrb[0].mxu0
      %2934 = vmatprep.mubr.bf16.mxu0 0
      %2935 = vmatmul.mubr.bf16.gmra.mrb[0].mxu0 %v2860
      %v2936 = vpop.f32.mrb[0].mxu0
      %v2937 = vadd.f32 0.0, %v2936
      %v2938 = vpop.f32.mrb[0].mxu0
      %v2939 = vpop.f32.mrb[0].mxu0
      %v2940 = vadd.f32 0.0, %v2939
      %v2941 = vpop.f32.mrb[0].mxu0
      %2942 = vmatprep.mubr.bf16.mxu0 0
      %2943 = vmatmul.mubr.bf16.gmra.mrb[0].mxu0 %v2863
      %v2944 = vpop.f32.mrb[0].mxu0
      %v2945 = vadd.f32 0.0, %v2944
      %v2946 = vpop.f32.mrb[0].mxu0
      %v2947 = vpop.f32.mrb[0].mxu0
      %v2948 = vadd.f32 0.0, %v2947
      %v2949 = vpop.f32.mrb[0].mxu0
      %2950 = vmatprep.mubr.bf16.mxu0 0
      %2951 = vmatmul.mubr.bf16.gmra.mrb[0].mxu0 %v2866
      %v2952 = vpop.f32.mrb[0].mxu0
      %v2953 = vadd.f32 0.0, %v2952
      %v2954 = vpop.f32.mrb[0].mxu0
      %v2955 = vpop.f32.mrb[0].mxu0
      %v2956 = vadd.f32 0.0, %v2955
      %v2957 = vpop.f32.mrb[0].mxu0
      %2958 = vmatprep.mubr.bf16.mxu0 0
      %2959 = vmatmul.mubr.bf16.gmra.mrb[0].mxu0 %v2869
      %v2960 = vpop.f32.mrb[0].mxu0
      %v2961 = vadd.f32 0.0, %v2960
      %v2962 = vpop.f32.mrb[0].mxu0
      %v2963 = vpop.f32.mrb[0].mxu0
      %v2964 = vadd.f32 0.0, %v2963
      %v2965 = vpop.f32.mrb[0].mxu0
      %2966 = vmatprep.mubr.bf16.mxu0 0
      %2967 = vmatmul.mubr.bf16.gmra.mrb[0].mxu0 %v2872
      %v2968 = vpop.f32.mrb[0].mxu0
      %v2969 = vadd.f32 0.0, %v2968
      %v2970 = vpop.f32.mrb[0].mxu0
      %v2971 = vpop.f32.mrb[0].mxu0
      %v2972 = vadd.f32 0.0, %v2971
      %v2973 = vpop.f32.mrb[0].mxu0
      %2974 = vmatprep.mubr.bf16.mxu0 0
      %2975 = vmatmul.mubr.bf16.gmra.mrb[0].mxu0 %v2875
      %v2976 = vpop.f32.mrb[0].mxu0
      %v2977 = vadd.f32 0.0, %v2976
      %v2978 = vpop.f32.mrb[0].mxu0
      %v2979 = vpop.f32.mrb[0].mxu0
      %v2980 = vadd.f32 0.0, %v2979
      %v2981 = vpop.f32.mrb[0].mxu0
      %2982 = vmatprep.mubr.bf16.mxu0 0
      %2983 = vmatmul.mubr.bf16.gmra.mrb[0].mxu0 %v2878
      %v2984 = vpop.f32.mrb[0].mxu0
      %v2985 = vadd.f32 0.0, %v2984
      %v2986 = vpop.f32.mrb[0].mxu0
      %v2987 = vpop.f32.mrb[0].mxu0
      %v2988 = vadd.f32 0.0, %v2987
      %v2989 = vpop.f32.mrb[0].mxu0
      %2990 = vmatprep.mubr.bf16.mxu0 0
      %2991 = vmatmul.mubr.bf16.gmra.mrb[0].mxu0 %v2881
      %v2992 = vpop.f32.mrb[0].mxu0
      %v2993 = vadd.f32 0.0, %v2992
      %v2994 = vpop.f32.mrb[0].mxu0
      %v2995 = vpop.f32.mrb[0].mxu0
      %v2996 = vadd.f32 0.0, %v2995
      %v2997 = vpop.f32.mrb[0].mxu0
      %2998 = vdwg.mxu0
      %v2999 = vadd.f32 %v2762, %v2921
      %v3000 = vadd.f32 %v2763, %v2924
      %v3001 = vadd.f32 %v2764, %v2929
      %v3002 = vadd.f32 %v2765, %v2932
      %v3003 = vadd.f32 %v2766, %v2937
      %v3004 = vadd.f32 %v2767, %v2940
      %v3005 = vadd.f32 %v2768, %v2945
      %v3006 = vadd.f32 %v2769, %v2948
      %v3007 = vadd.f32 %v2770, %v2953
      %v3008 = vadd.f32 %v2771, %v2956
      %v3009 = vadd.f32 %v2772, %v2961
      %v3010 = vadd.f32 %v2773, %v2964
      %v3011 = vadd.f32 %v2774, %v2969
      %v3012 = vadd.f32 %v2775, %v2972
      %v3013 = vadd.f32 %v2776, %v2977
      %v3014 = vadd.f32 %v2777, %v2980
      %v3015 = vadd.f32 %v2778, %v2985
      %v3016 = vadd.f32 %v2779, %v2988
      %v3017 = vadd.f32 %v2780, %v2993
      %v3018 = vadd.f32 %v2781, %v2996
      %v3019 = vld [vmem:[%s557] sm:$0xf]
      %v3020 = vld [vmem:[%s557 + $0x4] sm:$0xf]
      %v3021 = vld [vmem:[%s557 + $0x8] sm:$0x1]
      %v3022 = vld [vmem:[%s557 + $0xc] sm:$0xf]
      %v3023 = vld [vmem:[%s557 + $0x10] sm:$0xf]
      %v3024 = vld [vmem:[%s557 + $0x14] sm:$0x1]
      %v3025 = vld [vmem:[%s557 + $0x18] sm:$0xf]
      %v3026 = vld [vmem:[%s557 + $0x1c] sm:$0xf]
      %v3027 = vld [vmem:[%s557 + $0x20] sm:$0x1]
      %v3028 = vld [vmem:[%s557 + $0x24] sm:$0xf]
      %v3029 = vld [vmem:[%s557 + $0x28] sm:$0xf]
      %v3030 = vld [vmem:[%s557 + $0x2c] sm:$0x1]
      %v3031 = vld [vmem:[%s557 + $0x30] sm:$0xf]
      %v3032 = vld [vmem:[%s557 + $0x34] sm:$0xf]
      %v3033 = vld [vmem:[%s557 + $0x38] sm:$0x1]
      %v3034 = vld [vmem:[%s557 + $0x3c] sm:$0xf]
      %v3035 = vld [vmem:[%s557 + $0x40] sm:$0xf]
      %v3036 = vld [vmem:[%s557 + $0x44] sm:$0x1]
      %v3037 = vld [vmem:[%s557 + $0x48] sm:$0xf]
      %v3038 = vld [vmem:[%s557 + $0x4c] sm:$0xf]
      %v3039 = vld [vmem:[%s557 + $0x50] sm:$0x1]
      %v3040 = vld [vmem:[%s557 + $0x54] sm:$0xf]
      %v3041 = vld [vmem:[%s557 + $0x58] sm:$0xf]
      %v3042 = vld [vmem:[%s557 + $0x5c] sm:$0x1]
      %v3043 = vld [vmem:[%s557 + $0x60] sm:$0xf]
      %v3044 = vld [vmem:[%s557 + $0x64] sm:$0xf]
      %v3045 = vld [vmem:[%s557 + $0x68] sm:$0x1]
      %v3046 = vld [vmem:[%s557 + $0x6c] sm:$0xf]
      %v3047 = vld [vmem:[%s557 + $0x70] sm:$0xf]
      %v3048 = vld [vmem:[%s557 + $0x74] sm:$0x1]
      %v3050 = vshrl.u32 %v3019, 16
      %v3052 = vrot.slane %v3050, 4
      %v3053 = vshll.u32 %v3019, 16
      %v3055 = vrot.slane %v3053, 5
      %v3056 = vor.u32 %v3052, %v3055
      %v3057 = vrot.slane %v3056, 4
      %v3059 = vshll.u32 %v3020, 16
      %v3061 = vrot.slane %v3059, 5
      %v3062 = vsel %vm842, %v3057, %v3061
      %v3063 = vshrl.u32 %v3020, 16
      %v3065 = vrot.slane %v3063, 4
      %v3066 = vor.u32 %v3065, %v3061
      %v3067 = vrot.slane %v3066, 4
      %v3069 = vshll.u32 %v3021, 16
      %v3071 = vrot.slane %v3069, 5
      %v3072 = vsel %vm842, %v3067, %v3071
      %v3074 = vshrl.u32 %v3022, 16
      %v3076 = vrot.slane %v3074, 4
      %v3077 = vshll.u32 %v3022, 16
      %v3079 = vrot.slane %v3077, 5
      %v3080 = vor.u32 %v3076, %v3079
      %v3081 = vrot.slane %v3080, 4
      %v3083 = vshll.u32 %v3023, 16
      %v3085 = vrot.slane %v3083, 5
      %v3086 = vsel %vm842, %v3081, %v3085
      %v3087 = vshrl.u32 %v3023, 16
      %v3089 = vrot.slane %v3087, 4
      %v3090 = vor.u32 %v3089, %v3085
      %v3091 = vrot.slane %v3090, 4
      %v3093 = vshll.u32 %v3024, 16
      %v3095 = vrot.slane %v3093, 5
      %v3096 = vsel %vm842, %v3091, %v3095
      %v3098 = vshrl.u32 %v3025, 16
      %v3100 = vrot.slane %v3098, 4
      %v3101 = vshll.u32 %v3025, 16
      %v3103 = vrot.slane %v3101, 5
      %v3104 = vor.u32 %v3100, %v3103
      %v3105 = vrot.slane %v3104, 4
      %v3107 = vshll.u32 %v3026, 16
      %v3109 = vrot.slane %v3107, 5
      %v3110 = vsel %vm842, %v3105, %v3109
      %v3111 = vshrl.u32 %v3026, 16
      %v3113 = vrot.slane %v3111, 4
      %v3114 = vor.u32 %v3113, %v3109
      %v3115 = vrot.slane %v3114, 4
      %v3117 = vshll.u32 %v3027, 16
      %v3119 = vrot.slane %v3117, 5
      %v3120 = vsel %vm842, %v3115, %v3119
      %v3122 = vshrl.u32 %v3028, 16
      %v3124 = vrot.slane %v3122, 4
      %v3125 = vshll.u32 %v3028, 16
      %v3127 = vrot.slane %v3125, 5
      %v3128 = vor.u32 %v3124, %v3127
      %v3129 = vrot.slane %v3128, 4
      %v3131 = vshll.u32 %v3029, 16
      %v3133 = vrot.slane %v3131, 5
      %v3134 = vsel %vm842, %v3129, %v3133
      %v3135 = vshrl.u32 %v3029, 16
      %v3137 = vrot.slane %v3135, 4
      %v3138 = vor.u32 %v3137, %v3133
      %v3139 = vrot.slane %v3138, 4
      %v3141 = vshll.u32 %v3030, 16
      %v3143 = vrot.slane %v3141, 5
      %v3144 = vsel %vm842, %v3139, %v3143
      %v3146 = vshrl.u32 %v3031, 16
      %v3148 = vrot.slane %v3146, 4
      %v3149 = vshll.u32 %v3031, 16
      %v3151 = vrot.slane %v3149, 5
      %v3152 = vor.u32 %v3148, %v3151
      %v3153 = vrot.slane %v3152, 4
      %v3155 = vshll.u32 %v3032, 16
      %v3157 = vrot.slane %v3155, 5
      %v3158 = vsel %vm842, %v3153, %v3157
      %v3159 = vshrl.u32 %v3032, 16
      %v3161 = vrot.slane %v3159, 4
      %v3162 = vor.u32 %v3161, %v3157
      %v3163 = vrot.slane %v3162, 4
      %v3165 = vshll.u32 %v3033, 16
      %v3167 = vrot.slane %v3165, 5
      %v3168 = vsel %vm842, %v3163, %v3167
      %v3170 = vshrl.u32 %v3034, 16
      %v3172 = vrot.slane %v3170, 4
      %v3173 = vshll.u32 %v3034, 16
      %v3175 = vrot.slane %v3173, 5
      %v3176 = vor.u32 %v3172, %v3175
      %v3177 = vrot.slane %v3176, 4
      %v3179 = vshll.u32 %v3035, 16
      %v3181 = vrot.slane %v3179, 5
      %v3182 = vsel %vm842, %v3177, %v3181
      %v3183 = vshrl.u32 %v3035, 16
      %v3185 = vrot.slane %v3183, 4
      %v3186 = vor.u32 %v3185, %v3181
      %v3187 = vrot.slane %v3186, 4
      %v3189 = vshll.u32 %v3036, 16
      %v3191 = vrot.slane %v3189, 5
      %v3192 = vsel %vm842, %v3187, %v3191
      %v3194 = vshrl.u32 %v3037, 16
      %v3196 = vrot.slane %v3194, 4
      %v3197 = vshll.u32 %v3037, 16
      %v3199 = vrot.slane %v3197, 5
      %v3200 = vor.u32 %v3196, %v3199
      %v3201 = vrot.slane %v3200, 4
      %v3203 = vshll.u32 %v3038, 16
      %v3205 = vrot.slane %v3203, 5
      %v3206 = vsel %vm842, %v3201, %v3205
      %v3207 = vshrl.u32 %v3038, 16
      %v3209 = vrot.slane %v3207, 4
      %v3210 = vor.u32 %v3209, %v3205
      %v3211 = vrot.slane %v3210, 4
      %v3213 = vshll.u32 %v3039, 16
      %v3215 = vrot.slane %v3213, 5
      %v3216 = vsel %vm842, %v3211, %v3215
      %v3218 = vshrl.u32 %v3040, 16
      %v3220 = vrot.slane %v3218, 4
      %v3221 = vshll.u32 %v3040, 16
      %v3223 = vrot.slane %v3221, 5
      %v3224 = vor.u32 %v3220, %v3223
      %v3225 = vrot.slane %v3224, 4
      %v3227 = vshll.u32 %v3041, 16
      %v3229 = vrot.slane %v3227, 5
      %v3230 = vsel %vm842, %v3225, %v3229
      %v3231 = vshrl.u32 %v3041, 16
      %v3233 = vrot.slane %v3231, 4
      %v3234 = vor.u32 %v3233, %v3229
      %v3235 = vrot.slane %v3234, 4
      %v3237 = vshll.u32 %v3042, 16
      %v3239 = vrot.slane %v3237, 5
      %v3240 = vsel %vm842, %v3235, %v3239
      %v3242 = vshrl.u32 %v3043, 16
      %v3244 = vrot.slane %v3242, 4
      %v3245 = vshll.u32 %v3043, 16
      %v3247 = vrot.slane %v3245, 5
      %v3248 = vor.u32 %v3244, %v3247
      %v3249 = vrot.slane %v3248, 4
      %v3251 = vshll.u32 %v3044, 16
      %v3253 = vrot.slane %v3251, 5
      %v3254 = vsel %vm842, %v3249, %v3253
      %v3255 = vshrl.u32 %v3044, 16
      %v3257 = vrot.slane %v3255, 4
      %v3258 = vor.u32 %v3257, %v3253
      %v3259 = vrot.slane %v3258, 4
      %v3261 = vshll.u32 %v3045, 16
      %v3263 = vrot.slane %v3261, 5
      %v3264 = vsel %vm842, %v3259, %v3263
      %v3266 = vshrl.u32 %v3046, 16
      %v3268 = vrot.slane %v3266, 4
      %v3269 = vshll.u32 %v3046, 16
      %v3271 = vrot.slane %v3269, 5
      %v3272 = vor.u32 %v3268, %v3271
      %v3273 = vrot.slane %v3272, 4
      %v3275 = vshll.u32 %v3047, 16
      %v3277 = vrot.slane %v3275, 5
      %v3278 = vsel %vm842, %v3273, %v3277
      %v3279 = vshrl.u32 %v3047, 16
      %v3281 = vrot.slane %v3279, 4
      %v3282 = vor.u32 %v3281, %v3277
      %v3283 = vrot.slane %v3282, 4
      %v3285 = vshll.u32 %v3048, 16
      %v3287 = vrot.slane %v3285, 5
      %v3288 = vsel %vm842, %v3283, %v3287
      %v3289 = vld [vmem:[%s1 + $0xc] sm:$0xc]
      %v3290 = vunpack.c.l.b16 %v3062
      %v3291 = vunpack.c.l.b16 %v3072
      %v3292 = vunpack.c.l.b16 %v3086
      %v3293 = vunpack.c.l.b16 %v3096
      %v3294 = vunpack.c.l.b16 %v3110
      %v3295 = vunpack.c.l.b16 %v3120
      %v3296 = vunpack.c.l.b16 %v3134
      %v3297 = vunpack.c.l.b16 %v3144
      %v3298 = vunpack.c.l.b16 %v3158
      %v3299 = vunpack.c.l.b16 %v3168
      %v3300 = vunpack.c.l.b16 %v3182
      %v3301 = vunpack.c.l.b16 %v3192
      %v3302 = vunpack.c.l.b16 %v3206
      %v3303 = vunpack.c.l.b16 %v3216
      %v3304 = vunpack.c.l.b16 %v3230
      %v3305 = vunpack.c.l.b16 %v3240
      %v3306 = vunpack.c.l.b16 %v3254
      %v3307 = vunpack.c.l.b16 %v3264
      %v3308 = vunpack.c.l.b16 %v3278
      %v3309 = vunpack.c.l.b16 %v3288
      %v3310 = vpack.c.b16 %v3291, %v3290
      %v3311 = vpack.c.b16 %v3293, %v3292
      %v3312 = vpack.c.b16 %v3295, %v3294
      %v3313 = vpack.c.b16 %v3297, %v3296
      %v3314 = vpack.c.b16 %v3299, %v3298
      %v3315 = vpack.c.b16 %v3301, %v3300
      %v3316 = vpack.c.b16 %v3303, %v3302
      %v3317 = vpack.c.b16 %v3305, %v3304
      %v3318 = vpack.c.b16 %v3307, %v3306
      %v3319 = vpack.c.b16 %v3309, %v3308
      %v3321 = vunpack.c.l.b16 %v3289
      %v3322 = vpack.c.b16 %v3321, %v3321
      %v3323 = vrot.slane %v3322, 2
      %v3325 = vsel %vm1118, %v3310, 0
      %v3328 = vsel %vm1118, %v3311, 0
      %v3331 = vsel %vm1118, %v3312, 0
      %v3334 = vsel %vm1118, %v3313, 0
      %v3337 = vsel %vm1118, %v3314, 0
      %v3340 = vsel %vm1118, %v3315, 0
      %v3343 = vsel %vm1118, %v3316, 0
      %v3346 = vsel %vm1118, %v3317, 0
      %v3349 = vsel %vm1118, %v3318, 0
      %v3352 = vsel %vm1118, %v3319, 0
      %v3355 = vsel %vm1149, %v3323, 0
      %3357 = vmatprep.subr.bf16.mxu0 0
      %3358 = vmatpush1.bf16.msra.mxu0 %v3355
      %3359 = vmatprep.subr.bf16.mxu0 0
      %3360 = vmatpush1.bf16.msra.mxu0 0
      %3361 = vmatprep.subr.bf16.mxu0 0
      %3362 = vmatpush1.bf16.msra.mxu0 0
      %3363 = vmatprep.subr.bf16.mxu0 0
      %3364 = vmatpush1.bf16.msra.mxu0 0
      %3365 = vmatprep.subr.bf16.mxu0 0
      %3366 = vmatpush1.bf16.msra.mxu0 0
      %3367 = vmatprep.subr.bf16.mxu0 0
      %3368 = vmatpush1.bf16.msra.mxu0 0
      %3369 = vmatprep.subr.bf16.mxu0 0
      %3370 = vmatpush1.bf16.msra.mxu0 0
      %3371 = vmatprep.subr.bf16.mxu0 0
      %3372 = vmatpush1.bf16.msra.mxu0 0
      %3373 = vmatprep.subr.bf16.mxu0 0
      %3374 = vmatpush1.bf16.msra.mxu0 0
      %3375 = vmatprep.subr.bf16.mxu0 0
      %3376 = vmatpush1.bf16.msra.mxu0 0
      %3377 = vmatprep.subr.bf16.mxu0 0
      %3378 = vmatpush1.bf16.msra.mxu0 0
      %3379 = vmatprep.subr.bf16.mxu0 0
      %3380 = vmatpush1.bf16.msra.mxu0 0
      %3381 = vmatprep.subr.bf16.mxu0 0
      %3382 = vmatpush1.bf16.msra.mxu0 0
      %3383 = vmatprep.subr.bf16.mxu0 0
      %3384 = vmatpush1.bf16.msra.mxu0 0
      %3385 = vmatprep.subr.bf16.mxu0 0
      %3386 = vmatpush1.bf16.msra.mxu0 0
      %3387 = vmatprep.subr.bf16.mxu0 0
      %3388 = vmatpush1.bf16.msra.mxu0 0
      %3389 = vmatprep.mubr.bf16.mxu0 0
      %3390 = vmatmul.mubr.bf16.gmra.mrb[0].mxu0 %v3325
      %v3391 = vpop.f32.mrb[0].mxu0
      %v3392 = vadd.f32 0.0, %v3391
      %v3393 = vpop.f32.mrb[0].mxu0
      %v3394 = vpop.f32.mrb[0].mxu0
      %v3395 = vadd.f32 0.0, %v3394
      %v3396 = vpop.f32.mrb[0].mxu0
      %3397 = vmatprep.mubr.bf16.mxu0 0
      %3398 = vmatmul.mubr.bf16.gmra.mrb[0].mxu0 %v3328
      %v3399 = vpop.f32.mrb[0].mxu0
      %v3400 = vadd.f32 0.0, %v3399
      %v3401 = vpop.f32.mrb[0].mxu0
      %v3402 = vpop.f32.mrb[0].mxu0
      %v3403 = vadd.f32 0.0, %v3402
      %v3404 = vpop.f32.mrb[0].mxu0
      %3405 = vmatprep.mubr.bf16.mxu0 0
      %3406 = vmatmul.mubr.bf16.gmra.mrb[0].mxu0 %v3331
      %v3407 = vpop.f32.mrb[0].mxu0
      %v3408 = vadd.f32 0.0, %v3407
      %v3409 = vpop.f32.mrb[0].mxu0
      %v3410 = vpop.f32.mrb[0].mxu0
      %v3411 = vadd.f32 0.0, %v3410
      %v3412 = vpop.f32.mrb[0].mxu0
      %3413 = vmatprep.mubr.bf16.mxu0 0
      %3414 = vmatmul.mubr.bf16.gmra.mrb[0].mxu0 %v3334
      %v3415 = vpop.f32.mrb[0].mxu0
      %v3416 = vadd.f32 0.0, %v3415
      %v3417 = vpop.f32.mrb[0].mxu0
      %v3418 = vpop.f32.mrb[0].mxu0
      %v3419 = vadd.f32 0.0, %v3418
      %v3420 = vpop.f32.mrb[0].mxu0
      %3421 = vmatprep.mubr.bf16.mxu0 0
      %3422 = vmatmul.mubr.bf16.gmra.mrb[0].mxu0 %v3337
      %v3423 = vpop.f32.mrb[0].mxu0
      %v3424 = vadd.f32 0.0, %v3423
      %v3425 = vpop.f32.mrb[0].mxu0
      %v3426 = vpop.f32.mrb[0].mxu0
      %v3427 = vadd.f32 0.0, %v3426
      %v3428 = vpop.f32.mrb[0].mxu0
      %3429 = vmatprep.mubr.bf16.mxu0 0
      %3430 = vmatmul.mubr.bf16.gmra.mrb[0].mxu0 %v3340
      %v3431 = vpop.f32.mrb[0].mxu0
      %v3432 = vadd.f32 0.0, %v3431
      %v3433 = vpop.f32.mrb[0].mxu0
      %v3434 = vpop.f32.mrb[0].mxu0
      %v3435 = vadd.f32 0.0, %v3434
      %v3436 = vpop.f32.mrb[0].mxu0
      %3437 = vmatprep.mubr.bf16.mxu0 0
      %3438 = vmatmul.mubr.bf16.gmra.mrb[0].mxu0 %v3343
      %v3439 = vpop.f32.mrb[0].mxu0
      %v3440 = vadd.f32 0.0, %v3439
      %v3441 = vpop.f32.mrb[0].mxu0
      %v3442 = vpop.f32.mrb[0].mxu0
      %v3443 = vadd.f32 0.0, %v3442
      %v3444 = vpop.f32.mrb[0].mxu0
      %3445 = vmatprep.mubr.bf16.mxu0 0
      %3446 = vmatmul.mubr.bf16.gmra.mrb[0].mxu0 %v3346
      %v3447 = vpop.f32.mrb[0].mxu0
      %v3448 = vadd.f32 0.0, %v3447
      %v3449 = vpop.f32.mrb[0].mxu0
      %v3450 = vpop.f32.mrb[0].mxu0
      %v3451 = vadd.f32 0.0, %v3450
      %v3452 = vpop.f32.mrb[0].mxu0
      %3453 = vmatprep.mubr.bf16.mxu0 0
      %3454 = vmatmul.mubr.bf16.gmra.mrb[0].mxu0 %v3349
      %v3455 = vpop.f32.mrb[0].mxu0
      %v3456 = vadd.f32 0.0, %v3455
      %v3457 = vpop.f32.mrb[0].mxu0
      %v3458 = vpop.f32.mrb[0].mxu0
      %v3459 = vadd.f32 0.0, %v3458
      %v3460 = vpop.f32.mrb[0].mxu0
      %3461 = vmatprep.mubr.bf16.mxu0 0
      %3462 = vmatmul.mubr.bf16.gmra.mrb[0].mxu0 %v3352
      %v3463 = vpop.f32.mrb[0].mxu0
      %v3464 = vadd.f32 0.0, %v3463
      %v3465 = vpop.f32.mrb[0].mxu0
      %v3466 = vpop.f32.mrb[0].mxu0
      %v3467 = vadd.f32 0.0, %v3466
      %v3468 = vpop.f32.mrb[0].mxu0
      %3469 = vdwg.mxu0
      %v3470 = vadd.f32 %v2999, %v3392
      %v3471 = vadd.f32 %v3000, %v3395
      %v3472 = vadd.f32 %v3001, %v3400
      %v3473 = vadd.f32 %v3002, %v3403
      %v3474 = vadd.f32 %v3003, %v3408
      %v3475 = vadd.f32 %v3004, %v3411
      %v3476 = vadd.f32 %v3005, %v3416
      %v3477 = vadd.f32 %v3006, %v3419
      %v3478 = vadd.f32 %v3007, %v3424
      %v3479 = vadd.f32 %v3008, %v3427
      %v3480 = vadd.f32 %v3009, %v3432
      %v3481 = vadd.f32 %v3010, %v3435
      %v3482 = vadd.f32 %v3011, %v3440
      %v3483 = vadd.f32 %v3012, %v3443
      %v3484 = vadd.f32 %v3013, %v3448
      %v3485 = vadd.f32 %v3014, %v3451
      %v3486 = vadd.f32 %v3015, %v3456
      %v3487 = vadd.f32 %v3016, %v3459
      %v3488 = vadd.f32 %v3017, %v3464
      %v3489 = vadd.f32 %v3018, %v3467
      %v3490 = vld [vmem:[%s557] sm:$0xe]
      %v3491 = vld [vmem:[%s557 + $0xc] sm:$0xe]
      %v3492 = vld [vmem:[%s557 + $0x18] sm:$0xe]
      %v3493 = vld [vmem:[%s557 + $0x24] sm:$0xe]
      %v3494 = vld [vmem:[%s557 + $0x30] sm:$0xe]
      %v3495 = vld [vmem:[%s557 + $0x3c] sm:$0xe]
      %v3496 = vld [vmem:[%s557 + $0x48] sm:$0xe]
      %v3497 = vld [vmem:[%s557 + $0x54] sm:$0xe]
      %v3498 = vld [vmem:[%s557 + $0x60] sm:$0xe]
      %v3499 = vld [vmem:[%s557 + $0x6c] sm:$0xe]
      %v3530 = vrot.slane %v3490, 5
      %v3531 = vrot.slane %v3530, 4
      %v3532 = vrot.slane %v3020, 5
      %v3533 = vsel %vm1494, %v3531, %v3532
      %v3534 = vrot.slane %v3532, 4
      %v3535 = vrot.slane %v3021, 5
      %v3536 = vsel %vm1494, %v3534, %v3535
      %v3537 = vrot.slane %v3491, 5
      %v3538 = vrot.slane %v3537, 4
      %v3539 = vrot.slane %v3023, 5
      %v3540 = vsel %vm1494, %v3538, %v3539
      %v3541 = vrot.slane %v3539, 4
      %v3542 = vrot.slane %v3024, 5
      %v3543 = vsel %vm1494, %v3541, %v3542
      %v3544 = vrot.slane %v3492, 5
      %v3545 = vrot.slane %v3544, 4
      %v3546 = vrot.slane %v3026, 5
      %v3547 = vsel %vm1494, %v3545, %v3546
      %v3548 = vrot.slane %v3546, 4
      %v3549 = vrot.slane %v3027, 5
      %v3550 = vsel %vm1494, %v3548, %v3549
      %v3551 = vrot.slane %v3493, 5
      %v3552 = vrot.slane %v3551, 4
      %v3553 = vrot.slane %v3029, 5
      %v3554 = vsel %vm1494, %v3552, %v3553
      %v3555 = vrot.slane %v3553, 4
      %v3556 = vrot.slane %v3030, 5
      %v3557 = vsel %vm1494, %v3555, %v3556
      %v3558 = vrot.slane %v3494, 5
      %v3559 = vrot.slane %v3558, 4
      %v3560 = vrot.slane %v3032, 5
      %v3561 = vsel %vm1494, %v3559, %v3560
      %v3562 = vrot.slane %v3560, 4
      %v3563 = vrot.slane %v3033, 5
      %v3564 = vsel %vm1494, %v3562, %v3563
      %v3565 = vrot.slane %v3495, 5
      %v3566 = vrot.slane %v3565, 4
      %v3567 = vrot.slane %v3035, 5
      %v3568 = vsel %vm1494, %v3566, %v3567
      %v3569 = vrot.slane %v3567, 4
      %v3570 = vrot.slane %v3036, 5
      %v3571 = vsel %vm1494, %v3569, %v3570
      %v3572 = vrot.slane %v3496, 5
      %v3573 = vrot.slane %v3572, 4
      %v3574 = vrot.slane %v3038, 5
      %v3575 = vsel %vm1494, %v3573, %v3574
      %v3576 = vrot.slane %v3574, 4
      %v3577 = vrot.slane %v3039, 5
      %v3578 = vsel %vm1494, %v3576, %v3577
      %v3579 = vrot.slane %v3497, 5
      %v3580 = vrot.slane %v3579, 4
      %v3581 = vrot.slane %v3041, 5
      %v3582 = vsel %vm1494, %v3580, %v3581
      %v3583 = vrot.slane %v3581, 4
      %v3584 = vrot.slane %v3042, 5
      %v3585 = vsel %vm1494, %v3583, %v3584
      %v3586 = vrot.slane %v3498, 5
      %v3587 = vrot.slane %v3586, 4
      %v3588 = vrot.slane %v3044, 5
      %v3589 = vsel %vm1494, %v3587, %v3588
      %v3590 = vrot.slane %v3588, 4
      %v3591 = vrot.slane %v3045, 5
      %v3592 = vsel %vm1494, %v3590, %v3591
      %v3593 = vrot.slane %v3499, 5
      %v3594 = vrot.slane %v3593, 4
      %v3595 = vrot.slane %v3047, 5
      %v3596 = vsel %vm1494, %v3594, %v3595
      %v3597 = vrot.slane %v3595, 4
      %v3598 = vrot.slane %v3048, 5
      %v3599 = vsel %vm1494, %v3597, %v3598
      %v3600 = vld [vmem:[%s1 + $0x10] sm:$0x3]
      %v3601 = vunpack.c.l.b16 %v3533
      %v3602 = vunpack.c.l.b16 %v3536
      %v3603 = vunpack.c.l.b16 %v3540
      %v3604 = vunpack.c.l.b16 %v3543
      %v3605 = vunpack.c.l.b16 %v3547
      %v3606 = vunpack.c.l.b16 %v3550
      %v3607 = vunpack.c.l.b16 %v3554
      %v3608 = vunpack.c.l.b16 %v3557
      %v3609 = vunpack.c.l.b16 %v3561
      %v3610 = vunpack.c.l.b16 %v3564
      %v3611 = vunpack.c.l.b16 %v3568
      %v3612 = vunpack.c.l.b16 %v3571
      %v3613 = vunpack.c.l.b16 %v3575
      %v3614 = vunpack.c.l.b16 %v3578
      %v3615 = vunpack.c.l.b16 %v3582
      %v3616 = vunpack.c.l.b16 %v3585
      %v3617 = vunpack.c.l.b16 %v3589
      %v3618 = vunpack.c.l.b16 %v3592
      %v3619 = vunpack.c.l.b16 %v3596
      %v3620 = vunpack.c.l.b16 %v3599
      %v3621 = vpack.c.b16 %v3602, %v3601
      %v3622 = vpack.c.b16 %v3604, %v3603
      %v3623 = vpack.c.b16 %v3606, %v3605
      %v3624 = vpack.c.b16 %v3608, %v3607
      %v3625 = vpack.c.b16 %v3610, %v3609
      %v3626 = vpack.c.b16 %v3612, %v3611
      %v3627 = vpack.c.b16 %v3614, %v3613
      %v3628 = vpack.c.b16 %v3616, %v3615
      %v3629 = vpack.c.b16 %v3618, %v3617
      %v3630 = vpack.c.b16 %v3620, %v3619
      %v3632 = vsel %vm1118, %v3621, 0
      %v3635 = vsel %vm1118, %v3622, 0
      %v3638 = vsel %vm1118, %v3623, 0
      %v3641 = vsel %vm1118, %v3624, 0
      %v3644 = vsel %vm1118, %v3625, 0
      %v3647 = vsel %vm1118, %v3626, 0
      %v3650 = vsel %vm1118, %v3627, 0
      %v3653 = vsel %vm1118, %v3628, 0
      %v3656 = vsel %vm1118, %v3629, 0
      %v3659 = vsel %vm1118, %v3630, 0
      %v3662 = vsel %vm1149, %v3600, 0
      %3664 = vmatprep.subr.bf16.mxu0 0
      %3665 = vmatpush1.bf16.msra.mxu0 %v3662
      %3666 = vmatprep.subr.bf16.mxu0 0
      %3667 = vmatpush1.bf16.msra.mxu0 0
      %3668 = vmatprep.subr.bf16.mxu0 0
      %3669 = vmatpush1.bf16.msra.mxu0 0
      %3670 = vmatprep.subr.bf16.mxu0 0
      %3671 = vmatpush1.bf16.msra.mxu0 0
      %3672 = vmatprep.subr.bf16.mxu0 0
      %3673 = vmatpush1.bf16.msra.mxu0 0
      %3674 = vmatprep.subr.bf16.mxu0 0
      %3675 = vmatpush1.bf16.msra.mxu0 0
      %3676 = vmatprep.subr.bf16.mxu0 0
      %3677 = vmatpush1.bf16.msra.mxu0 0
      %3678 = vmatprep.subr.bf16.mxu0 0
      %3679 = vmatpush1.bf16.msra.mxu0 0
      %3680 = vmatprep.subr.bf16.mxu0 0
      %3681 = vmatpush1.bf16.msra.mxu0 0
      %3682 = vmatprep.subr.bf16.mxu0 0
      %3683 = vmatpush1.bf16.msra.mxu0 0
      %3684 = vmatprep.subr.bf16.mxu0 0
      %3685 = vmatpush1.bf16.msra.mxu0 0
      %3686 = vmatprep.subr.bf16.mxu0 0
      %3687 = vmatpush1.bf16.msra.mxu0 0
      %3688 = vmatprep.subr.bf16.mxu0 0
      %3689 = vmatpush1.bf16.msra.mxu0 0
      %3690 = vmatprep.subr.bf16.mxu0 0
      %3691 = vmatpush1.bf16.msra.mxu0 0
      %3692 = vmatprep.subr.bf16.mxu0 0
      %3693 = vmatpush1.bf16.msra.mxu0 0
      %3694 = vmatprep.subr.bf16.mxu0 0
      %3695 = vmatpush1.bf16.msra.mxu0 0
      %3696 = vmatprep.mubr.bf16.mxu0 0
      %3697 = vmatmul.mubr.bf16.gmra.mrb[0].mxu0 %v3632
      %v3698 = vpop.f32.mrb[0].mxu0
      %v3699 = vadd.f32 0.0, %v3698
      %v3700 = vpop.f32.mrb[0].mxu0
      %v3701 = vpop.f32.mrb[0].mxu0
      %v3702 = vadd.f32 0.0, %v3701
      %v3703 = vpop.f32.mrb[0].mxu0
      %3704 = vmatprep.mubr.bf16.mxu0 0
      %3705 = vmatmul.mubr.bf16.gmra.mrb[0].mxu0 %v3635
      %v3706 = vpop.f32.mrb[0].mxu0
      %v3707 = vadd.f32 0.0, %v3706
      %v3708 = vpop.f32.mrb[0].mxu0
      %v3709 = vpop.f32.mrb[0].mxu0
      %v3710 = vadd.f32 0.0, %v3709
      %v3711 = vpop.f32.mrb[0].mxu0
      %3712 = vmatprep.mubr.bf16.mxu0 0
      %3713 = vmatmul.mubr.bf16.gmra.mrb[0].mxu0 %v3638
      %v3714 = vpop.f32.mrb[0].mxu0
      %v3715 = vadd.f32 0.0, %v3714
      %v3716 = vpop.f32.mrb[0].mxu0
      %v3717 = vpop.f32.mrb[0].mxu0
      %v3718 = vadd.f32 0.0, %v3717
      %v3719 = vpop.f32.mrb[0].mxu0
      %3720 = vmatprep.mubr.bf16.mxu0 0
      %3721 = vmatmul.mubr.bf16.gmra.mrb[0].mxu0 %v3641
      %v3722 = vpop.f32.mrb[0].mxu0
      %v3723 = vadd.f32 0.0, %v3722
      %v3724 = vpop.f32.mrb[0].mxu0
      %v3725 = vpop.f32.mrb[0].mxu0
      %v3726 = vadd.f32 0.0, %v3725
      %v3727 = vpop.f32.mrb[0].mxu0
      %3728 = vmatprep.mubr.bf16.mxu0 0
      %3729 = vmatmul.mubr.bf16.gmra.mrb[0].mxu0 %v3644
      %v3730 = vpop.f32.mrb[0].mxu0
      %v3731 = vadd.f32 0.0, %v3730
      %v3732 = vpop.f32.mrb[0].mxu0
      %v3733 = vpop.f32.mrb[0].mxu0
      %v3734 = vadd.f32 0.0, %v3733
      %v3735 = vpop.f32.mrb[0].mxu0
      %3736 = vmatprep.mubr.bf16.mxu0 0
      %3737 = vmatmul.mubr.bf16.gmra.mrb[0].mxu0 %v3647
      %v3738 = vpop.f32.mrb[0].mxu0
      %v3739 = vadd.f32 0.0, %v3738
      %v3740 = vpop.f32.mrb[0].mxu0
      %v3741 = vpop.f32.mrb[0].mxu0
      %v3742 = vadd.f32 0.0, %v3741
      %v3743 = vpop.f32.mrb[0].mxu0
      %3744 = vmatprep.mubr.bf16.mxu0 0
      %3745 = vmatmul.mubr.bf16.gmra.mrb[0].mxu0 %v3650
      %v3746 = vpop.f32.mrb[0].mxu0
      %v3747 = vadd.f32 0.0, %v3746
      %v3748 = vpop.f32.mrb[0].mxu0
      %v3749 = vpop.f32.mrb[0].mxu0
      %v3750 = vadd.f32 0.0, %v3749
      %v3751 = vpop.f32.mrb[0].mxu0
      %3752 = vmatprep.mubr.bf16.mxu0 0
      %3753 = vmatmul.mubr.bf16.gmra.mrb[0].mxu0 %v3653
      %v3754 = vpop.f32.mrb[0].mxu0
      %v3755 = vadd.f32 0.0, %v3754
      %v3756 = vpop.f32.mrb[0].mxu0
      %v3757 = vpop.f32.mrb[0].mxu0
      %v3758 = vadd.f32 0.0, %v3757
      %v3759 = vpop.f32.mrb[0].mxu0
      %3760 = vmatprep.mubr.bf16.mxu0 0
      %3761 = vmatmul.mubr.bf16.gmra.mrb[0].mxu0 %v3656
      %v3762 = vpop.f32.mrb[0].mxu0
      %v3763 = vadd.f32 0.0, %v3762
      %v3764 = vpop.f32.mrb[0].mxu0
      %v3765 = vpop.f32.mrb[0].mxu0
      %v3766 = vadd.f32 0.0, %v3765
      %v3767 = vpop.f32.mrb[0].mxu0
      %3768 = vmatprep.mubr.bf16.mxu0 0
      %3769 = vmatmul.mubr.bf16.gmra.mrb[0].mxu0 %v3659
      %v3770 = vpop.f32.mrb[0].mxu0
      %v3771 = vadd.f32 0.0, %v3770
      %v3772 = vpop.f32.mrb[0].mxu0
      %v3773 = vpop.f32.mrb[0].mxu0
      %v3774 = vadd.f32 0.0, %v3773
      %v3775 = vpop.f32.mrb[0].mxu0
      %3776 = vdwg.mxu0
      %v3777 = vadd.f32 %v3470, %v3699
      %v3778 = vadd.f32 %v3471, %v3702
      %v3779 = vadd.f32 %v3472, %v3707
      %v3780 = vadd.f32 %v3473, %v3710
      %v3781 = vadd.f32 %v3474, %v3715
      %v3782 = vadd.f32 %v3475, %v3718
      %v3783 = vadd.f32 %v3476, %v3723
      %v3784 = vadd.f32 %v3477, %v3726
      %v3785 = vadd.f32 %v3478, %v3731
      %v3786 = vadd.f32 %v3479, %v3734
      %v3787 = vadd.f32 %v3480, %v3739
      %v3788 = vadd.f32 %v3481, %v3742
      %v3789 = vadd.f32 %v3482, %v3747
      %v3790 = vadd.f32 %v3483, %v3750
      %v3791 = vadd.f32 %v3484, %v3755
      %v3792 = vadd.f32 %v3485, %v3758
      %v3793 = vadd.f32 %v3486, %v3763
      %v3794 = vadd.f32 %v3487, %v3766
      %v3795 = vadd.f32 %v3488, %v3771
      %v3796 = vadd.f32 %v3489, %v3774
      %v3797 = vld [vmem:[%s2] sm:$0x1]
      %v3799 = vlaneseq
      %v3800 = vshrl.u32 %v3799, 7
      %v3801 = vsub.s32 0, %v3800
      %v3802 = vrot.slane %v3797, %v3801
      %v3804 = vadd.f32 %v3777, %v3802
      %v3805 = vadd.f32 %v3778, %v3802
      %v3806 = vadd.f32 %v3779, %v3802
      %v3807 = vadd.f32 %v3780, %v3802
      %v3808 = vadd.f32 %v3781, %v3802
      %v3809 = vadd.f32 %v3782, %v3802
      %v3810 = vadd.f32 %v3783, %v3802
      %v3811 = vadd.f32 %v3784, %v3802
      %v3812 = vadd.f32 %v3785, %v3802
      %v3813 = vadd.f32 %v3786, %v3802
      %v3814 = vadd.f32 %v3787, %v3802
      %v3815 = vadd.f32 %v3788, %v3802
      %v3816 = vadd.f32 %v3789, %v3802
      %v3817 = vadd.f32 %v3790, %v3802
      %v3818 = vadd.f32 %v3791, %v3802
      %v3819 = vadd.f32 %v3792, %v3802
      %v3820 = vadd.f32 %v3793, %v3802
      %v3821 = vadd.f32 %v3794, %v3802
      %v3822 = vadd.f32 %v3795, %v3802
      %v3823 = vadd.f32 %v3796, %v3802
      %v3824 = vmax.f32 %v3804, 0.0
      %v3825 = vmax.f32 %v3805, 0.0
      %v3826 = vmax.f32 %v3806, 0.0
      %v3827 = vmax.f32 %v3807, 0.0
      %v3828 = vmax.f32 %v3808, 0.0
      %v3829 = vmax.f32 %v3809, 0.0
      %v3830 = vmax.f32 %v3810, 0.0
      %v3831 = vmax.f32 %v3811, 0.0
      %v3832 = vmax.f32 %v3812, 0.0
      %v3833 = vmax.f32 %v3813, 0.0
      %v3834 = vmax.f32 %v3814, 0.0
      %v3835 = vmax.f32 %v3815, 0.0
      %v3836 = vmax.f32 %v3816, 0.0
      %v3837 = vmax.f32 %v3817, 0.0
      %v3838 = vmax.f32 %v3818, 0.0
      %v3839 = vmax.f32 %v3819, 0.0
      %v3840 = vmax.f32 %v3820, 0.0
      %v3841 = vmax.f32 %v3821, 0.0
      %v3842 = vmax.f32 %v3822, 0.0
      %v3843 = vmax.f32 %v3823, 0.0
      %v3844 = vld [vmem:[#allocation3] sm:$0x1]
      %v3845 = vsel %vm254, 0, %v3844
      %3846 = vst [vmem:[#allocation3] sm:$0x1] %v3845
      %v3847 = vld [vmem:[#allocation3 + $0xc] sm:$0x1]
      %v3848 = vsel %vm254, 0, %v3847
      %3849 = vst [vmem:[#allocation3 + $0xc] sm:$0x1] %v3848
      %v3850 = vld [vmem:[#allocation3 + $0x18] sm:$0x1]
      %v3851 = vsel %vm254, 0, %v3850
      %3852 = vst [vmem:[#allocation3 + $0x18] sm:$0x1] %v3851
      %v3853 = vld [vmem:[#allocation3 + $0x24] sm:$0x1]
      %v3854 = vsel %vm254, 0, %v3853
      %3855 = vst [vmem:[#allocation3 + $0x24] sm:$0x1] %v3854
      %v3856 = vld [vmem:[#allocation3 + $0x30] sm:$0x1]
      %v3857 = vsel %vm254, 0, %v3856
      %3858 = vst [vmem:[#allocation3 + $0x30] sm:$0x1] %v3857
      %v3859 = vld [vmem:[#allocation3 + $0x3c] sm:$0x1]
      %v3860 = vsel %vm254, 0, %v3859
      %3861 = vst [vmem:[#allocation3 + $0x3c] sm:$0x1] %v3860
      %v3862 = vld [vmem:[#allocation3 + $0x48] sm:$0x1]
      %v3863 = vsel %vm254, 0, %v3862
      %3864 = vst [vmem:[#allocation3 + $0x48] sm:$0x1] %v3863
      %v3865 = vld [vmem:[#allocation3 + $0x54] sm:$0x1]
      %v3866 = vsel %vm254, 0, %v3865
      %3867 = vst [vmem:[#allocation3 + $0x54] sm:$0x1] %v3866
      %v3868 = vld [vmem:[#allocation3 + $0x60] sm:$0x1]
      %v3869 = vsel %vm254, 0, %v3868
      %3870 = vst [vmem:[#allocation3 + $0x60] sm:$0x1] %v3869
      %v3871 = vld [vmem:[#allocation3 + $0x6c] sm:$0x1]
      %v3872 = vsel %vm254, 0, %v3871
      %3873 = vst [vmem:[#allocation3 + $0x6c] sm:$0x1] %v3872
      %v3874 = vld [vmem:[#allocation3 + $0x8] sm:$0x1]
      %v3875 = vsel %vm292, 0, %v3874
      %3876 = vst [vmem:[#allocation3 + $0x8] sm:$0x1] %v3875
      %v3877 = vld [vmem:[#allocation3 + $0x14] sm:$0x1]
      %v3878 = vsel %vm292, 0, %v3877
      %3879 = vst [vmem:[#allocation3 + $0x14] sm:$0x1] %v3878
      %v3880 = vld [vmem:[#allocation3 + $0x20] sm:$0x1]
      %v3881 = vsel %vm292, 0, %v3880
      %3882 = vst [vmem:[#allocation3 + $0x20] sm:$0x1] %v3881
      %v3883 = vld [vmem:[#allocation3 + $0x2c] sm:$0x1]
      %v3884 = vsel %vm292, 0, %v3883
      %3885 = vst [vmem:[#allocation3 + $0x2c] sm:$0x1] %v3884
      %v3886 = vld [vmem:[#allocation3 + $0x38] sm:$0x1]
      %v3887 = vsel %vm292, 0, %v3886
      %3888 = vst [vmem:[#allocation3 + $0x38] sm:$0x1] %v3887
      %v3889 = vld [vmem:[#allocation3 + $0x44] sm:$0x1]
      %v3890 = vsel %vm292, 0, %v3889
      %3891 = vst [vmem:[#allocation3 + $0x44] sm:$0x1] %v3890
      %v3892 = vld [vmem:[#allocation3 + $0x50] sm:$0x1]
      %v3893 = vsel %vm292, 0, %v3892
      %3894 = vst [vmem:[#allocation3 + $0x50] sm:$0x1] %v3893
      %v3895 = vld [vmem:[#allocation3 + $0x5c] sm:$0x1]
      %v3896 = vsel %vm292, 0, %v3895
      %3897 = vst [vmem:[#allocation3 + $0x5c] sm:$0x1] %v3896
      %v3898 = vld [vmem:[#allocation3 + $0x68] sm:$0x1]
      %v3899 = vsel %vm292, 0, %v3898
      %3900 = vst [vmem:[#allocation3 + $0x68] sm:$0x1] %v3899
      %v3901 = vld [vmem:[#allocation3 + $0x74] sm:$0x1]
      %v3902 = vsel %vm292, 0, %v3901
      %3903 = vst [vmem:[#allocation3 + $0x74] sm:$0x1] %v3902
      %v3904 = vpack.c.bf16 %v3825, %v3824
      %v3905 = vpack.c.bf16 %v3827, %v3826
      %v3906 = vpack.c.bf16 %v3829, %v3828
      %v3907 = vpack.c.bf16 %v3831, %v3830
      %v3908 = vpack.c.bf16 %v3833, %v3832
      %v3909 = vpack.c.bf16 %v3835, %v3834
      %v3910 = vpack.c.bf16 %v3837, %v3836
      %v3911 = vpack.c.bf16 %v3839, %v3838
      %v3912 = vpack.c.bf16 %v3841, %v3840
      %v3913 = vpack.c.bf16 %v3843, %v3842
      %v3924 = vunpack.c.l.b16 %v3904
      %v3925 = vunpack.c.h.b16 %v3904
      %v3926 = vunpack.c.l.b16 %v3905
      %v3927 = vunpack.c.h.b16 %v3905
      %v3928 = vunpack.c.l.b16 %v3906
      %v3929 = vunpack.c.h.b16 %v3906
      %v3930 = vunpack.c.l.b16 %v3907
      %v3931 = vunpack.c.h.b16 %v3907
      %v3932 = vunpack.c.l.b16 %v3908
      %v3933 = vunpack.c.h.b16 %v3908
      %v3934 = vunpack.c.l.b16 %v3909
      %v3935 = vunpack.c.h.b16 %v3909
      %v3936 = vunpack.c.l.b16 %v3910
      %v3937 = vunpack.c.h.b16 %v3910
      %v3938 = vunpack.c.l.b16 %v3911
      %v3939 = vunpack.c.h.b16 %v3911
      %v3940 = vunpack.c.l.b16 %v3912
      %v3941 = vunpack.c.h.b16 %v3912
      %v3942 = vunpack.c.l.b16 %v3913
      %v3943 = vunpack.c.h.b16 %v3913
      %v3944 = vpack.c.b16 %v3924, %v3924
      %v3945 = vpack.c.b16 %v3925, %v3925
      %v3946 = vpack.c.b16 %v3926, %v3926
      %v3947 = vpack.c.b16 %v3927, %v3927
      %v3948 = vpack.c.b16 %v3928, %v3928
      %v3949 = vpack.c.b16 %v3929, %v3929
      %v3950 = vpack.c.b16 %v3930, %v3930
      %v3951 = vpack.c.b16 %v3931, %v3931
      %v3952 = vpack.c.b16 %v3932, %v3932
      %v3953 = vpack.c.b16 %v3933, %v3933
      %v3954 = vpack.c.b16 %v3934, %v3934
      %v3955 = vpack.c.b16 %v3935, %v3935
      %v3956 = vpack.c.b16 %v3936, %v3936
      %v3957 = vpack.c.b16 %v3937, %v3937
      %v3958 = vpack.c.b16 %v3938, %v3938
      %v3959 = vpack.c.b16 %v3939, %v3939
      %v3960 = vpack.c.b16 %v3940, %v3940
      %v3961 = vpack.c.b16 %v3941, %v3941
      %v3962 = vpack.c.b16 %v3942, %v3942
      %v3963 = vpack.c.b16 %v3943, %v3943
      %v3965 = vshrl.u32 %v3944, 16
      %v3967 = vrot.slane %v3965, 7
      %v3968 = vshll.u32 %v3944, 16
      %v3970 = vor.u32 %v3967, %v3968
      %v3971 = vrot.slane %v3967, 4
      %v3973 = vshrl.u32 %v3945, 16
      %v3975 = vrot.slane %v3973, 7
      %v3976 = vshll.u32 %v3945, 16
      %v3978 = vor.u32 %v3975, %v3976
      %v3979 = vsel %vm396, %v3971, %v3978
      %v3980 = vrot.slane %v3975, 4
      %v3982 = vshrl.u32 %v3946, 16
      %v3984 = vrot.slane %v3982, 7
      %v3985 = vshll.u32 %v3946, 16
      %v3987 = vor.u32 %v3984, %v3985
      %v3988 = vrot.slane %v3984, 4
      %v3990 = vshrl.u32 %v3947, 16
      %v3992 = vrot.slane %v3990, 7
      %v3993 = vshll.u32 %v3947, 16
      %v3995 = vor.u32 %v3992, %v3993
      %v3996 = vsel %vm396, %v3988, %v3995
      %v3997 = vrot.slane %v3992, 4
      %v3999 = vshrl.u32 %v3948, 16
      %v4001 = vrot.slane %v3999, 7
      %v4002 = vshll.u32 %v3948, 16
      %v4004 = vor.u32 %v4001, %v4002
      %v4005 = vrot.slane %v4001, 4
      %v4007 = vshrl.u32 %v3949, 16
      %v4009 = vrot.slane %v4007, 7
      %v4010 = vshll.u32 %v3949, 16
      %v4012 = vor.u32 %v4009, %v4010
      %v4013 = vsel %vm396, %v4005, %v4012
      %v4014 = vrot.slane %v4009, 4
      %v4016 = vshrl.u32 %v3950, 16
      %v4018 = vrot.slane %v4016, 7
      %v4019 = vshll.u32 %v3950, 16
      %v4021 = vor.u32 %v4018, %v4019
      %v4022 = vrot.slane %v4018, 4
      %v4024 = vshrl.u32 %v3951, 16
      %v4026 = vrot.slane %v4024, 7
      %v4027 = vshll.u32 %v3951, 16
      %v4029 = vor.u32 %v4026, %v4027
      %v4030 = vsel %vm396, %v4022, %v4029
      %v4031 = vrot.slane %v4026, 4
      %v4033 = vshrl.u32 %v3952, 16
      %v4035 = vrot.slane %v4033, 7
      %v4036 = vshll.u32 %v3952, 16
      %v4038 = vor.u32 %v4035, %v4036
      %v4039 = vrot.slane %v4035, 4
      %v4041 = vshrl.u32 %v3953, 16
      %v4043 = vrot.slane %v4041, 7
      %v4044 = vshll.u32 %v3953, 16
      %v4046 = vor.u32 %v4043, %v4044
      %v4047 = vsel %vm396, %v4039, %v4046
      %v4048 = vrot.slane %v4043, 4
      %v4050 = vshrl.u32 %v3954, 16
      %v4052 = vrot.slane %v4050, 7
      %v4053 = vshll.u32 %v3954, 16
      %v4055 = vor.u32 %v4052, %v4053
      %v4056 = vrot.slane %v4052, 4
      %v4058 = vshrl.u32 %v3955, 16
      %v4060 = vrot.slane %v4058, 7
      %v4061 = vshll.u32 %v3955, 16
      %v4063 = vor.u32 %v4060, %v4061
      %v4064 = vsel %vm396, %v4056, %v4063
      %v4065 = vrot.slane %v4060, 4
      %v4067 = vshrl.u32 %v3956, 16
      %v4069 = vrot.slane %v4067, 7
      %v4070 = vshll.u32 %v3956, 16
      %v4072 = vor.u32 %v4069, %v4070
      %v4073 = vrot.slane %v4069, 4
      %v4075 = vshrl.u32 %v3957, 16
      %v4077 = vrot.slane %v4075, 7
      %v4078 = vshll.u32 %v3957, 16
      %v4080 = vor.u32 %v4077, %v4078
      %v4081 = vsel %vm396, %v4073, %v4080
      %v4082 = vrot.slane %v4077, 4
      %v4084 = vshrl.u32 %v3958, 16
      %v4086 = vrot.slane %v4084, 7
      %v4087 = vshll.u32 %v3958, 16
      %v4089 = vor.u32 %v4086, %v4087
      %v4090 = vrot.slane %v4086, 4
      %v4092 = vshrl.u32 %v3959, 16
      %v4094 = vrot.slane %v4092, 7
      %v4095 = vshll.u32 %v3959, 16
      %v4097 = vor.u32 %v4094, %v4095
      %v4098 = vsel %vm396, %v4090, %v4097
      %v4099 = vrot.slane %v4094, 4
      %v4101 = vshrl.u32 %v3960, 16
      %v4103 = vrot.slane %v4101, 7
      %v4104 = vshll.u32 %v3960, 16
      %v4106 = vor.u32 %v4103, %v4104
      %v4107 = vrot.slane %v4103, 4
      %v4109 = vshrl.u32 %v3961, 16
      %v4111 = vrot.slane %v4109, 7
      %v4112 = vshll.u32 %v3961, 16
      %v4114 = vor.u32 %v4111, %v4112
      %v4115 = vsel %vm396, %v4107, %v4114
      %v4116 = vrot.slane %v4111, 4
      %v4118 = vshrl.u32 %v3962, 16
      %v4120 = vrot.slane %v4118, 7
      %v4121 = vshll.u32 %v3962, 16
      %v4123 = vor.u32 %v4120, %v4121
      %v4124 = vrot.slane %v4120, 4
      %v4126 = vshrl.u32 %v3963, 16
      %v4128 = vrot.slane %v4126, 7
      %v4129 = vshll.u32 %v3963, 16
      %v4131 = vor.u32 %v4128, %v4129
      %v4132 = vsel %vm396, %v4124, %v4131
      %v4133 = vrot.slane %v4128, 4
      %v4164 = vld [vmem:[#allocation3] sm:$0xf]
      %v4165 = vsel %vm559, %v3970, %v4164
      %4166 = vst [vmem:[#allocation3] sm:$0xf] %v4165
      %4167 = vst.msk [vmem:[#allocation3 + $0x4] sm:$0xf] %vm563, %v3979
      %v4168 = vld [vmem:[#allocation3 + $0x8] sm:$0x1]
      %v4169 = vsel %vm254, %v3980, %v4168
      %4170 = vst [vmem:[#allocation3 + $0x8] sm:$0x1] %v4169
      %v4171 = vld [vmem:[#allocation3 + $0xc] sm:$0xf]
      %v4172 = vsel %vm559, %v3987, %v4171
      %4173 = vst [vmem:[#allocation3 + $0xc] sm:$0xf] %v4172
      %4174 = vst.msk [vmem:[#allocation3 + $0x10] sm:$0xf] %vm563, %v3996
      %v4175 = vld [vmem:[#allocation3 + $0x14] sm:$0x1]
      %v4176 = vsel %vm254, %v3997, %v4175
      %4177 = vst [vmem:[#allocation3 + $0x14] sm:$0x1] %v4176
      %v4178 = vld [vmem:[#allocation3 + $0x18] sm:$0xf]
      %v4179 = vsel %vm559, %v4004, %v4178
      %4180 = vst [vmem:[#allocation3 + $0x18] sm:$0xf] %v4179
      %4181 = vst.msk [vmem:[#allocation3 + $0x1c] sm:$0xf] %vm563, %v4013
      %v4182 = vld [vmem:[#allocation3 + $0x20] sm:$0x1]
      %v4183 = vsel %vm254, %v4014, %v4182
      %4184 = vst [vmem:[#allocation3 + $0x20] sm:$0x1] %v4183
      %v4185 = vld [vmem:[#allocation3 + $0x24] sm:$0xf]
      %v4186 = vsel %vm559, %v4021, %v4185
      %4187 = vst [vmem:[#allocation3 + $0x24] sm:$0xf] %v4186
      %4188 = vst.msk [vmem:[#allocation3 + $0x28] sm:$0xf] %vm563, %v4030
      %v4189 = vld [vmem:[#allocation3 + $0x2c] sm:$0x1]
      %v4190 = vsel %vm254, %v4031, %v4189
      %4191 = vst [vmem:[#allocation3 + $0x2c] sm:$0x1] %v4190
      %v4192 = vld [vmem:[#allocation3 + $0x30] sm:$0xf]
      %v4193 = vsel %vm559, %v4038, %v4192
      %4194 = vst [vmem:[#allocation3 + $0x30] sm:$0xf] %v4193
      %4195 = vst.msk [vmem:[#allocation3 + $0x34] sm:$0xf] %vm563, %v4047
      %v4196 = vld [vmem:[#allocation3 + $0x38] sm:$0x1]
      %v4197 = vsel %vm254, %v4048, %v4196
      %4198 = vst [vmem:[#allocation3 + $0x38] sm:$0x1] %v4197
      %v4199 = vld [vmem:[#allocation3 + $0x3c] sm:$0xf]
      %v4200 = vsel %vm559, %v4055, %v4199
      %4201 = vst [vmem:[#allocation3 + $0x3c] sm:$0xf] %v4200
      %4202 = vst.msk [vmem:[#allocation3 + $0x40] sm:$0xf] %vm563, %v4064
      %v4203 = vld [vmem:[#allocation3 + $0x44] sm:$0x1]
      %v4204 = vsel %vm254, %v4065, %v4203
      %4205 = vst [vmem:[#allocation3 + $0x44] sm:$0x1] %v4204
      %v4206 = vld [vmem:[#allocation3 + $0x48] sm:$0xf]
      %v4207 = vsel %vm559, %v4072, %v4206
      %4208 = vst [vmem:[#allocation3 + $0x48] sm:$0xf] %v4207
      %4209 = vst.msk [vmem:[#allocation3 + $0x4c] sm:$0xf] %vm563, %v4081
      %v4210 = vld [vmem:[#allocation3 + $0x50] sm:$0x1]
      %v4211 = vsel %vm254, %v4082, %v4210
      %4212 = vst [vmem:[#allocation3 + $0x50] sm:$0x1] %v4211
      %v4213 = vld [vmem:[#allocation3 + $0x54] sm:$0xf]
      %v4214 = vsel %vm559, %v4089, %v4213
      %4215 = vst [vmem:[#allocation3 + $0x54] sm:$0xf] %v4214
      %4216 = vst.msk [vmem:[#allocation3 + $0x58] sm:$0xf] %vm563, %v4098
      %v4217 = vld [vmem:[#allocation3 + $0x5c] sm:$0x1]
      %v4218 = vsel %vm254, %v4099, %v4217
      %4219 = vst [vmem:[#allocation3 + $0x5c] sm:$0x1] %v4218
      %v4220 = vld [vmem:[#allocation3 + $0x60] sm:$0xf]
      %v4221 = vsel %vm559, %v4106, %v4220
      %4222 = vst [vmem:[#allocation3 + $0x60] sm:$0xf] %v4221
      %4223 = vst.msk [vmem:[#allocation3 + $0x64] sm:$0xf] %vm563, %v4115
      %v4224 = vld [vmem:[#allocation3 + $0x68] sm:$0x1]
      %v4225 = vsel %vm254, %v4116, %v4224
      %4226 = vst [vmem:[#allocation3 + $0x68] sm:$0x1] %v4225
      %v4227 = vld [vmem:[#allocation3 + $0x6c] sm:$0xf]
      %v4228 = vsel %vm559, %v4123, %v4227
      %4229 = vst [vmem:[#allocation3 + $0x6c] sm:$0xf] %v4228
      %4230 = vst.msk [vmem:[#allocation3 + $0x70] sm:$0xf] %vm563, %v4132
      %v4231 = vld [vmem:[#allocation3 + $0x74] sm:$0x1]
      %v4232 = vsel %vm254, %v4133, %v4231
      %4233 = vst [vmem:[#allocation3 + $0x74] sm:$0x1] %v4232
      // Predicated region
      $region57: #{tpu_custom_call.1} parent=39 // pred_check
        %p4234 = pneg %p617
      $region58: #{tpu_custom_call.1} parent=39 // pred_check_branch
        %4236 = sbr.rel (%p4234) target = $region60
      $region59: #{tpu_custom_call.1} parent=39 // pred_region
        %4237 = vst.msk [vmem:[#allocation3] sm:$0xf] %vm563, 0
        %4238 = vst.msk [vmem:[#allocation3 + $0x4] sm:$0xf] %vm563, 0
        %vm4239 = vcmask 24576
        %4240 = vst.msk [vmem:[#allocation3 + $0x8] sm:$0x1] %vm4239, 0
      $region60: #{tpu_custom_call.1} parent=39 // pred_fallthru
        _
      // Predicated region
      $region61: #{tpu_custom_call.1} parent=39 // pred_check
        %p4241 = pneg %p712
      $region62: #{tpu_custom_call.1} parent=39 // pred_check_branch
        %4243 = sbr.rel (%p4241) target = $region64
      $region63: #{tpu_custom_call.1} parent=39 // pred_region
        %s4244 = scalar_lea.vmem [#allocation3], 108
        %4245 = vst.msk [vmem:[%s4244] sm:$0xf] %vm563, 0
        %4246 = vst.msk [vmem:[%s4244 + $0x4] sm:$0xf] %vm563, 0
        %vm4247 = vcmask 24576
        %4248 = vst.msk [vmem:[%s4244 + $0x8] sm:$0x1] %vm4247, 0
      $region64: #{tpu_custom_call.1} parent=39 // pred_fallthru
        _
      %v4249 = vld [vmem:[#allocation3] sm:$0xf]
      %v4250 = vld [vmem:[#allocation3 + $0x4] sm:$0xf]
      %v4251 = vld [vmem:[#allocation3 + $0xc] sm:$0xf]
      %v4252 = vld [vmem:[#allocation3 + $0x10] sm:$0xf]
      %v4253 = vld [vmem:[#allocation3 + $0x18] sm:$0xf]
      %v4254 = vld [vmem:[#allocation3 + $0x1c] sm:$0xf]
      %v4255 = vld [vmem:[#allocation3 + $0x24] sm:$0xf]
      %v4256 = vld [vmem:[#allocation3 + $0x28] sm:$0xf]
      %v4257 = vld [vmem:[#allocation3 + $0x30] sm:$0xf]
      %v4258 = vld [vmem:[#allocation3 + $0x34] sm:$0xf]
      %v4259 = vld [vmem:[#allocation3 + $0x3c] sm:$0xf]
      %v4260 = vld [vmem:[#allocation3 + $0x40] sm:$0xf]
      %v4261 = vld [vmem:[#allocation3 + $0x48] sm:$0xf]
      %v4262 = vld [vmem:[#allocation3 + $0x4c] sm:$0xf]
      %v4263 = vld [vmem:[#allocation3 + $0x54] sm:$0xf]
      %v4264 = vld [vmem:[#allocation3 + $0x58] sm:$0xf]
      %v4265 = vld [vmem:[%s3] sm:$0x3]
      %v4266 = vld [vmem:[#allocation3 + $0x8] sm:$0x1]
      %v4267 = vld [vmem:[#allocation3 + $0x14] sm:$0x1]
      %v4268 = vld [vmem:[#allocation3 + $0x20] sm:$0x1]
      %v4269 = vld [vmem:[#allocation3 + $0x2c] sm:$0x1]
      %v4270 = vld [vmem:[#allocation3 + $0x38] sm:$0x1]
      %v4271 = vld [vmem:[#allocation3 + $0x44] sm:$0x1]
      %v4272 = vld [vmem:[#allocation3 + $0x50] sm:$0x1]
      %v4273 = vld [vmem:[#allocation3 + $0x5c] sm:$0x1]
      %v4275 = vshrl.u32 %v4249, 16
      %v4277 = vrot.slane %v4275, 4
      %v4278 = vshll.u32 %v4249, 16
      %v4280 = vrot.slane %v4278, 5
      %v4281 = vor.u32 %v4277, %v4280
      %v4282 = vrot.slane %v4281, 4
      %v4284 = vshll.u32 %v4250, 16
      %v4286 = vrot.slane %v4284, 5
      %v4287 = vsel %vm842, %v4282, %v4286
      %v4288 = vshrl.u32 %v4250, 16
      %v4290 = vrot.slane %v4288, 4
      %v4291 = vor.u32 %v4290, %v4286
      %v4292 = vrot.slane %v4291, 4
      %v4294 = vshll.u32 %v4266, 16
      %v4296 = vrot.slane %v4294, 5
      %v4297 = vsel %vm842, %v4292, %v4296
      %v4299 = vshrl.u32 %v4251, 16
      %v4301 = vrot.slane %v4299, 4
      %v4302 = vshll.u32 %v4251, 16
      %v4304 = vrot.slane %v4302, 5
      %v4305 = vor.u32 %v4301, %v4304
      %v4306 = vrot.slane %v4305, 4
      %v4308 = vshll.u32 %v4252, 16
      %v4310 = vrot.slane %v4308, 5
      %v4311 = vsel %vm842, %v4306, %v4310
      %v4312 = vshrl.u32 %v4252, 16
      %v4314 = vrot.slane %v4312, 4
      %v4315 = vor.u32 %v4314, %v4310
      %v4316 = vrot.slane %v4315, 4
      %v4318 = vshll.u32 %v4267, 16
      %v4320 = vrot.slane %v4318, 5
      %v4321 = vsel %vm842, %v4316, %v4320
      %v4323 = vshrl.u32 %v4253, 16
      %v4325 = vrot.slane %v4323, 4
      %v4326 = vshll.u32 %v4253, 16
      %v4328 = vrot.slane %v4326, 5
      %v4329 = vor.u32 %v4325, %v4328
      %v4330 = vrot.slane %v4329, 4
      %v4332 = vshll.u32 %v4254, 16
      %v4334 = vrot.slane %v4332, 5
      %v4335 = vsel %vm842, %v4330, %v4334
      %v4336 = vshrl.u32 %v4254, 16
      %v4338 = vrot.slane %v4336, 4
      %v4339 = vor.u32 %v4338, %v4334
      %v4340 = vrot.slane %v4339, 4
      %v4342 = vshll.u32 %v4268, 16
      %v4344 = vrot.slane %v4342, 5
      %v4345 = vsel %vm842, %v4340, %v4344
      %v4347 = vshrl.u32 %v4255, 16
      %v4349 = vrot.slane %v4347, 4
      %v4350 = vshll.u32 %v4255, 16
      %v4352 = vrot.slane %v4350, 5
      %v4353 = vor.u32 %v4349, %v4352
      %v4354 = vrot.slane %v4353, 4
      %v4356 = vshll.u32 %v4256, 16
      %v4358 = vrot.slane %v4356, 5
      %v4359 = vsel %vm842, %v4354, %v4358
      %v4360 = vshrl.u32 %v4256, 16
      %v4362 = vrot.slane %v4360, 4
      %v4363 = vor.u32 %v4362, %v4358
      %v4364 = vrot.slane %v4363, 4
      %v4366 = vshll.u32 %v4269, 16
      %v4368 = vrot.slane %v4366, 5
      %v4369 = vsel %vm842, %v4364, %v4368
      %v4371 = vshrl.u32 %v4257, 16
      %v4373 = vrot.slane %v4371, 4
      %v4374 = vshll.u32 %v4257, 16
      %v4376 = vrot.slane %v4374, 5
      %v4377 = vor.u32 %v4373, %v4376
      %v4378 = vrot.slane %v4377, 4
      %v4380 = vshll.u32 %v4258, 16
      %v4382 = vrot.slane %v4380, 5
      %v4383 = vsel %vm842, %v4378, %v4382
      %v4384 = vshrl.u32 %v4258, 16
      %v4386 = vrot.slane %v4384, 4
      %v4387 = vor.u32 %v4386, %v4382
      %v4388 = vrot.slane %v4387, 4
      %v4390 = vshll.u32 %v4270, 16
      %v4392 = vrot.slane %v4390, 5
      %v4393 = vsel %vm842, %v4388, %v4392
      %v4395 = vshrl.u32 %v4259, 16
      %v4397 = vrot.slane %v4395, 4
      %v4398 = vshll.u32 %v4259, 16
      %v4400 = vrot.slane %v4398, 5
      %v4401 = vor.u32 %v4397, %v4400
      %v4402 = vrot.slane %v4401, 4
      %v4404 = vshll.u32 %v4260, 16
      %v4406 = vrot.slane %v4404, 5
      %v4407 = vsel %vm842, %v4402, %v4406
      %v4408 = vshrl.u32 %v4260, 16
      %v4410 = vrot.slane %v4408, 4
      %v4411 = vor.u32 %v4410, %v4406
      %v4412 = vrot.slane %v4411, 4
      %v4414 = vshll.u32 %v4271, 16
      %v4416 = vrot.slane %v4414, 5
      %v4417 = vsel %vm842, %v4412, %v4416
      %v4419 = vshrl.u32 %v4261, 16
      %v4421 = vrot.slane %v4419, 4
      %v4422 = vshll.u32 %v4261, 16
      %v4424 = vrot.slane %v4422, 5
      %v4425 = vor.u32 %v4421, %v4424
      %v4426 = vrot.slane %v4425, 4
      %v4428 = vshll.u32 %v4262, 16
      %v4430 = vrot.slane %v4428, 5
      %v4431 = vsel %vm842, %v4426, %v4430
      %v4432 = vshrl.u32 %v4262, 16
      %v4434 = vrot.slane %v4432, 4
      %v4435 = vor.u32 %v4434, %v4430
      %v4436 = vrot.slane %v4435, 4
      %v4438 = vshll.u32 %v4272, 16
      %v4440 = vrot.slane %v4438, 5
      %v4441 = vsel %vm842, %v4436, %v4440
      %v4443 = vshrl.u32 %v4263, 16
      %v4445 = vrot.slane %v4443, 4
      %v4446 = vshll.u32 %v4263, 16
      %v4448 = vrot.slane %v4446, 5
      %v4449 = vor.u32 %v4445, %v4448
      %v4450 = vrot.slane %v4449, 4
      %v4452 = vshll.u32 %v4264, 16
      %v4454 = vrot.slane %v4452, 5
      %v4455 = vsel %vm842, %v4450, %v4454
      %v4456 = vshrl.u32 %v4264, 16
      %v4458 = vrot.slane %v4456, 4
      %v4459 = vor.u32 %v4458, %v4454
      %v4460 = vrot.slane %v4459, 4
      %v4462 = vshll.u32 %v4273, 16
      %v4464 = vrot.slane %v4462, 5
      %v4465 = vsel %vm842, %v4460, %v4464
      %v4466 = vld [vmem:[%s3] sm:$0xc]
      %v4467 = vunpack.c.l.b16 %v4287
      %v4468 = vunpack.c.l.b16 %v4297
      %v4469 = vunpack.c.l.b16 %v4311
      %v4470 = vunpack.c.l.b16 %v4321
      %v4471 = vunpack.c.l.b16 %v4335
      %v4472 = vunpack.c.l.b16 %v4345
      %v4473 = vunpack.c.l.b16 %v4359
      %v4474 = vunpack.c.l.b16 %v4369
      %v4475 = vunpack.c.l.b16 %v4383
      %v4476 = vunpack.c.l.b16 %v4393
      %v4477 = vunpack.c.l.b16 %v4407
      %v4478 = vunpack.c.l.b16 %v4417
      %v4479 = vunpack.c.l.b16 %v4431
      %v4480 = vunpack.c.l.b16 %v4441
      %v4481 = vunpack.c.l.b16 %v4455
      %v4482 = vunpack.c.l.b16 %v4465
      %v4483 = vpack.c.b16 %v4468, %v4467
      %v4484 = vpack.c.b16 %v4470, %v4469
      %v4485 = vpack.c.b16 %v4472, %v4471
      %v4486 = vpack.c.b16 %v4474, %v4473
      %v4487 = vpack.c.b16 %v4476, %v4475
      %v4488 = vpack.c.b16 %v4478, %v4477
      %v4489 = vpack.c.b16 %v4480, %v4479
      %v4490 = vpack.c.b16 %v4482, %v4481
      %v4492 = vunpack.c.l.b16 %v4466
      %v4493 = vpack.c.b16 %v4492, %v4492
      %v4494 = vrot.slane %v4493, 2
      %v4496 = vsel %vm1118, %v4483, 0
      %v4499 = vsel %vm1118, %v4484, 0
      %v4502 = vsel %vm1118, %v4485, 0
      %v4505 = vsel %vm1118, %v4486, 0
      %v4508 = vsel %vm1118, %v4487, 0
      %v4511 = vsel %vm1118, %v4488, 0
      %v4514 = vsel %vm1118, %v4489, 0
      %v4517 = vsel %vm1118, %v4490, 0
      %v4520 = vsel %vm1149, %v4494, 0
      %4522 = vmatprep.subr.bf16.mxu0 0
      %4523 = vmatpush1.bf16.msra.mxu0 %v4520
      %4524 = vmatprep.subr.bf16.mxu0 0
      %4525 = vmatpush1.bf16.msra.mxu0 0
      %4526 = vmatprep.subr.bf16.mxu0 0
      %4527 = vmatpush1.bf16.msra.mxu0 0
      %4528 = vmatprep.subr.bf16.mxu0 0
      %4529 = vmatpush1.bf16.msra.mxu0 0
      %4530 = vmatprep.subr.bf16.mxu0 0
      %4531 = vmatpush1.bf16.msra.mxu0 0
      %4532 = vmatprep.subr.bf16.mxu0 0
      %4533 = vmatpush1.bf16.msra.mxu0 0
      %4534 = vmatprep.subr.bf16.mxu0 0
      %4535 = vmatpush1.bf16.msra.mxu0 0
      %4536 = vmatprep.subr.bf16.mxu0 0
      %4537 = vmatpush1.bf16.msra.mxu0 0
      %4538 = vmatprep.subr.bf16.mxu0 0
      %4539 = vmatpush1.bf16.msra.mxu0 0
      %4540 = vmatprep.subr.bf16.mxu0 0
      %4541 = vmatpush1.bf16.msra.mxu0 0
      %4542 = vmatprep.subr.bf16.mxu0 0
      %4543 = vmatpush1.bf16.msra.mxu0 0
      %4544 = vmatprep.subr.bf16.mxu0 0
      %4545 = vmatpush1.bf16.msra.mxu0 0
      %4546 = vmatprep.subr.bf16.mxu0 0
      %4547 = vmatpush1.bf16.msra.mxu0 0
      %4548 = vmatprep.subr.bf16.mxu0 0
      %4549 = vmatpush1.bf16.msra.mxu0 0
      %4550 = vmatprep.subr.bf16.mxu0 0
      %4551 = vmatpush1.bf16.msra.mxu0 0
      %4552 = vmatprep.subr.bf16.mxu0 0
      %4553 = vmatpush1.bf16.msra.mxu0 0
      %4554 = vmatprep.mubr.bf16.mxu0 0
      %4555 = vmatmul.mubr.bf16.gmra.mrb[0].mxu0 %v4496
      %v4556 = vpop.f32.mrb[0].mxu0
      %v4557 = vadd.f32 0.0, %v4556
      %v4558 = vpop.f32.mrb[0].mxu0
      %v4559 = vpop.f32.mrb[0].mxu0
      %v4560 = vadd.f32 0.0, %v4559
      %v4561 = vpop.f32.mrb[0].mxu0
      %4562 = vmatprep.mubr.bf16.mxu0 0
      %4563 = vmatmul.mubr.bf16.gmra.mrb[0].mxu0 %v4499
      %v4564 = vpop.f32.mrb[0].mxu0
      %v4565 = vadd.f32 0.0, %v4564
      %v4566 = vpop.f32.mrb[0].mxu0
      %v4567 = vpop.f32.mrb[0].mxu0
      %v4568 = vadd.f32 0.0, %v4567
      %v4569 = vpop.f32.mrb[0].mxu0
      %4570 = vmatprep.mubr.bf16.mxu0 0
      %4571 = vmatmul.mubr.bf16.gmra.mrb[0].mxu0 %v4502
      %v4572 = vpop.f32.mrb[0].mxu0
      %v4573 = vadd.f32 0.0, %v4572
      %v4574 = vpop.f32.mrb[0].mxu0
      %v4575 = vpop.f32.mrb[0].mxu0
      %v4576 = vadd.f32 0.0, %v4575
      %v4577 = vpop.f32.mrb[0].mxu0
      %4578 = vmatprep.mubr.bf16.mxu0 0
      %4579 = vmatmul.mubr.bf16.gmra.mrb[0].mxu0 %v4505
      %v4580 = vpop.f32.mrb[0].mxu0
      %v4581 = vadd.f32 0.0, %v4580
      %v4582 = vpop.f32.mrb[0].mxu0
      %v4583 = vpop.f32.mrb[0].mxu0
      %v4584 = vadd.f32 0.0, %v4583
      %v4585 = vpop.f32.mrb[0].mxu0
      %4586 = vmatprep.mubr.bf16.mxu0 0
      %4587 = vmatmul.mubr.bf16.gmra.mrb[0].mxu0 %v4508
      %v4588 = vpop.f32.mrb[0].mxu0
      %v4589 = vadd.f32 0.0, %v4588
      %v4590 = vpop.f32.mrb[0].mxu0
      %v4591 = vpop.f32.mrb[0].mxu0
      %v4592 = vadd.f32 0.0, %v4591
      %v4593 = vpop.f32.mrb[0].mxu0
      %4594 = vmatprep.mubr.bf16.mxu0 0
      %4595 = vmatmul.mubr.bf16.gmra.mrb[0].mxu0 %v4511
      %v4596 = vpop.f32.mrb[0].mxu0
      %v4597 = vadd.f32 0.0, %v4596
      %v4598 = vpop.f32.mrb[0].mxu0
      %v4599 = vpop.f32.mrb[0].mxu0
      %v4600 = vadd.f32 0.0, %v4599
      %v4601 = vpop.f32.mrb[0].mxu0
      %4602 = vmatprep.mubr.bf16.mxu0 0
      %4603 = vmatmul.mubr.bf16.gmra.mrb[0].mxu0 %v4514
      %v4604 = vpop.f32.mrb[0].mxu0
      %v4605 = vadd.f32 0.0, %v4604
      %v4606 = vpop.f32.mrb[0].mxu0
      %v4607 = vpop.f32.mrb[0].mxu0
      %v4608 = vadd.f32 0.0, %v4607
      %v4609 = vpop.f32.mrb[0].mxu0
      %4610 = vmatprep.mubr.bf16.mxu0 0
      %4611 = vmatmul.mubr.bf16.gmra.mrb[0].mxu0 %v4517
      %v4612 = vpop.f32.mrb[0].mxu0
      %v4613 = vadd.f32 0.0, %v4612
      %v4614 = vpop.f32.mrb[0].mxu0
      %v4615 = vpop.f32.mrb[0].mxu0
      %v4616 = vadd.f32 0.0, %v4615
      %v4617 = vpop.f32.mrb[0].mxu0
      %4618 = vdwg.mxu0
      %v4635 = vunpack.c.l.b16 %v4249
      %v4636 = vunpack.c.l.b16 %v4250
      %v4637 = vunpack.c.l.b16 %v4251
      %v4638 = vunpack.c.l.b16 %v4252
      %v4639 = vunpack.c.l.b16 %v4253
      %v4640 = vunpack.c.l.b16 %v4254
      %v4641 = vunpack.c.l.b16 %v4255
      %v4642 = vunpack.c.l.b16 %v4256
      %v4643 = vunpack.c.l.b16 %v4257
      %v4644 = vunpack.c.l.b16 %v4258
      %v4645 = vunpack.c.l.b16 %v4259
      %v4646 = vunpack.c.l.b16 %v4260
      %v4647 = vunpack.c.l.b16 %v4261
      %v4648 = vunpack.c.l.b16 %v4262
      %v4649 = vunpack.c.l.b16 %v4263
      %v4650 = vunpack.c.l.b16 %v4264
      %v4651 = vpack.c.b16 %v4636, %v4635
      %v4652 = vpack.c.b16 %v4638, %v4637
      %v4653 = vpack.c.b16 %v4640, %v4639
      %v4654 = vpack.c.b16 %v4642, %v4641
      %v4655 = vpack.c.b16 %v4644, %v4643
      %v4656 = vpack.c.b16 %v4646, %v4645
      %v4657 = vpack.c.b16 %v4648, %v4647
      %v4658 = vpack.c.b16 %v4650, %v4649
      %v4660 = vsel %vm1118, %v4651, 0
      %v4663 = vsel %vm1118, %v4652, 0
      %v4666 = vsel %vm1118, %v4653, 0
      %v4669 = vsel %vm1118, %v4654, 0
      %v4672 = vsel %vm1118, %v4655, 0
      %v4675 = vsel %vm1118, %v4656, 0
      %v4678 = vsel %vm1118, %v4657, 0
      %v4681 = vsel %vm1118, %v4658, 0
      %v4684 = vsel %vm1149, %v4265, 0
      %4686 = vmatprep.subr.bf16.mxu0 0
      %4687 = vmatpush1.bf16.msra.mxu0 %v4684
      %4688 = vmatprep.subr.bf16.mxu0 0
      %4689 = vmatpush1.bf16.msra.mxu0 0
      %4690 = vmatprep.subr.bf16.mxu0 0
      %4691 = vmatpush1.bf16.msra.mxu0 0
      %4692 = vmatprep.subr.bf16.mxu0 0
      %4693 = vmatpush1.bf16.msra.mxu0 0
      %4694 = vmatprep.subr.bf16.mxu0 0
      %4695 = vmatpush1.bf16.msra.mxu0 0
      %4696 = vmatprep.subr.bf16.mxu0 0
      %4697 = vmatpush1.bf16.msra.mxu0 0
      %4698 = vmatprep.subr.bf16.mxu0 0
      %4699 = vmatpush1.bf16.msra.mxu0 0
      %4700 = vmatprep.subr.bf16.mxu0 0
      %4701 = vmatpush1.bf16.msra.mxu0 0
      %4702 = vmatprep.subr.bf16.mxu0 0
      %4703 = vmatpush1.bf16.msra.mxu0 0
      %4704 = vmatprep.subr.bf16.mxu0 0
      %4705 = vmatpush1.bf16.msra.mxu0 0
      %4706 = vmatprep.subr.bf16.mxu0 0
      %4707 = vmatpush1.bf16.msra.mxu0 0
      %4708 = vmatprep.subr.bf16.mxu0 0
      %4709 = vmatpush1.bf16.msra.mxu0 0
      %4710 = vmatprep.subr.bf16.mxu0 0
      %4711 = vmatpush1.bf16.msra.mxu0 0
      %4712 = vmatprep.subr.bf16.mxu0 0
      %4713 = vmatpush1.bf16.msra.mxu0 0
      %4714 = vmatprep.subr.bf16.mxu0 0
      %4715 = vmatpush1.bf16.msra.mxu0 0
      %4716 = vmatprep.subr.bf16.mxu0 0
      %4717 = vmatpush1.bf16.msra.mxu0 0
      %4718 = vmatprep.mubr.bf16.mxu0 0
      %4719 = vmatmul.mubr.bf16.gmra.mrb[0].mxu0 %v4660
      %v4720 = vpop.f32.mrb[0].mxu0
      %v4721 = vadd.f32 %v4557, %v4720
      %v4722 = vpop.f32.mrb[0].mxu0
      %v4723 = vpop.f32.mrb[0].mxu0
      %v4724 = vadd.f32 %v4560, %v4723
      %v4725 = vpop.f32.mrb[0].mxu0
      %4726 = vmatprep.mubr.bf16.mxu0 0
      %4727 = vmatmul.mubr.bf16.gmra.mrb[0].mxu0 %v4663
      %v4728 = vpop.f32.mrb[0].mxu0
      %v4729 = vadd.f32 %v4565, %v4728
      %v4730 = vpop.f32.mrb[0].mxu0
      %v4731 = vpop.f32.mrb[0].mxu0
      %v4732 = vadd.f32 %v4568, %v4731
      %v4733 = vpop.f32.mrb[0].mxu0
      %4734 = vmatprep.mubr.bf16.mxu0 0
      %4735 = vmatmul.mubr.bf16.gmra.mrb[0].mxu0 %v4666
      %v4736 = vpop.f32.mrb[0].mxu0
      %v4737 = vadd.f32 %v4573, %v4736
      %v4738 = vpop.f32.mrb[0].mxu0
      %v4739 = vpop.f32.mrb[0].mxu0
      %v4740 = vadd.f32 %v4576, %v4739
      %v4741 = vpop.f32.mrb[0].mxu0
      %4742 = vmatprep.mubr.bf16.mxu0 0
      %4743 = vmatmul.mubr.bf16.gmra.mrb[0].mxu0 %v4669
      %v4744 = vpop.f32.mrb[0].mxu0
      %v4745 = vadd.f32 %v4581, %v4744
      %v4746 = vpop.f32.mrb[0].mxu0
      %v4747 = vpop.f32.mrb[0].mxu0
      %v4748 = vadd.f32 %v4584, %v4747
      %v4749 = vpop.f32.mrb[0].mxu0
      %4750 = vmatprep.mubr.bf16.mxu0 0
      %4751 = vmatmul.mubr.bf16.gmra.mrb[0].mxu0 %v4672
      %v4752 = vpop.f32.mrb[0].mxu0
      %v4753 = vadd.f32 %v4589, %v4752
      %v4754 = vpop.f32.mrb[0].mxu0
      %v4755 = vpop.f32.mrb[0].mxu0
      %v4756 = vadd.f32 %v4592, %v4755
      %v4757 = vpop.f32.mrb[0].mxu0
      %4758 = vmatprep.mubr.bf16.mxu0 0
      %4759 = vmatmul.mubr.bf16.gmra.mrb[0].mxu0 %v4675
      %v4760 = vpop.f32.mrb[0].mxu0
      %v4761 = vadd.f32 %v4597, %v4760
      %v4762 = vpop.f32.mrb[0].mxu0
      %v4763 = vpop.f32.mrb[0].mxu0
      %v4764 = vadd.f32 %v4600, %v4763
      %v4765 = vpop.f32.mrb[0].mxu0
      %4766 = vmatprep.mubr.bf16.mxu0 0
      %4767 = vmatmul.mubr.bf16.gmra.mrb[0].mxu0 %v4678
      %v4768 = vpop.f32.mrb[0].mxu0
      %v4769 = vadd.f32 %v4605, %v4768
      %v4770 = vpop.f32.mrb[0].mxu0
      %v4771 = vpop.f32.mrb[0].mxu0
      %v4772 = vadd.f32 %v4608, %v4771
      %v4773 = vpop.f32.mrb[0].mxu0
      %4774 = vmatprep.mubr.bf16.mxu0 0
      %4775 = vmatmul.mubr.bf16.gmra.mrb[0].mxu0 %v4681
      %v4776 = vpop.f32.mrb[0].mxu0
      %v4777 = vadd.f32 %v4613, %v4776
      %v4778 = vpop.f32.mrb[0].mxu0
      %v4779 = vpop.f32.mrb[0].mxu0
      %v4780 = vadd.f32 %v4616, %v4779
      %v4781 = vpop.f32.mrb[0].mxu0
      %4782 = vdwg.mxu0
      %v4783 = vld [vmem:[#allocation3] sm:$0xe]
      %v4784 = vld [vmem:[#allocation3 + $0xc] sm:$0xe]
      %v4785 = vld [vmem:[#allocation3 + $0x18] sm:$0xe]
      %v4786 = vld [vmem:[#allocation3 + $0x24] sm:$0xe]
      %v4787 = vld [vmem:[#allocation3 + $0x30] sm:$0xe]
      %v4788 = vld [vmem:[#allocation3 + $0x3c] sm:$0xe]
      %v4789 = vld [vmem:[#allocation3 + $0x48] sm:$0xe]
      %v4790 = vld [vmem:[#allocation3 + $0x54] sm:$0xe]
      %v4807 = vrot.slane %v4783, 5
      %v4808 = vrot.slane %v4807, 4
      %v4809 = vrot.slane %v4250, 5
      %v4810 = vsel %vm1494, %v4808, %v4809
      %v4811 = vrot.slane %v4809, 4
      %v4812 = vrot.slane %v4266, 5
      %v4813 = vsel %vm1494, %v4811, %v4812
      %v4814 = vrot.slane %v4784, 5
      %v4815 = vrot.slane %v4814, 4
      %v4816 = vrot.slane %v4252, 5
      %v4817 = vsel %vm1494, %v4815, %v4816
      %v4818 = vrot.slane %v4816, 4
      %v4819 = vrot.slane %v4267, 5
      %v4820 = vsel %vm1494, %v4818, %v4819
      %v4821 = vrot.slane %v4785, 5
      %v4822 = vrot.slane %v4821, 4
      %v4823 = vrot.slane %v4254, 5
      %v4824 = vsel %vm1494, %v4822, %v4823
      %v4825 = vrot.slane %v4823, 4
      %v4826 = vrot.slane %v4268, 5
      %v4827 = vsel %vm1494, %v4825, %v4826
      %v4828 = vrot.slane %v4786, 5
      %v4829 = vrot.slane %v4828, 4
      %v4830 = vrot.slane %v4256, 5
      %v4831 = vsel %vm1494, %v4829, %v4830
      %v4832 = vrot.slane %v4830, 4
      %v4833 = vrot.slane %v4269, 5
      %v4834 = vsel %vm1494, %v4832, %v4833
      %v4835 = vrot.slane %v4787, 5
      %v4836 = vrot.slane %v4835, 4
      %v4837 = vrot.slane %v4258, 5
      %v4838 = vsel %vm1494, %v4836, %v4837
      %v4839 = vrot.slane %v4837, 4
      %v4840 = vrot.slane %v4270, 5
      %v4841 = vsel %vm1494, %v4839, %v4840
      %v4842 = vrot.slane %v4788, 5
      %v4843 = vrot.slane %v4842, 4
      %v4844 = vrot.slane %v4260, 5
      %v4845 = vsel %vm1494, %v4843, %v4844
      %v4846 = vrot.slane %v4844, 4
      %v4847 = vrot.slane %v4271, 5
      %v4848 = vsel %vm1494, %v4846, %v4847
      %v4849 = vrot.slane %v4789, 5
      %v4850 = vrot.slane %v4849, 4
      %v4851 = vrot.slane %v4262, 5
      %v4852 = vsel %vm1494, %v4850, %v4851
      %v4853 = vrot.slane %v4851, 4
      %v4854 = vrot.slane %v4272, 5
      %v4855 = vsel %vm1494, %v4853, %v4854
      %v4856 = vrot.slane %v4790, 5
      %v4857 = vrot.slane %v4856, 4
      %v4858 = vrot.slane %v4264, 5
      %v4859 = vsel %vm1494, %v4857, %v4858
      %v4860 = vrot.slane %v4858, 4
      %v4861 = vrot.slane %v4273, 5
      %v4862 = vsel %vm1494, %v4860, %v4861
      %v4863 = vld [vmem:[%s3 + $0x4] sm:$0x3]
      %v4864 = vunpack.c.l.b16 %v4810
      %v4865 = vunpack.c.l.b16 %v4813
      %v4866 = vunpack.c.l.b16 %v4817
      %v4867 = vunpack.c.l.b16 %v4820
      %v4868 = vunpack.c.l.b16 %v4824
      %v4869 = vunpack.c.l.b16 %v4827
      %v4870 = vunpack.c.l.b16 %v4831
      %v4871 = vunpack.c.l.b16 %v4834
      %v4872 = vunpack.c.l.b16 %v4838
      %v4873 = vunpack.c.l.b16 %v4841
      %v4874 = vunpack.c.l.b16 %v4845
      %v4875 = vunpack.c.l.b16 %v4848
      %v4876 = vunpack.c.l.b16 %v4852
      %v4877 = vunpack.c.l.b16 %v4855
      %v4878 = vunpack.c.l.b16 %v4859
      %v4879 = vunpack.c.l.b16 %v4862
      %v4880 = vpack.c.b16 %v4865, %v4864
      %v4881 = vpack.c.b16 %v4867, %v4866
      %v4882 = vpack.c.b16 %v4869, %v4868
      %v4883 = vpack.c.b16 %v4871, %v4870
      %v4884 = vpack.c.b16 %v4873, %v4872
      %v4885 = vpack.c.b16 %v4875, %v4874
      %v4886 = vpack.c.b16 %v4877, %v4876
      %v4887 = vpack.c.b16 %v4879, %v4878
      %v4889 = vsel %vm1118, %v4880, 0
      %v4892 = vsel %vm1118, %v4881, 0
      %v4895 = vsel %vm1118, %v4882, 0
      %v4898 = vsel %vm1118, %v4883, 0
      %v4901 = vsel %vm1118, %v4884, 0
      %v4904 = vsel %vm1118, %v4885, 0
      %v4907 = vsel %vm1118, %v4886, 0
      %v4910 = vsel %vm1118, %v4887, 0
      %v4913 = vsel %vm1149, %v4863, 0
      %4915 = vmatprep.subr.bf16.mxu0 0
      %4916 = vmatpush1.bf16.msra.mxu0 %v4913
      %4917 = vmatprep.subr.bf16.mxu0 0
      %4918 = vmatpush1.bf16.msra.mxu0 0
      %4919 = vmatprep.subr.bf16.mxu0 0
      %4920 = vmatpush1.bf16.msra.mxu0 0
      %4921 = vmatprep.subr.bf16.mxu0 0
      %4922 = vmatpush1.bf16.msra.mxu0 0
      %4923 = vmatprep.subr.bf16.mxu0 0
      %4924 = vmatpush1.bf16.msra.mxu0 0
      %4925 = vmatprep.subr.bf16.mxu0 0
      %4926 = vmatpush1.bf16.msra.mxu0 0
      %4927 = vmatprep.subr.bf16.mxu0 0
      %4928 = vmatpush1.bf16.msra.mxu0 0
      %4929 = vmatprep.subr.bf16.mxu0 0
      %4930 = vmatpush1.bf16.msra.mxu0 0
      %4931 = vmatprep.subr.bf16.mxu0 0
      %4932 = vmatpush1.bf16.msra.mxu0 0
      %4933 = vmatprep.subr.bf16.mxu0 0
      %4934 = vmatpush1.bf16.msra.mxu0 0
      %4935 = vmatprep.subr.bf16.mxu0 0
      %4936 = vmatpush1.bf16.msra.mxu0 0
      %4937 = vmatprep.subr.bf16.mxu0 0
      %4938 = vmatpush1.bf16.msra.mxu0 0
      %4939 = vmatprep.subr.bf16.mxu0 0
      %4940 = vmatpush1.bf16.msra.mxu0 0
      %4941 = vmatprep.subr.bf16.mxu0 0
      %4942 = vmatpush1.bf16.msra.mxu0 0
      %4943 = vmatprep.subr.bf16.mxu0 0
      %4944 = vmatpush1.bf16.msra.mxu0 0
      %4945 = vmatprep.subr.bf16.mxu0 0
      %4946 = vmatpush1.bf16.msra.mxu0 0
      %4947 = vmatprep.mubr.bf16.mxu0 0
      %4948 = vmatmul.mubr.bf16.gmra.mrb[0].mxu0 %v4889
      %v4949 = vpop.f32.mrb[0].mxu0
      %v4950 = vadd.f32 0.0, %v4949
      %v4951 = vpop.f32.mrb[0].mxu0
      %v4952 = vpop.f32.mrb[0].mxu0
      %v4953 = vadd.f32 0.0, %v4952
      %v4954 = vpop.f32.mrb[0].mxu0
      %4955 = vmatprep.mubr.bf16.mxu0 0
      %4956 = vmatmul.mubr.bf16.gmra.mrb[0].mxu0 %v4892
      %v4957 = vpop.f32.mrb[0].mxu0
      %v4958 = vadd.f32 0.0, %v4957
      %v4959 = vpop.f32.mrb[0].mxu0
      %v4960 = vpop.f32.mrb[0].mxu0
      %v4961 = vadd.f32 0.0, %v4960
      %v4962 = vpop.f32.mrb[0].mxu0
      %4963 = vmatprep.mubr.bf16.mxu0 0
      %4964 = vmatmul.mubr.bf16.gmra.mrb[0].mxu0 %v4895
      %v4965 = vpop.f32.mrb[0].mxu0
      %v4966 = vadd.f32 0.0, %v4965
      %v4967 = vpop.f32.mrb[0].mxu0
      %v4968 = vpop.f32.mrb[0].mxu0
      %v4969 = vadd.f32 0.0, %v4968
      %v4970 = vpop.f32.mrb[0].mxu0
      %4971 = vmatprep.mubr.bf16.mxu0 0
      %4972 = vmatmul.mubr.bf16.gmra.mrb[0].mxu0 %v4898
      %v4973 = vpop.f32.mrb[0].mxu0
      %v4974 = vadd.f32 0.0, %v4973
      %v4975 = vpop.f32.mrb[0].mxu0
      %v4976 = vpop.f32.mrb[0].mxu0
      %v4977 = vadd.f32 0.0, %v4976
      %v4978 = vpop.f32.mrb[0].mxu0
      %4979 = vmatprep.mubr.bf16.mxu0 0
      %4980 = vmatmul.mubr.bf16.gmra.mrb[0].mxu0 %v4901
      %v4981 = vpop.f32.mrb[0].mxu0
      %v4982 = vadd.f32 0.0, %v4981
      %v4983 = vpop.f32.mrb[0].mxu0
      %v4984 = vpop.f32.mrb[0].mxu0
      %v4985 = vadd.f32 0.0, %v4984
      %v4986 = vpop.f32.mrb[0].mxu0
      %4987 = vmatprep.mubr.bf16.mxu0 0
      %4988 = vmatmul.mubr.bf16.gmra.mrb[0].mxu0 %v4904
      %v4989 = vpop.f32.mrb[0].mxu0
      %v4990 = vadd.f32 0.0, %v4989
      %v4991 = vpop.f32.mrb[0].mxu0
      %v4992 = vpop.f32.mrb[0].mxu0
      %v4993 = vadd.f32 0.0, %v4992
      %v4994 = vpop.f32.mrb[0].mxu0
      %4995 = vmatprep.mubr.bf16.mxu0 0
      %4996 = vmatmul.mubr.bf16.gmra.mrb[0].mxu0 %v4907
      %v4997 = vpop.f32.mrb[0].mxu0
      %v4998 = vadd.f32 0.0, %v4997
      %v4999 = vpop.f32.mrb[0].mxu0
      %v5000 = vpop.f32.mrb[0].mxu0
      %v5001 = vadd.f32 0.0, %v5000
      %v5002 = vpop.f32.mrb[0].mxu0
      %5003 = vmatprep.mubr.bf16.mxu0 0
      %5004 = vmatmul.mubr.bf16.gmra.mrb[0].mxu0 %v4910
      %v5005 = vpop.f32.mrb[0].mxu0
      %v5006 = vadd.f32 0.0, %v5005
      %v5007 = vpop.f32.mrb[0].mxu0
      %v5008 = vpop.f32.mrb[0].mxu0
      %v5009 = vadd.f32 0.0, %v5008
      %v5010 = vpop.f32.mrb[0].mxu0
      %5011 = vdwg.mxu0
      %v5012 = vadd.f32 %v4721, %v4950
      %v5013 = vadd.f32 %v4724, %v4953
      %v5014 = vadd.f32 %v4729, %v4958
      %v5015 = vadd.f32 %v4732, %v4961
      %v5016 = vadd.f32 %v4737, %v4966
      %v5017 = vadd.f32 %v4740, %v4969
      %v5018 = vadd.f32 %v4745, %v4974
      %v5019 = vadd.f32 %v4748, %v4977
      %v5020 = vadd.f32 %v4753, %v4982
      %v5021 = vadd.f32 %v4756, %v4985
      %v5022 = vadd.f32 %v4761, %v4990
      %v5023 = vadd.f32 %v4764, %v4993
      %v5024 = vadd.f32 %v4769, %v4998
      %v5025 = vadd.f32 %v4772, %v5001
      %v5026 = vadd.f32 %v4777, %v5006
      %v5027 = vadd.f32 %v4780, %v5009
      %s5028 = scalar_lea.vmem [#allocation3], 12
      %v5029 = vld [vmem:[%s5028] sm:$0xf]
      %v5030 = vld [vmem:[%s5028 + $0x4] sm:$0xf]
      %v5031 = vld [vmem:[%s5028 + $0xc] sm:$0xf]
      %v5032 = vld [vmem:[%s5028 + $0x10] sm:$0xf]
      %v5033 = vld [vmem:[%s5028 + $0x18] sm:$0xf]
      %v5034 = vld [vmem:[%s5028 + $0x1c] sm:$0xf]
      %v5035 = vld [vmem:[%s5028 + $0x24] sm:$0xf]
      %v5036 = vld [vmem:[%s5028 + $0x28] sm:$0xf]
      %v5037 = vld [vmem:[%s5028 + $0x30] sm:$0xf]
      %v5038 = vld [vmem:[%s5028 + $0x34] sm:$0xf]
      %v5039 = vld [vmem:[%s5028 + $0x3c] sm:$0xf]
      %v5040 = vld [vmem:[%s5028 + $0x40] sm:$0xf]
      %v5041 = vld [vmem:[%s5028 + $0x48] sm:$0xf]
      %v5042 = vld [vmem:[%s5028 + $0x4c] sm:$0xf]
      %v5043 = vld [vmem:[%s5028 + $0x54] sm:$0xf]
      %v5044 = vld [vmem:[%s5028 + $0x58] sm:$0xf]
      %v5045 = vld [vmem:[%s3 + $0x4] sm:$0xc]
      %v5062 = vunpack.c.l.b16 %v5029
      %v5063 = vunpack.c.l.b16 %v5030
      %v5064 = vunpack.c.l.b16 %v5031
      %v5065 = vunpack.c.l.b16 %v5032
      %v5066 = vunpack.c.l.b16 %v5033
      %v5067 = vunpack.c.l.b16 %v5034
      %v5068 = vunpack.c.l.b16 %v5035
      %v5069 = vunpack.c.l.b16 %v5036
      %v5070 = vunpack.c.l.b16 %v5037
      %v5071 = vunpack.c.l.b16 %v5038
      %v5072 = vunpack.c.l.b16 %v5039
      %v5073 = vunpack.c.l.b16 %v5040
      %v5074 = vunpack.c.l.b16 %v5041
      %v5075 = vunpack.c.l.b16 %v5042
      %v5076 = vunpack.c.l.b16 %v5043
      %v5077 = vunpack.c.l.b16 %v5044
      %v5078 = vpack.c.b16 %v5063, %v5062
      %v5079 = vpack.c.b16 %v5065, %v5064
      %v5080 = vpack.c.b16 %v5067, %v5066
      %v5081 = vpack.c.b16 %v5069, %v5068
      %v5082 = vpack.c.b16 %v5071, %v5070
      %v5083 = vpack.c.b16 %v5073, %v5072
      %v5084 = vpack.c.b16 %v5075, %v5074
      %v5085 = vpack.c.b16 %v5077, %v5076
      %v5087 = vunpack.c.l.b16 %v5045
      %v5088 = vpack.c.b16 %v5087, %v5087
      %v5089 = vrot.slane %v5088, 2
      %v5091 = vsel %vm1118, %v5078, 0
      %v5094 = vsel %vm1118, %v5079, 0
      %v5097 = vsel %vm1118, %v5080, 0
      %v5100 = vsel %vm1118, %v5081, 0
      %v5103 = vsel %vm1118, %v5082, 0
      %v5106 = vsel %vm1118, %v5083, 0
      %v5109 = vsel %vm1118, %v5084, 0
      %v5112 = vsel %vm1118, %v5085, 0
      %v5115 = vsel %vm1149, %v5089, 0
      %5117 = vmatprep.subr.bf16.mxu0 0
      %5118 = vmatpush1.bf16.msra.mxu0 %v5115
      %5119 = vmatprep.subr.bf16.mxu0 0
      %5120 = vmatpush1.bf16.msra.mxu0 0
      %5121 = vmatprep.subr.bf16.mxu0 0
      %5122 = vmatpush1.bf16.msra.mxu0 0
      %5123 = vmatprep.subr.bf16.mxu0 0
      %5124 = vmatpush1.bf16.msra.mxu0 0
      %5125 = vmatprep.subr.bf16.mxu0 0
      %5126 = vmatpush1.bf16.msra.mxu0 0
      %5127 = vmatprep.subr.bf16.mxu0 0
      %5128 = vmatpush1.bf16.msra.mxu0 0
      %5129 = vmatprep.subr.bf16.mxu0 0
      %5130 = vmatpush1.bf16.msra.mxu0 0
      %5131 = vmatprep.subr.bf16.mxu0 0
      %5132 = vmatpush1.bf16.msra.mxu0 0
      %5133 = vmatprep.subr.bf16.mxu0 0
      %5134 = vmatpush1.bf16.msra.mxu0 0
      %5135 = vmatprep.subr.bf16.mxu0 0
      %5136 = vmatpush1.bf16.msra.mxu0 0
      %5137 = vmatprep.subr.bf16.mxu0 0
      %5138 = vmatpush1.bf16.msra.mxu0 0
      %5139 = vmatprep.subr.bf16.mxu0 0
      %5140 = vmatpush1.bf16.msra.mxu0 0
      %5141 = vmatprep.subr.bf16.mxu0 0
      %5142 = vmatpush1.bf16.msra.mxu0 0
      %5143 = vmatprep.subr.bf16.mxu0 0
      %5144 = vmatpush1.bf16.msra.mxu0 0
      %5145 = vmatprep.subr.bf16.mxu0 0
      %5146 = vmatpush1.bf16.msra.mxu0 0
      %5147 = vmatprep.subr.bf16.mxu0 0
      %5148 = vmatpush1.bf16.msra.mxu0 0
      %5149 = vmatprep.mubr.bf16.mxu0 0
      %5150 = vmatmul.mubr.bf16.gmra.mrb[0].mxu0 %v5091
      %v5151 = vpop.f32.mrb[0].mxu0
      %v5152 = vadd.f32 0.0, %v5151
      %v5153 = vpop.f32.mrb[0].mxu0
      %v5154 = vpop.f32.mrb[0].mxu0
      %v5155 = vadd.f32 0.0, %v5154
      %v5156 = vpop.f32.mrb[0].mxu0
      %5157 = vmatprep.mubr.bf16.mxu0 0
      %5158 = vmatmul.mubr.bf16.gmra.mrb[0].mxu0 %v5094
      %v5159 = vpop.f32.mrb[0].mxu0
      %v5160 = vadd.f32 0.0, %v5159
      %v5161 = vpop.f32.mrb[0].mxu0
      %v5162 = vpop.f32.mrb[0].mxu0
      %v5163 = vadd.f32 0.0, %v5162
      %v5164 = vpop.f32.mrb[0].mxu0
      %5165 = vmatprep.mubr.bf16.mxu0 0
      %5166 = vmatmul.mubr.bf16.gmra.mrb[0].mxu0 %v5097
      %v5167 = vpop.f32.mrb[0].mxu0
      %v5168 = vadd.f32 0.0, %v5167
      %v5169 = vpop.f32.mrb[0].mxu0
      %v5170 = vpop.f32.mrb[0].mxu0
      %v5171 = vadd.f32 0.0, %v5170
      %v5172 = vpop.f32.mrb[0].mxu0
      %5173 = vmatprep.mubr.bf16.mxu0 0
      %5174 = vmatmul.mubr.bf16.gmra.mrb[0].mxu0 %v5100
      %v5175 = vpop.f32.mrb[0].mxu0
      %v5176 = vadd.f32 0.0, %v5175
      %v5177 = vpop.f32.mrb[0].mxu0
      %v5178 = vpop.f32.mrb[0].mxu0
      %v5179 = vadd.f32 0.0, %v5178
      %v5180 = vpop.f32.mrb[0].mxu0
      %5181 = vmatprep.mubr.bf16.mxu0 0
      %5182 = vmatmul.mubr.bf16.gmra.mrb[0].mxu0 %v5103
      %v5183 = vpop.f32.mrb[0].mxu0
      %v5184 = vadd.f32 0.0, %v5183
      %v5185 = vpop.f32.mrb[0].mxu0
      %v5186 = vpop.f32.mrb[0].mxu0
      %v5187 = vadd.f32 0.0, %v5186
      %v5188 = vpop.f32.mrb[0].mxu0
      %5189 = vmatprep.mubr.bf16.mxu0 0
      %5190 = vmatmul.mubr.bf16.gmra.mrb[0].mxu0 %v5106
      %v5191 = vpop.f32.mrb[0].mxu0
      %v5192 = vadd.f32 0.0, %v5191
      %v5193 = vpop.f32.mrb[0].mxu0
      %v5194 = vpop.f32.mrb[0].mxu0
      %v5195 = vadd.f32 0.0, %v5194
      %v5196 = vpop.f32.mrb[0].mxu0
      %5197 = vmatprep.mubr.bf16.mxu0 0
      %5198 = vmatmul.mubr.bf16.gmra.mrb[0].mxu0 %v5109
      %v5199 = vpop.f32.mrb[0].mxu0
      %v5200 = vadd.f32 0.0, %v5199
      %v5201 = vpop.f32.mrb[0].mxu0
      %v5202 = vpop.f32.mrb[0].mxu0
      %v5203 = vadd.f32 0.0, %v5202
      %v5204 = vpop.f32.mrb[0].mxu0
      %5205 = vmatprep.mubr.bf16.mxu0 0
      %5206 = vmatmul.mubr.bf16.gmra.mrb[0].mxu0 %v5112
      %v5207 = vpop.f32.mrb[0].mxu0
      %v5208 = vadd.f32 0.0, %v5207
      %v5209 = vpop.f32.mrb[0].mxu0
      %v5210 = vpop.f32.mrb[0].mxu0
      %v5211 = vadd.f32 0.0, %v5210
      %v5212 = vpop.f32.mrb[0].mxu0
      %5213 = vdwg.mxu0
      %v5214 = vadd.f32 %v5012, %v5152
      %v5215 = vadd.f32 %v5013, %v5155
      %v5216 = vadd.f32 %v5014, %v5160
      %v5217 = vadd.f32 %v5015, %v5163
      %v5218 = vadd.f32 %v5016, %v5168
      %v5219 = vadd.f32 %v5017, %v5171
      %v5220 = vadd.f32 %v5018, %v5176
      %v5221 = vadd.f32 %v5019, %v5179
      %v5222 = vadd.f32 %v5020, %v5184
      %v5223 = vadd.f32 %v5021, %v5187
      %v5224 = vadd.f32 %v5022, %v5192
      %v5225 = vadd.f32 %v5023, %v5195
      %v5226 = vadd.f32 %v5024, %v5200
      %v5227 = vadd.f32 %v5025, %v5203
      %v5228 = vadd.f32 %v5026, %v5208
      %v5229 = vadd.f32 %v5027, %v5211
      %v5230 = vld [vmem:[%s5028] sm:$0xf]
      %v5231 = vld [vmem:[%s5028 + $0x4] sm:$0xf]
      %v5232 = vld [vmem:[%s5028 + $0x8] sm:$0x1]
      %v5233 = vld [vmem:[%s5028 + $0xc] sm:$0xf]
      %v5234 = vld [vmem:[%s5028 + $0x10] sm:$0xf]
      %v5235 = vld [vmem:[%s5028 + $0x14] sm:$0x1]
      %v5236 = vld [vmem:[%s5028 + $0x18] sm:$0xf]
      %v5237 = vld [vmem:[%s5028 + $0x1c] sm:$0xf]
      %v5238 = vld [vmem:[%s5028 + $0x20] sm:$0x1]
      %v5239 = vld [vmem:[%s5028 + $0x24] sm:$0xf]
      %v5240 = vld [vmem:[%s5028 + $0x28] sm:$0xf]
      %v5241 = vld [vmem:[%s5028 + $0x2c] sm:$0x1]
      %v5242 = vld [vmem:[%s5028 + $0x30] sm:$0xf]
      %v5243 = vld [vmem:[%s5028 + $0x34] sm:$0xf]
      %v5244 = vld [vmem:[%s5028 + $0x38] sm:$0x1]
      %v5245 = vld [vmem:[%s5028 + $0x3c] sm:$0xf]
      %v5246 = vld [vmem:[%s5028 + $0x40] sm:$0xf]
      %v5247 = vld [vmem:[%s5028 + $0x44] sm:$0x1]
      %v5248 = vld [vmem:[%s5028 + $0x48] sm:$0xf]
      %v5249 = vld [vmem:[%s5028 + $0x4c] sm:$0xf]
      %v5250 = vld [vmem:[%s5028 + $0x50] sm:$0x1]
      %v5251 = vld [vmem:[%s5028 + $0x54] sm:$0xf]
      %v5252 = vld [vmem:[%s5028 + $0x58] sm:$0xf]
      %v5253 = vld [vmem:[%s5028 + $0x5c] sm:$0x1]
      %v5255 = vshrl.u32 %v5230, 16
      %v5257 = vrot.slane %v5255, 4
      %v5258 = vshll.u32 %v5230, 16
      %v5260 = vrot.slane %v5258, 5
      %v5261 = vor.u32 %v5257, %v5260
      %v5262 = vrot.slane %v5261, 4
      %v5264 = vshll.u32 %v5231, 16
      %v5266 = vrot.slane %v5264, 5
      %v5267 = vsel %vm842, %v5262, %v5266
      %v5268 = vshrl.u32 %v5231, 16
      %v5270 = vrot.slane %v5268, 4
      %v5271 = vor.u32 %v5270, %v5266
      %v5272 = vrot.slane %v5271, 4
      %v5274 = vshll.u32 %v5232, 16
      %v5276 = vrot.slane %v5274, 5
      %v5277 = vsel %vm842, %v5272, %v5276
      %v5279 = vshrl.u32 %v5233, 16
      %v5281 = vrot.slane %v5279, 4
      %v5282 = vshll.u32 %v5233, 16
      %v5284 = vrot.slane %v5282, 5
      %v5285 = vor.u32 %v5281, %v5284
      %v5286 = vrot.slane %v5285, 4
      %v5288 = vshll.u32 %v5234, 16
      %v5290 = vrot.slane %v5288, 5
      %v5291 = vsel %vm842, %v5286, %v5290
      %v5292 = vshrl.u32 %v5234, 16
      %v5294 = vrot.slane %v5292, 4
      %v5295 = vor.u32 %v5294, %v5290
      %v5296 = vrot.slane %v5295, 4
      %v5298 = vshll.u32 %v5235, 16
      %v5300 = vrot.slane %v5298, 5
      %v5301 = vsel %vm842, %v5296, %v5300
      %v5303 = vshrl.u32 %v5236, 16
      %v5305 = vrot.slane %v5303, 4
      %v5306 = vshll.u32 %v5236, 16
      %v5308 = vrot.slane %v5306, 5
      %v5309 = vor.u32 %v5305, %v5308
      %v5310 = vrot.slane %v5309, 4
      %v5312 = vshll.u32 %v5237, 16
      %v5314 = vrot.slane %v5312, 5
      %v5315 = vsel %vm842, %v5310, %v5314
      %v5316 = vshrl.u32 %v5237, 16
      %v5318 = vrot.slane %v5316, 4
      %v5319 = vor.u32 %v5318, %v5314
      %v5320 = vrot.slane %v5319, 4
      %v5322 = vshll.u32 %v5238, 16
      %v5324 = vrot.slane %v5322, 5
      %v5325 = vsel %vm842, %v5320, %v5324
      %v5327 = vshrl.u32 %v5239, 16
      %v5329 = vrot.slane %v5327, 4
      %v5330 = vshll.u32 %v5239, 16
      %v5332 = vrot.slane %v5330, 5
      %v5333 = vor.u32 %v5329, %v5332
      %v5334 = vrot.slane %v5333, 4
      %v5336 = vshll.u32 %v5240, 16
      %v5338 = vrot.slane %v5336, 5
      %v5339 = vsel %vm842, %v5334, %v5338
      %v5340 = vshrl.u32 %v5240, 16
      %v5342 = vrot.slane %v5340, 4
      %v5343 = vor.u32 %v5342, %v5338
      %v5344 = vrot.slane %v5343, 4
      %v5346 = vshll.u32 %v5241, 16
      %v5348 = vrot.slane %v5346, 5
      %v5349 = vsel %vm842, %v5344, %v5348
      %v5351 = vshrl.u32 %v5242, 16
      %v5353 = vrot.slane %v5351, 4
      %v5354 = vshll.u32 %v5242, 16
      %v5356 = vrot.slane %v5354, 5
      %v5357 = vor.u32 %v5353, %v5356
      %v5358 = vrot.slane %v5357, 4
      %v5360 = vshll.u32 %v5243, 16
      %v5362 = vrot.slane %v5360, 5
      %v5363 = vsel %vm842, %v5358, %v5362
      %v5364 = vshrl.u32 %v5243, 16
      %v5366 = vrot.slane %v5364, 4
      %v5367 = vor.u32 %v5366, %v5362
      %v5368 = vrot.slane %v5367, 4
      %v5370 = vshll.u32 %v5244, 16
      %v5372 = vrot.slane %v5370, 5
      %v5373 = vsel %vm842, %v5368, %v5372
      %v5375 = vshrl.u32 %v5245, 16
      %v5377 = vrot.slane %v5375, 4
      %v5378 = vshll.u32 %v5245, 16
      %v5380 = vrot.slane %v5378, 5
      %v5381 = vor.u32 %v5377, %v5380
      %v5382 = vrot.slane %v5381, 4
      %v5384 = vshll.u32 %v5246, 16
      %v5386 = vrot.slane %v5384, 5
      %v5387 = vsel %vm842, %v5382, %v5386
      %v5388 = vshrl.u32 %v5246, 16
      %v5390 = vrot.slane %v5388, 4
      %v5391 = vor.u32 %v5390, %v5386
      %v5392 = vrot.slane %v5391, 4
      %v5394 = vshll.u32 %v5247, 16
      %v5396 = vrot.slane %v5394, 5
      %v5397 = vsel %vm842, %v5392, %v5396
      %v5399 = vshrl.u32 %v5248, 16
      %v5401 = vrot.slane %v5399, 4
      %v5402 = vshll.u32 %v5248, 16
      %v5404 = vrot.slane %v5402, 5
      %v5405 = vor.u32 %v5401, %v5404
      %v5406 = vrot.slane %v5405, 4
      %v5408 = vshll.u32 %v5249, 16
      %v5410 = vrot.slane %v5408, 5
      %v5411 = vsel %vm842, %v5406, %v5410
      %v5412 = vshrl.u32 %v5249, 16
      %v5414 = vrot.slane %v5412, 4
      %v5415 = vor.u32 %v5414, %v5410
      %v5416 = vrot.slane %v5415, 4
      %v5418 = vshll.u32 %v5250, 16
      %v5420 = vrot.slane %v5418, 5
      %v5421 = vsel %vm842, %v5416, %v5420
      %v5423 = vshrl.u32 %v5251, 16
      %v5425 = vrot.slane %v5423, 4
      %v5426 = vshll.u32 %v5251, 16
      %v5428 = vrot.slane %v5426, 5
      %v5429 = vor.u32 %v5425, %v5428
      %v5430 = vrot.slane %v5429, 4
      %v5432 = vshll.u32 %v5252, 16
      %v5434 = vrot.slane %v5432, 5
      %v5435 = vsel %vm842, %v5430, %v5434
      %v5436 = vshrl.u32 %v5252, 16
      %v5438 = vrot.slane %v5436, 4
      %v5439 = vor.u32 %v5438, %v5434
      %v5440 = vrot.slane %v5439, 4
      %v5442 = vshll.u32 %v5253, 16
      %v5444 = vrot.slane %v5442, 5
      %v5445 = vsel %vm842, %v5440, %v5444
      %v5446 = vld [vmem:[%s3 + $0x8] sm:$0x3]
      %v5447 = vunpack.c.l.b16 %v5267
      %v5448 = vunpack.c.l.b16 %v5277
      %v5449 = vunpack.c.l.b16 %v5291
      %v5450 = vunpack.c.l.b16 %v5301
      %v5451 = vunpack.c.l.b16 %v5315
      %v5452 = vunpack.c.l.b16 %v5325
      %v5453 = vunpack.c.l.b16 %v5339
      %v5454 = vunpack.c.l.b16 %v5349
      %v5455 = vunpack.c.l.b16 %v5363
      %v5456 = vunpack.c.l.b16 %v5373
      %v5457 = vunpack.c.l.b16 %v5387
      %v5458 = vunpack.c.l.b16 %v5397
      %v5459 = vunpack.c.l.b16 %v5411
      %v5460 = vunpack.c.l.b16 %v5421
      %v5461 = vunpack.c.l.b16 %v5435
      %v5462 = vunpack.c.l.b16 %v5445
      %v5463 = vpack.c.b16 %v5448, %v5447
      %v5464 = vpack.c.b16 %v5450, %v5449
      %v5465 = vpack.c.b16 %v5452, %v5451
      %v5466 = vpack.c.b16 %v5454, %v5453
      %v5467 = vpack.c.b16 %v5456, %v5455
      %v5468 = vpack.c.b16 %v5458, %v5457
      %v5469 = vpack.c.b16 %v5460, %v5459
      %v5470 = vpack.c.b16 %v5462, %v5461
      %v5472 = vsel %vm1118, %v5463, 0
      %v5475 = vsel %vm1118, %v5464, 0
      %v5478 = vsel %vm1118, %v5465, 0
      %v5481 = vsel %vm1118, %v5466, 0
      %v5484 = vsel %vm1118, %v5467, 0
      %v5487 = vsel %vm1118, %v5468, 0
      %v5490 = vsel %vm1118, %v5469, 0
      %v5493 = vsel %vm1118, %v5470, 0
      %v5496 = vsel %vm1149, %v5446, 0
      %5498 = vmatprep.subr.bf16.mxu0 0
      %5499 = vmatpush1.bf16.msra.mxu0 %v5496
      %5500 = vmatprep.subr.bf16.mxu0 0
      %5501 = vmatpush1.bf16.msra.mxu0 0
      %5502 = vmatprep.subr.bf16.mxu0 0
      %5503 = vmatpush1.bf16.msra.mxu0 0
      %5504 = vmatprep.subr.bf16.mxu0 0
      %5505 = vmatpush1.bf16.msra.mxu0 0
      %5506 = vmatprep.subr.bf16.mxu0 0
      %5507 = vmatpush1.bf16.msra.mxu0 0
      %5508 = vmatprep.subr.bf16.mxu0 0
      %5509 = vmatpush1.bf16.msra.mxu0 0
      %5510 = vmatprep.subr.bf16.mxu0 0
      %5511 = vmatpush1.bf16.msra.mxu0 0
      %5512 = vmatprep.subr.bf16.mxu0 0
      %5513 = vmatpush1.bf16.msra.mxu0 0
      %5514 = vmatprep.subr.bf16.mxu0 0
      %5515 = vmatpush1.bf16.msra.mxu0 0
      %5516 = vmatprep.subr.bf16.mxu0 0
      %5517 = vmatpush1.bf16.msra.mxu0 0
      %5518 = vmatprep.subr.bf16.mxu0 0
      %5519 = vmatpush1.bf16.msra.mxu0 0
      %5520 = vmatprep.subr.bf16.mxu0 0
      %5521 = vmatpush1.bf16.msra.mxu0 0
      %5522 = vmatprep.subr.bf16.mxu0 0
      %5523 = vmatpush1.bf16.msra.mxu0 0
      %5524 = vmatprep.subr.bf16.mxu0 0
      %5525 = vmatpush1.bf16.msra.mxu0 0
      %5526 = vmatprep.subr.bf16.mxu0 0
      %5527 = vmatpush1.bf16.msra.mxu0 0
      %5528 = vmatprep.subr.bf16.mxu0 0
      %5529 = vmatpush1.bf16.msra.mxu0 0
      %5530 = vmatprep.mubr.bf16.mxu0 0
      %5531 = vmatmul.mubr.bf16.gmra.mrb[0].mxu0 %v5472
      %v5532 = vpop.f32.mrb[0].mxu0
      %v5533 = vadd.f32 0.0, %v5532
      %v5534 = vpop.f32.mrb[0].mxu0
      %v5535 = vpop.f32.mrb[0].mxu0
      %v5536 = vadd.f32 0.0, %v5535
      %v5537 = vpop.f32.mrb[0].mxu0
      %5538 = vmatprep.mubr.bf16.mxu0 0
      %5539 = vmatmul.mubr.bf16.gmra.mrb[0].mxu0 %v5475
      %v5540 = vpop.f32.mrb[0].mxu0
      %v5541 = vadd.f32 0.0, %v5540
      %v5542 = vpop.f32.mrb[0].mxu0
      %v5543 = vpop.f32.mrb[0].mxu0
      %v5544 = vadd.f32 0.0, %v5543
      %v5545 = vpop.f32.mrb[0].mxu0
      %5546 = vmatprep.mubr.bf16.mxu0 0
      %5547 = vmatmul.mubr.bf16.gmra.mrb[0].mxu0 %v5478
      %v5548 = vpop.f32.mrb[0].mxu0
      %v5549 = vadd.f32 0.0, %v5548
      %v5550 = vpop.f32.mrb[0].mxu0
      %v5551 = vpop.f32.mrb[0].mxu0
      %v5552 = vadd.f32 0.0, %v5551
      %v5553 = vpop.f32.mrb[0].mxu0
      %5554 = vmatprep.mubr.bf16.mxu0 0
      %5555 = vmatmul.mubr.bf16.gmra.mrb[0].mxu0 %v5481
      %v5556 = vpop.f32.mrb[0].mxu0
      %v5557 = vadd.f32 0.0, %v5556
      %v5558 = vpop.f32.mrb[0].mxu0
      %v5559 = vpop.f32.mrb[0].mxu0
      %v5560 = vadd.f32 0.0, %v5559
      %v5561 = vpop.f32.mrb[0].mxu0
      %5562 = vmatprep.mubr.bf16.mxu0 0
      %5563 = vmatmul.mubr.bf16.gmra.mrb[0].mxu0 %v5484
      %v5564 = vpop.f32.mrb[0].mxu0
      %v5565 = vadd.f32 0.0, %v5564
      %v5566 = vpop.f32.mrb[0].mxu0
      %v5567 = vpop.f32.mrb[0].mxu0
      %v5568 = vadd.f32 0.0, %v5567
      %v5569 = vpop.f32.mrb[0].mxu0
      %5570 = vmatprep.mubr.bf16.mxu0 0
      %5571 = vmatmul.mubr.bf16.gmra.mrb[0].mxu0 %v5487
      %v5572 = vpop.f32.mrb[0].mxu0
      %v5573 = vadd.f32 0.0, %v5572
      %v5574 = vpop.f32.mrb[0].mxu0
      %v5575 = vpop.f32.mrb[0].mxu0
      %v5576 = vadd.f32 0.0, %v5575
      %v5577 = vpop.f32.mrb[0].mxu0
      %5578 = vmatprep.mubr.bf16.mxu0 0
      %5579 = vmatmul.mubr.bf16.gmra.mrb[0].mxu0 %v5490
      %v5580 = vpop.f32.mrb[0].mxu0
      %v5581 = vadd.f32 0.0, %v5580
      %v5582 = vpop.f32.mrb[0].mxu0
      %v5583 = vpop.f32.mrb[0].mxu0
      %v5584 = vadd.f32 0.0, %v5583
      %v5585 = vpop.f32.mrb[0].mxu0
      %5586 = vmatprep.mubr.bf16.mxu0 0
      %5587 = vmatmul.mubr.bf16.gmra.mrb[0].mxu0 %v5493
      %v5588 = vpop.f32.mrb[0].mxu0
      %v5589 = vadd.f32 0.0, %v5588
      %v5590 = vpop.f32.mrb[0].mxu0
      %v5591 = vpop.f32.mrb[0].mxu0
      %v5592 = vadd.f32 0.0, %v5591
      %v5593 = vpop.f32.mrb[0].mxu0
      %5594 = vdwg.mxu0
      %v5595 = vadd.f32 %v5214, %v5533
      %v5596 = vadd.f32 %v5215, %v5536
      %v5597 = vadd.f32 %v5216, %v5541
      %v5598 = vadd.f32 %v5217, %v5544
      %v5599 = vadd.f32 %v5218, %v5549
      %v5600 = vadd.f32 %v5219, %v5552
      %v5601 = vadd.f32 %v5220, %v5557
      %v5602 = vadd.f32 %v5221, %v5560
      %v5603 = vadd.f32 %v5222, %v5565
      %v5604 = vadd.f32 %v5223, %v5568
      %v5605 = vadd.f32 %v5224, %v5573
      %v5606 = vadd.f32 %v5225, %v5576
      %v5607 = vadd.f32 %v5226, %v5581
      %v5608 = vadd.f32 %v5227, %v5584
      %v5609 = vadd.f32 %v5228, %v5589
      %v5610 = vadd.f32 %v5229, %v5592
      %v5611 = vld [vmem:[%s5028] sm:$0xe]
      %v5612 = vld [vmem:[%s5028 + $0xc] sm:$0xe]
      %v5613 = vld [vmem:[%s5028 + $0x18] sm:$0xe]
      %v5614 = vld [vmem:[%s5028 + $0x24] sm:$0xe]
      %v5615 = vld [vmem:[%s5028 + $0x30] sm:$0xe]
      %v5616 = vld [vmem:[%s5028 + $0x3c] sm:$0xe]
      %v5617 = vld [vmem:[%s5028 + $0x48] sm:$0xe]
      %v5618 = vld [vmem:[%s5028 + $0x54] sm:$0xe]
      %v5643 = vrot.slane %v5611, 5
      %v5644 = vrot.slane %v5643, 4
      %v5645 = vrot.slane %v5231, 5
      %v5646 = vsel %vm1494, %v5644, %v5645
      %v5647 = vrot.slane %v5645, 4
      %v5648 = vrot.slane %v5232, 5
      %v5649 = vsel %vm1494, %v5647, %v5648
      %v5650 = vrot.slane %v5612, 5
      %v5651 = vrot.slane %v5650, 4
      %v5652 = vrot.slane %v5234, 5
      %v5653 = vsel %vm1494, %v5651, %v5652
      %v5654 = vrot.slane %v5652, 4
      %v5655 = vrot.slane %v5235, 5
      %v5656 = vsel %vm1494, %v5654, %v5655
      %v5657 = vrot.slane %v5613, 5
      %v5658 = vrot.slane %v5657, 4
      %v5659 = vrot.slane %v5237, 5
      %v5660 = vsel %vm1494, %v5658, %v5659
      %v5661 = vrot.slane %v5659, 4
      %v5662 = vrot.slane %v5238, 5
      %v5663 = vsel %vm1494, %v5661, %v5662
      %v5664 = vrot.slane %v5614, 5
      %v5665 = vrot.slane %v5664, 4
      %v5666 = vrot.slane %v5240, 5
      %v5667 = vsel %vm1494, %v5665, %v5666
      %v5668 = vrot.slane %v5666, 4
      %v5669 = vrot.slane %v5241, 5
      %v5670 = vsel %vm1494, %v5668, %v5669
      %v5671 = vrot.slane %v5615, 5
      %v5672 = vrot.slane %v5671, 4
      %v5673 = vrot.slane %v5243, 5
      %v5674 = vsel %vm1494, %v5672, %v5673
      %v5675 = vrot.slane %v5673, 4
      %v5676 = vrot.slane %v5244, 5
      %v5677 = vsel %vm1494, %v5675, %v5676
      %v5678 = vrot.slane %v5616, 5
      %v5679 = vrot.slane %v5678, 4
      %v5680 = vrot.slane %v5246, 5
      %v5681 = vsel %vm1494, %v5679, %v5680
      %v5682 = vrot.slane %v5680, 4
      %v5683 = vrot.slane %v5247, 5
      %v5684 = vsel %vm1494, %v5682, %v5683
      %v5685 = vrot.slane %v5617, 5
      %v5686 = vrot.slane %v5685, 4
      %v5687 = vrot.slane %v5249, 5
      %v5688 = vsel %vm1494, %v5686, %v5687
      %v5689 = vrot.slane %v5687, 4
      %v5690 = vrot.slane %v5250, 5
      %v5691 = vsel %vm1494, %v5689, %v5690
      %v5692 = vrot.slane %v5618, 5
      %v5693 = vrot.slane %v5692, 4
      %v5694 = vrot.slane %v5252, 5
      %v5695 = vsel %vm1494, %v5693, %v5694
      %v5696 = vrot.slane %v5694, 4
      %v5697 = vrot.slane %v5253, 5
      %v5698 = vsel %vm1494, %v5696, %v5697
      %v5699 = vld [vmem:[%s3 + $0x8] sm:$0xc]
      %v5700 = vunpack.c.l.b16 %v5646
      %v5701 = vunpack.c.l.b16 %v5649
      %v5702 = vunpack.c.l.b16 %v5653
      %v5703 = vunpack.c.l.b16 %v5656
      %v5704 = vunpack.c.l.b16 %v5660
      %v5705 = vunpack.c.l.b16 %v5663
      %v5706 = vunpack.c.l.b16 %v5667
      %v5707 = vunpack.c.l.b16 %v5670
      %v5708 = vunpack.c.l.b16 %v5674
      %v5709 = vunpack.c.l.b16 %v5677
      %v5710 = vunpack.c.l.b16 %v5681
      %v5711 = vunpack.c.l.b16 %v5684
      %v5712 = vunpack.c.l.b16 %v5688
      %v5713 = vunpack.c.l.b16 %v5691
      %v5714 = vunpack.c.l.b16 %v5695
      %v5715 = vunpack.c.l.b16 %v5698
      %v5716 = vpack.c.b16 %v5701, %v5700
      %v5717 = vpack.c.b16 %v5703, %v5702
      %v5718 = vpack.c.b16 %v5705, %v5704
      %v5719 = vpack.c.b16 %v5707, %v5706
      %v5720 = vpack.c.b16 %v5709, %v5708
      %v5721 = vpack.c.b16 %v5711, %v5710
      %v5722 = vpack.c.b16 %v5713, %v5712
      %v5723 = vpack.c.b16 %v5715, %v5714
      %v5725 = vunpack.c.l.b16 %v5699
      %v5726 = vpack.c.b16 %v5725, %v5725
      %v5727 = vrot.slane %v5726, 2
      %v5729 = vsel %vm1118, %v5716, 0
      %v5732 = vsel %vm1118, %v5717, 0
      %v5735 = vsel %vm1118, %v5718, 0
      %v5738 = vsel %vm1118, %v5719, 0
      %v5741 = vsel %vm1118, %v5720, 0
      %v5744 = vsel %vm1118, %v5721, 0
      %v5747 = vsel %vm1118, %v5722, 0
      %v5750 = vsel %vm1118, %v5723, 0
      %v5753 = vsel %vm1149, %v5727, 0
      %5755 = vmatprep.subr.bf16.mxu0 0
      %5756 = vmatpush1.bf16.msra.mxu0 %v5753
      %5757 = vmatprep.subr.bf16.mxu0 0
      %5758 = vmatpush1.bf16.msra.mxu0 0
      %5759 = vmatprep.subr.bf16.mxu0 0
      %5760 = vmatpush1.bf16.msra.mxu0 0
      %5761 = vmatprep.subr.bf16.mxu0 0
      %5762 = vmatpush1.bf16.msra.mxu0 0
      %5763 = vmatprep.subr.bf16.mxu0 0
      %5764 = vmatpush1.bf16.msra.mxu0 0
      %5765 = vmatprep.subr.bf16.mxu0 0
      %5766 = vmatpush1.bf16.msra.mxu0 0
      %5767 = vmatprep.subr.bf16.mxu0 0
      %5768 = vmatpush1.bf16.msra.mxu0 0
      %5769 = vmatprep.subr.bf16.mxu0 0
      %5770 = vmatpush1.bf16.msra.mxu0 0
      %5771 = vmatprep.subr.bf16.mxu0 0
      %5772 = vmatpush1.bf16.msra.mxu0 0
      %5773 = vmatprep.subr.bf16.mxu0 0
      %5774 = vmatpush1.bf16.msra.mxu0 0
      %5775 = vmatprep.subr.bf16.mxu0 0
      %5776 = vmatpush1.bf16.msra.mxu0 0
      %5777 = vmatprep.subr.bf16.mxu0 0
      %5778 = vmatpush1.bf16.msra.mxu0 0
      %5779 = vmatprep.subr.bf16.mxu0 0
      %5780 = vmatpush1.bf16.msra.mxu0 0
      %5781 = vmatprep.subr.bf16.mxu0 0
      %5782 = vmatpush1.bf16.msra.mxu0 0
      %5783 = vmatprep.subr.bf16.mxu0 0
      %5784 = vmatpush1.bf16.msra.mxu0 0
      %5785 = vmatprep.subr.bf16.mxu0 0
      %5786 = vmatpush1.bf16.msra.mxu0 0
      %5787 = vmatprep.mubr.bf16.mxu0 0
      %5788 = vmatmul.mubr.bf16.gmra.mrb[0].mxu0 %v5729
      %v5789 = vpop.f32.mrb[0].mxu0
      %v5790 = vadd.f32 0.0, %v5789
      %v5791 = vpop.f32.mrb[0].mxu0
      %v5792 = vpop.f32.mrb[0].mxu0
      %v5793 = vadd.f32 0.0, %v5792
      %v5794 = vpop.f32.mrb[0].mxu0
      %5795 = vmatprep.mubr.bf16.mxu0 0
      %5796 = vmatmul.mubr.bf16.gmra.mrb[0].mxu0 %v5732
      %v5797 = vpop.f32.mrb[0].mxu0
      %v5798 = vadd.f32 0.0, %v5797
      %v5799 = vpop.f32.mrb[0].mxu0
      %v5800 = vpop.f32.mrb[0].mxu0
      %v5801 = vadd.f32 0.0, %v5800
      %v5802 = vpop.f32.mrb[0].mxu0
      %5803 = vmatprep.mubr.bf16.mxu0 0
      %5804 = vmatmul.mubr.bf16.gmra.mrb[0].mxu0 %v5735
      %v5805 = vpop.f32.mrb[0].mxu0
      %v5806 = vadd.f32 0.0, %v5805
      %v5807 = vpop.f32.mrb[0].mxu0
      %v5808 = vpop.f32.mrb[0].mxu0
      %v5809 = vadd.f32 0.0, %v5808
      %v5810 = vpop.f32.mrb[0].mxu0
      %5811 = vmatprep.mubr.bf16.mxu0 0
      %5812 = vmatmul.mubr.bf16.gmra.mrb[0].mxu0 %v5738
      %v5813 = vpop.f32.mrb[0].mxu0
      %v5814 = vadd.f32 0.0, %v5813
      %v5815 = vpop.f32.mrb[0].mxu0
      %v5816 = vpop.f32.mrb[0].mxu0
      %v5817 = vadd.f32 0.0, %v5816
      %v5818 = vpop.f32.mrb[0].mxu0
      %5819 = vmatprep.mubr.bf16.mxu0 0
      %5820 = vmatmul.mubr.bf16.gmra.mrb[0].mxu0 %v5741
      %v5821 = vpop.f32.mrb[0].mxu0
      %v5822 = vadd.f32 0.0, %v5821
      %v5823 = vpop.f32.mrb[0].mxu0
      %v5824 = vpop.f32.mrb[0].mxu0
      %v5825 = vadd.f32 0.0, %v5824
      %v5826 = vpop.f32.mrb[0].mxu0
      %5827 = vmatprep.mubr.bf16.mxu0 0
      %5828 = vmatmul.mubr.bf16.gmra.mrb[0].mxu0 %v5744
      %v5829 = vpop.f32.mrb[0].mxu0
      %v5830 = vadd.f32 0.0, %v5829
      %v5831 = vpop.f32.mrb[0].mxu0
      %v5832 = vpop.f32.mrb[0].mxu0
      %v5833 = vadd.f32 0.0, %v5832
      %v5834 = vpop.f32.mrb[0].mxu0
      %5835 = vmatprep.mubr.bf16.mxu0 0
      %5836 = vmatmul.mubr.bf16.gmra.mrb[0].mxu0 %v5747
      %v5837 = vpop.f32.mrb[0].mxu0
      %v5838 = vadd.f32 0.0, %v5837
      %v5839 = vpop.f32.mrb[0].mxu0
      %v5840 = vpop.f32.mrb[0].mxu0
      %v5841 = vadd.f32 0.0, %v5840
      %v5842 = vpop.f32.mrb[0].mxu0
      %5843 = vmatprep.mubr.bf16.mxu0 0
      %5844 = vmatmul.mubr.bf16.gmra.mrb[0].mxu0 %v5750
      %v5845 = vpop.f32.mrb[0].mxu0
      %v5846 = vadd.f32 0.0, %v5845
      %v5847 = vpop.f32.mrb[0].mxu0
      %v5848 = vpop.f32.mrb[0].mxu0
      %v5849 = vadd.f32 0.0, %v5848
      %v5850 = vpop.f32.mrb[0].mxu0
      %5851 = vdwg.mxu0
      %v5852 = vadd.f32 %v5595, %v5790
      %v5853 = vadd.f32 %v5596, %v5793
      %v5854 = vadd.f32 %v5597, %v5798
      %v5855 = vadd.f32 %v5598, %v5801
      %v5856 = vadd.f32 %v5599, %v5806
      %v5857 = vadd.f32 %v5600, %v5809
      %v5858 = vadd.f32 %v5601, %v5814
      %v5859 = vadd.f32 %v5602, %v5817
      %v5860 = vadd.f32 %v5603, %v5822
      %v5861 = vadd.f32 %v5604, %v5825
      %v5862 = vadd.f32 %v5605, %v5830
      %v5863 = vadd.f32 %v5606, %v5833
      %v5864 = vadd.f32 %v5607, %v5838
      %v5865 = vadd.f32 %v5608, %v5841
      %v5866 = vadd.f32 %v5609, %v5846
      %v5867 = vadd.f32 %v5610, %v5849
      %s5868 = scalar_lea.vmem [#allocation3], 24
      %v5869 = vld [vmem:[%s5868] sm:$0xf]
      %v5870 = vld [vmem:[%s5868 + $0x4] sm:$0xf]
      %v5871 = vld [vmem:[%s5868 + $0xc] sm:$0xf]
      %v5872 = vld [vmem:[%s5868 + $0x10] sm:$0xf]
      %v5873 = vld [vmem:[%s5868 + $0x18] sm:$0xf]
      %v5874 = vld [vmem:[%s5868 + $0x1c] sm:$0xf]
      %v5875 = vld [vmem:[%s5868 + $0x24] sm:$0xf]
      %v5876 = vld [vmem:[%s5868 + $0x28] sm:$0xf]
      %v5877 = vld [vmem:[%s5868 + $0x30] sm:$0xf]
      %v5878 = vld [vmem:[%s5868 + $0x34] sm:$0xf]
      %v5879 = vld [vmem:[%s5868 + $0x3c] sm:$0xf]
      %v5880 = vld [vmem:[%s5868 + $0x40] sm:$0xf]
      %v5881 = vld [vmem:[%s5868 + $0x48] sm:$0xf]
      %v5882 = vld [vmem:[%s5868 + $0x4c] sm:$0xf]
      %v5883 = vld [vmem:[%s5868 + $0x54] sm:$0xf]
      %v5884 = vld [vmem:[%s5868 + $0x58] sm:$0xf]
      %v5885 = vld [vmem:[%s3 + $0xc] sm:$0x3]
      %v5902 = vunpack.c.l.b16 %v5869
      %v5903 = vunpack.c.l.b16 %v5870
      %v5904 = vunpack.c.l.b16 %v5871
      %v5905 = vunpack.c.l.b16 %v5872
      %v5906 = vunpack.c.l.b16 %v5873
      %v5907 = vunpack.c.l.b16 %v5874
      %v5908 = vunpack.c.l.b16 %v5875
      %v5909 = vunpack.c.l.b16 %v5876
      %v5910 = vunpack.c.l.b16 %v5877
      %v5911 = vunpack.c.l.b16 %v5878
      %v5912 = vunpack.c.l.b16 %v5879
      %v5913 = vunpack.c.l.b16 %v5880
      %v5914 = vunpack.c.l.b16 %v5881
      %v5915 = vunpack.c.l.b16 %v5882
      %v5916 = vunpack.c.l.b16 %v5883
      %v5917 = vunpack.c.l.b16 %v5884
      %v5918 = vpack.c.b16 %v5903, %v5902
      %v5919 = vpack.c.b16 %v5905, %v5904
      %v5920 = vpack.c.b16 %v5907, %v5906
      %v5921 = vpack.c.b16 %v5909, %v5908
      %v5922 = vpack.c.b16 %v5911, %v5910
      %v5923 = vpack.c.b16 %v5913, %v5912
      %v5924 = vpack.c.b16 %v5915, %v5914
      %v5925 = vpack.c.b16 %v5917, %v5916
      %v5927 = vsel %vm1118, %v5918, 0
      %v5930 = vsel %vm1118, %v5919, 0
      %v5933 = vsel %vm1118, %v5920, 0
      %v5936 = vsel %vm1118, %v5921, 0
      %v5939 = vsel %vm1118, %v5922, 0
      %v5942 = vsel %vm1118, %v5923, 0
      %v5945 = vsel %vm1118, %v5924, 0
      %v5948 = vsel %vm1118, %v5925, 0
      %v5951 = vsel %vm1149, %v5885, 0
      %5953 = vmatprep.subr.bf16.mxu0 0
      %5954 = vmatpush1.bf16.msra.mxu0 %v5951
      %5955 = vmatprep.subr.bf16.mxu0 0
      %5956 = vmatpush1.bf16.msra.mxu0 0
      %5957 = vmatprep.subr.bf16.mxu0 0
      %5958 = vmatpush1.bf16.msra.mxu0 0
      %5959 = vmatprep.subr.bf16.mxu0 0
      %5960 = vmatpush1.bf16.msra.mxu0 0
      %5961 = vmatprep.subr.bf16.mxu0 0
      %5962 = vmatpush1.bf16.msra.mxu0 0
      %5963 = vmatprep.subr.bf16.mxu0 0
      %5964 = vmatpush1.bf16.msra.mxu0 0
      %5965 = vmatprep.subr.bf16.mxu0 0
      %5966 = vmatpush1.bf16.msra.mxu0 0
      %5967 = vmatprep.subr.bf16.mxu0 0
      %5968 = vmatpush1.bf16.msra.mxu0 0
      %5969 = vmatprep.subr.bf16.mxu0 0
      %5970 = vmatpush1.bf16.msra.mxu0 0
      %5971 = vmatprep.subr.bf16.mxu0 0
      %5972 = vmatpush1.bf16.msra.mxu0 0
      %5973 = vmatprep.subr.bf16.mxu0 0
      %5974 = vmatpush1.bf16.msra.mxu0 0
      %5975 = vmatprep.subr.bf16.mxu0 0
      %5976 = vmatpush1.bf16.msra.mxu0 0
      %5977 = vmatprep.subr.bf16.mxu0 0
      %5978 = vmatpush1.bf16.msra.mxu0 0
      %5979 = vmatprep.subr.bf16.mxu0 0
      %5980 = vmatpush1.bf16.msra.mxu0 0
      %5981 = vmatprep.subr.bf16.mxu0 0
      %5982 = vmatpush1.bf16.msra.mxu0 0
      %5983 = vmatprep.subr.bf16.mxu0 0
      %5984 = vmatpush1.bf16.msra.mxu0 0
      %5985 = vmatprep.mubr.bf16.mxu0 0
      %5986 = vmatmul.mubr.bf16.gmra.mrb[0].mxu0 %v5927
      %v5987 = vpop.f32.mrb[0].mxu0
      %v5988 = vadd.f32 0.0, %v5987
      %v5989 = vpop.f32.mrb[0].mxu0
      %v5990 = vpop.f32.mrb[0].mxu0
      %v5991 = vadd.f32 0.0, %v5990
      %v5992 = vpop.f32.mrb[0].mxu0
      %5993 = vmatprep.mubr.bf16.mxu0 0
      %5994 = vmatmul.mubr.bf16.gmra.mrb[0].mxu0 %v5930
      %v5995 = vpop.f32.mrb[0].mxu0
      %v5996 = vadd.f32 0.0, %v5995
      %v5997 = vpop.f32.mrb[0].mxu0
      %v5998 = vpop.f32.mrb[0].mxu0
      %v5999 = vadd.f32 0.0, %v5998
      %v6000 = vpop.f32.mrb[0].mxu0
      %6001 = vmatprep.mubr.bf16.mxu0 0
      %6002 = vmatmul.mubr.bf16.gmra.mrb[0].mxu0 %v5933
      %v6003 = vpop.f32.mrb[0].mxu0
      %v6004 = vadd.f32 0.0, %v6003
      %v6005 = vpop.f32.mrb[0].mxu0
      %v6006 = vpop.f32.mrb[0].mxu0
      %v6007 = vadd.f32 0.0, %v6006
      %v6008 = vpop.f32.mrb[0].mxu0
      %6009 = vmatprep.mubr.bf16.mxu0 0
      %6010 = vmatmul.mubr.bf16.gmra.mrb[0].mxu0 %v5936
      %v6011 = vpop.f32.mrb[0].mxu0
      %v6012 = vadd.f32 0.0, %v6011
      %v6013 = vpop.f32.mrb[0].mxu0
      %v6014 = vpop.f32.mrb[0].mxu0
      %v6015 = vadd.f32 0.0, %v6014
      %v6016 = vpop.f32.mrb[0].mxu0
      %6017 = vmatprep.mubr.bf16.mxu0 0
      %6018 = vmatmul.mubr.bf16.gmra.mrb[0].mxu0 %v5939
      %v6019 = vpop.f32.mrb[0].mxu0
      %v6020 = vadd.f32 0.0, %v6019
      %v6021 = vpop.f32.mrb[0].mxu0
      %v6022 = vpop.f32.mrb[0].mxu0
      %v6023 = vadd.f32 0.0, %v6022
      %v6024 = vpop.f32.mrb[0].mxu0
      %6025 = vmatprep.mubr.bf16.mxu0 0
      %6026 = vmatmul.mubr.bf16.gmra.mrb[0].mxu0 %v5942
      %v6027 = vpop.f32.mrb[0].mxu0
      %v6028 = vadd.f32 0.0, %v6027
      %v6029 = vpop.f32.mrb[0].mxu0
      %v6030 = vpop.f32.mrb[0].mxu0
      %v6031 = vadd.f32 0.0, %v6030
      %v6032 = vpop.f32.mrb[0].mxu0
      %6033 = vmatprep.mubr.bf16.mxu0 0
      %6034 = vmatmul.mubr.bf16.gmra.mrb[0].mxu0 %v5945
      %v6035 = vpop.f32.mrb[0].mxu0
      %v6036 = vadd.f32 0.0, %v6035
      %v6037 = vpop.f32.mrb[0].mxu0
      %v6038 = vpop.f32.mrb[0].mxu0
      %v6039 = vadd.f32 0.0, %v6038
      %v6040 = vpop.f32.mrb[0].mxu0
      %6041 = vmatprep.mubr.bf16.mxu0 0
      %6042 = vmatmul.mubr.bf16.gmra.mrb[0].mxu0 %v5948
      %v6043 = vpop.f32.mrb[0].mxu0
      %v6044 = vadd.f32 0.0, %v6043
      %v6045 = vpop.f32.mrb[0].mxu0
      %v6046 = vpop.f32.mrb[0].mxu0
      %v6047 = vadd.f32 0.0, %v6046
      %v6048 = vpop.f32.mrb[0].mxu0
      %6049 = vdwg.mxu0
      %v6050 = vadd.f32 %v5852, %v5988
      %v6051 = vadd.f32 %v5853, %v5991
      %v6052 = vadd.f32 %v5854, %v5996
      %v6053 = vadd.f32 %v5855, %v5999
      %v6054 = vadd.f32 %v5856, %v6004
      %v6055 = vadd.f32 %v5857, %v6007
      %v6056 = vadd.f32 %v5858, %v6012
      %v6057 = vadd.f32 %v5859, %v6015
      %v6058 = vadd.f32 %v5860, %v6020
      %v6059 = vadd.f32 %v5861, %v6023
      %v6060 = vadd.f32 %v5862, %v6028
      %v6061 = vadd.f32 %v5863, %v6031
      %v6062 = vadd.f32 %v5864, %v6036
      %v6063 = vadd.f32 %v5865, %v6039
      %v6064 = vadd.f32 %v5866, %v6044
      %v6065 = vadd.f32 %v5867, %v6047
      %v6066 = vld [vmem:[%s5868] sm:$0xf]
      %v6067 = vld [vmem:[%s5868 + $0x4] sm:$0xf]
      %v6068 = vld [vmem:[%s5868 + $0x8] sm:$0x1]
      %v6069 = vld [vmem:[%s5868 + $0xc] sm:$0xf]
      %v6070 = vld [vmem:[%s5868 + $0x10] sm:$0xf]
      %v6071 = vld [vmem:[%s5868 + $0x14] sm:$0x1]
      %v6072 = vld [vmem:[%s5868 + $0x18] sm:$0xf]
      %v6073 = vld [vmem:[%s5868 + $0x1c] sm:$0xf]
      %v6074 = vld [vmem:[%s5868 + $0x20] sm:$0x1]
      %v6075 = vld [vmem:[%s5868 + $0x24] sm:$0xf]
      %v6076 = vld [vmem:[%s5868 + $0x28] sm:$0xf]
      %v6077 = vld [vmem:[%s5868 + $0x2c] sm:$0x1]
      %v6078 = vld [vmem:[%s5868 + $0x30] sm:$0xf]
      %v6079 = vld [vmem:[%s5868 + $0x34] sm:$0xf]
      %v6080 = vld [vmem:[%s5868 + $0x38] sm:$0x1]
      %v6081 = vld [vmem:[%s5868 + $0x3c] sm:$0xf]
      %v6082 = vld [vmem:[%s5868 + $0x40] sm:$0xf]
      %v6083 = vld [vmem:[%s5868 + $0x44] sm:$0x1]
      %v6084 = vld [vmem:[%s5868 + $0x48] sm:$0xf]
      %v6085 = vld [vmem:[%s5868 + $0x4c] sm:$0xf]
      %v6086 = vld [vmem:[%s5868 + $0x50] sm:$0x1]
      %v6087 = vld [vmem:[%s5868 + $0x54] sm:$0xf]
      %v6088 = vld [vmem:[%s5868 + $0x58] sm:$0xf]
      %v6089 = vld [vmem:[%s5868 + $0x5c] sm:$0x1]
      %v6091 = vshrl.u32 %v6066, 16
      %v6093 = vrot.slane %v6091, 4
      %v6094 = vshll.u32 %v6066, 16
      %v6096 = vrot.slane %v6094, 5
      %v6097 = vor.u32 %v6093, %v6096
      %v6098 = vrot.slane %v6097, 4
      %v6100 = vshll.u32 %v6067, 16
      %v6102 = vrot.slane %v6100, 5
      %v6103 = vsel %vm842, %v6098, %v6102
      %v6104 = vshrl.u32 %v6067, 16
      %v6106 = vrot.slane %v6104, 4
      %v6107 = vor.u32 %v6106, %v6102
      %v6108 = vrot.slane %v6107, 4
      %v6110 = vshll.u32 %v6068, 16
      %v6112 = vrot.slane %v6110, 5
      %v6113 = vsel %vm842, %v6108, %v6112
      %v6115 = vshrl.u32 %v6069, 16
      %v6117 = vrot.slane %v6115, 4
      %v6118 = vshll.u32 %v6069, 16
      %v6120 = vrot.slane %v6118, 5
      %v6121 = vor.u32 %v6117, %v6120
      %v6122 = vrot.slane %v6121, 4
      %v6124 = vshll.u32 %v6070, 16
      %v6126 = vrot.slane %v6124, 5
      %v6127 = vsel %vm842, %v6122, %v6126
      %v6128 = vshrl.u32 %v6070, 16
      %v6130 = vrot.slane %v6128, 4
      %v6131 = vor.u32 %v6130, %v6126
      %v6132 = vrot.slane %v6131, 4
      %v6134 = vshll.u32 %v6071, 16
      %v6136 = vrot.slane %v6134, 5
      %v6137 = vsel %vm842, %v6132, %v6136
      %v6139 = vshrl.u32 %v6072, 16
      %v6141 = vrot.slane %v6139, 4
      %v6142 = vshll.u32 %v6072, 16
      %v6144 = vrot.slane %v6142, 5
      %v6145 = vor.u32 %v6141, %v6144
      %v6146 = vrot.slane %v6145, 4
      %v6148 = vshll.u32 %v6073, 16
      %v6150 = vrot.slane %v6148, 5
      %v6151 = vsel %vm842, %v6146, %v6150
      %v6152 = vshrl.u32 %v6073, 16
      %v6154 = vrot.slane %v6152, 4
      %v6155 = vor.u32 %v6154, %v6150
      %v6156 = vrot.slane %v6155, 4
      %v6158 = vshll.u32 %v6074, 16
      %v6160 = vrot.slane %v6158, 5
      %v6161 = vsel %vm842, %v6156, %v6160
      %v6163 = vshrl.u32 %v6075, 16
      %v6165 = vrot.slane %v6163, 4
      %v6166 = vshll.u32 %v6075, 16
      %v6168 = vrot.slane %v6166, 5
      %v6169 = vor.u32 %v6165, %v6168
      %v6170 = vrot.slane %v6169, 4
      %v6172 = vshll.u32 %v6076, 16
      %v6174 = vrot.slane %v6172, 5
      %v6175 = vsel %vm842, %v6170, %v6174
      %v6176 = vshrl.u32 %v6076, 16
      %v6178 = vrot.slane %v6176, 4
      %v6179 = vor.u32 %v6178, %v6174
      %v6180 = vrot.slane %v6179, 4
      %v6182 = vshll.u32 %v6077, 16
      %v6184 = vrot.slane %v6182, 5
      %v6185 = vsel %vm842, %v6180, %v6184
      %v6187 = vshrl.u32 %v6078, 16
      %v6189 = vrot.slane %v6187, 4
      %v6190 = vshll.u32 %v6078, 16
      %v6192 = vrot.slane %v6190, 5
      %v6193 = vor.u32 %v6189, %v6192
      %v6194 = vrot.slane %v6193, 4
      %v6196 = vshll.u32 %v6079, 16
      %v6198 = vrot.slane %v6196, 5
      %v6199 = vsel %vm842, %v6194, %v6198
      %v6200 = vshrl.u32 %v6079, 16
      %v6202 = vrot.slane %v6200, 4
      %v6203 = vor.u32 %v6202, %v6198
      %v6204 = vrot.slane %v6203, 4
      %v6206 = vshll.u32 %v6080, 16
      %v6208 = vrot.slane %v6206, 5
      %v6209 = vsel %vm842, %v6204, %v6208
      %v6211 = vshrl.u32 %v6081, 16
      %v6213 = vrot.slane %v6211, 4
      %v6214 = vshll.u32 %v6081, 16
      %v6216 = vrot.slane %v6214, 5
      %v6217 = vor.u32 %v6213, %v6216
      %v6218 = vrot.slane %v6217, 4
      %v6220 = vshll.u32 %v6082, 16
      %v6222 = vrot.slane %v6220, 5
      %v6223 = vsel %vm842, %v6218, %v6222
      %v6224 = vshrl.u32 %v6082, 16
      %v6226 = vrot.slane %v6224, 4
      %v6227 = vor.u32 %v6226, %v6222
      %v6228 = vrot.slane %v6227, 4
      %v6230 = vshll.u32 %v6083, 16
      %v6232 = vrot.slane %v6230, 5
      %v6233 = vsel %vm842, %v6228, %v6232
      %v6235 = vshrl.u32 %v6084, 16
      %v6237 = vrot.slane %v6235, 4
      %v6238 = vshll.u32 %v6084, 16
      %v6240 = vrot.slane %v6238, 5
      %v6241 = vor.u32 %v6237, %v6240
      %v6242 = vrot.slane %v6241, 4
      %v6244 = vshll.u32 %v6085, 16
      %v6246 = vrot.slane %v6244, 5
      %v6247 = vsel %vm842, %v6242, %v6246
      %v6248 = vshrl.u32 %v6085, 16
      %v6250 = vrot.slane %v6248, 4
      %v6251 = vor.u32 %v6250, %v6246
      %v6252 = vrot.slane %v6251, 4
      %v6254 = vshll.u32 %v6086, 16
      %v6256 = vrot.slane %v6254, 5
      %v6257 = vsel %vm842, %v6252, %v6256
      %v6259 = vshrl.u32 %v6087, 16
      %v6261 = vrot.slane %v6259, 4
      %v6262 = vshll.u32 %v6087, 16
      %v6264 = vrot.slane %v6262, 5
      %v6265 = vor.u32 %v6261, %v6264
      %v6266 = vrot.slane %v6265, 4
      %v6268 = vshll.u32 %v6088, 16
      %v6270 = vrot.slane %v6268, 5
      %v6271 = vsel %vm842, %v6266, %v6270
      %v6272 = vshrl.u32 %v6088, 16
      %v6274 = vrot.slane %v6272, 4
      %v6275 = vor.u32 %v6274, %v6270
      %v6276 = vrot.slane %v6275, 4
      %v6278 = vshll.u32 %v6089, 16
      %v6280 = vrot.slane %v6278, 5
      %v6281 = vsel %vm842, %v6276, %v6280
      %v6282 = vld [vmem:[%s3 + $0xc] sm:$0xc]
      %v6283 = vunpack.c.l.b16 %v6103
      %v6284 = vunpack.c.l.b16 %v6113
      %v6285 = vunpack.c.l.b16 %v6127
      %v6286 = vunpack.c.l.b16 %v6137
      %v6287 = vunpack.c.l.b16 %v6151
      %v6288 = vunpack.c.l.b16 %v6161
      %v6289 = vunpack.c.l.b16 %v6175
      %v6290 = vunpack.c.l.b16 %v6185
      %v6291 = vunpack.c.l.b16 %v6199
      %v6292 = vunpack.c.l.b16 %v6209
      %v6293 = vunpack.c.l.b16 %v6223
      %v6294 = vunpack.c.l.b16 %v6233
      %v6295 = vunpack.c.l.b16 %v6247
      %v6296 = vunpack.c.l.b16 %v6257
      %v6297 = vunpack.c.l.b16 %v6271
      %v6298 = vunpack.c.l.b16 %v6281
      %v6299 = vpack.c.b16 %v6284, %v6283
      %v6300 = vpack.c.b16 %v6286, %v6285
      %v6301 = vpack.c.b16 %v6288, %v6287
      %v6302 = vpack.c.b16 %v6290, %v6289
      %v6303 = vpack.c.b16 %v6292, %v6291
      %v6304 = vpack.c.b16 %v6294, %v6293
      %v6305 = vpack.c.b16 %v6296, %v6295
      %v6306 = vpack.c.b16 %v6298, %v6297
      %v6308 = vunpack.c.l.b16 %v6282
      %v6309 = vpack.c.b16 %v6308, %v6308
      %v6310 = vrot.slane %v6309, 2
      %v6312 = vsel %vm1118, %v6299, 0
      %v6315 = vsel %vm1118, %v6300, 0
      %v6318 = vsel %vm1118, %v6301, 0
      %v6321 = vsel %vm1118, %v6302, 0
      %v6324 = vsel %vm1118, %v6303, 0
      %v6327 = vsel %vm1118, %v6304, 0
      %v6330 = vsel %vm1118, %v6305, 0
      %v6333 = vsel %vm1118, %v6306, 0
      %v6336 = vsel %vm1149, %v6310, 0
      %6338 = vmatprep.subr.bf16.mxu0 0
      %6339 = vmatpush1.bf16.msra.mxu0 %v6336
      %6340 = vmatprep.subr.bf16.mxu0 0
      %6341 = vmatpush1.bf16.msra.mxu0 0
      %6342 = vmatprep.subr.bf16.mxu0 0
      %6343 = vmatpush1.bf16.msra.mxu0 0
      %6344 = vmatprep.subr.bf16.mxu0 0
      %6345 = vmatpush1.bf16.msra.mxu0 0
      %6346 = vmatprep.subr.bf16.mxu0 0
      %6347 = vmatpush1.bf16.msra.mxu0 0
      %6348 = vmatprep.subr.bf16.mxu0 0
      %6349 = vmatpush1.bf16.msra.mxu0 0
      %6350 = vmatprep.subr.bf16.mxu0 0
      %6351 = vmatpush1.bf16.msra.mxu0 0
      %6352 = vmatprep.subr.bf16.mxu0 0
      %6353 = vmatpush1.bf16.msra.mxu0 0
      %6354 = vmatprep.subr.bf16.mxu0 0
      %6355 = vmatpush1.bf16.msra.mxu0 0
      %6356 = vmatprep.subr.bf16.mxu0 0
      %6357 = vmatpush1.bf16.msra.mxu0 0
      %6358 = vmatprep.subr.bf16.mxu0 0
      %6359 = vmatpush1.bf16.msra.mxu0 0
      %6360 = vmatprep.subr.bf16.mxu0 0
      %6361 = vmatpush1.bf16.msra.mxu0 0
      %6362 = vmatprep.subr.bf16.mxu0 0
      %6363 = vmatpush1.bf16.msra.mxu0 0
      %6364 = vmatprep.subr.bf16.mxu0 0
      %6365 = vmatpush1.bf16.msra.mxu0 0
      %6366 = vmatprep.subr.bf16.mxu0 0
      %6367 = vmatpush1.bf16.msra.mxu0 0
      %6368 = vmatprep.subr.bf16.mxu0 0
      %6369 = vmatpush1.bf16.msra.mxu0 0
      %6370 = vmatprep.mubr.bf16.mxu0 0
      %6371 = vmatmul.mubr.bf16.gmra.mrb[0].mxu0 %v6312
      %v6372 = vpop.f32.mrb[0].mxu0
      %v6373 = vadd.f32 0.0, %v6372
      %v6374 = vpop.f32.mrb[0].mxu0
      %v6375 = vpop.f32.mrb[0].mxu0
      %v6376 = vadd.f32 0.0, %v6375
      %v6377 = vpop.f32.mrb[0].mxu0
      %6378 = vmatprep.mubr.bf16.mxu0 0
      %6379 = vmatmul.mubr.bf16.gmra.mrb[0].mxu0 %v6315
      %v6380 = vpop.f32.mrb[0].mxu0
      %v6381 = vadd.f32 0.0, %v6380
      %v6382 = vpop.f32.mrb[0].mxu0
      %v6383 = vpop.f32.mrb[0].mxu0
      %v6384 = vadd.f32 0.0, %v6383
      %v6385 = vpop.f32.mrb[0].mxu0
      %6386 = vmatprep.mubr.bf16.mxu0 0
      %6387 = vmatmul.mubr.bf16.gmra.mrb[0].mxu0 %v6318
      %v6388 = vpop.f32.mrb[0].mxu0
      %v6389 = vadd.f32 0.0, %v6388
      %v6390 = vpop.f32.mrb[0].mxu0
      %v6391 = vpop.f32.mrb[0].mxu0
      %v6392 = vadd.f32 0.0, %v6391
      %v6393 = vpop.f32.mrb[0].mxu0
      %6394 = vmatprep.mubr.bf16.mxu0 0
      %6395 = vmatmul.mubr.bf16.gmra.mrb[0].mxu0 %v6321
      %v6396 = vpop.f32.mrb[0].mxu0
      %v6397 = vadd.f32 0.0, %v6396
      %v6398 = vpop.f32.mrb[0].mxu0
      %v6399 = vpop.f32.mrb[0].mxu0
      %v6400 = vadd.f32 0.0, %v6399
      %v6401 = vpop.f32.mrb[0].mxu0
      %6402 = vmatprep.mubr.bf16.mxu0 0
      %6403 = vmatmul.mubr.bf16.gmra.mrb[0].mxu0 %v6324
      %v6404 = vpop.f32.mrb[0].mxu0
      %v6405 = vadd.f32 0.0, %v6404
      %v6406 = vpop.f32.mrb[0].mxu0
      %v6407 = vpop.f32.mrb[0].mxu0
      %v6408 = vadd.f32 0.0, %v6407
      %v6409 = vpop.f32.mrb[0].mxu0
      %6410 = vmatprep.mubr.bf16.mxu0 0
      %6411 = vmatmul.mubr.bf16.gmra.mrb[0].mxu0 %v6327
      %v6412 = vpop.f32.mrb[0].mxu0
      %v6413 = vadd.f32 0.0, %v6412
      %v6414 = vpop.f32.mrb[0].mxu0
      %v6415 = vpop.f32.mrb[0].mxu0
      %v6416 = vadd.f32 0.0, %v6415
      %v6417 = vpop.f32.mrb[0].mxu0
      %6418 = vmatprep.mubr.bf16.mxu0 0
      %6419 = vmatmul.mubr.bf16.gmra.mrb[0].mxu0 %v6330
      %v6420 = vpop.f32.mrb[0].mxu0
      %v6421 = vadd.f32 0.0, %v6420
      %v6422 = vpop.f32.mrb[0].mxu0
      %v6423 = vpop.f32.mrb[0].mxu0
      %v6424 = vadd.f32 0.0, %v6423
      %v6425 = vpop.f32.mrb[0].mxu0
      %6426 = vmatprep.mubr.bf16.mxu0 0
      %6427 = vmatmul.mubr.bf16.gmra.mrb[0].mxu0 %v6333
      %v6428 = vpop.f32.mrb[0].mxu0
      %v6429 = vadd.f32 0.0, %v6428
      %v6430 = vpop.f32.mrb[0].mxu0
      %v6431 = vpop.f32.mrb[0].mxu0
      %v6432 = vadd.f32 0.0, %v6431
      %v6433 = vpop.f32.mrb[0].mxu0
      %6434 = vdwg.mxu0
      %v6435 = vadd.f32 %v6050, %v6373
      %v6436 = vadd.f32 %v6051, %v6376
      %v6437 = vadd.f32 %v6052, %v6381
      %v6438 = vadd.f32 %v6053, %v6384
      %v6439 = vadd.f32 %v6054, %v6389
      %v6440 = vadd.f32 %v6055, %v6392
      %v6441 = vadd.f32 %v6056, %v6397
      %v6442 = vadd.f32 %v6057, %v6400
      %v6443 = vadd.f32 %v6058, %v6405
      %v6444 = vadd.f32 %v6059, %v6408
      %v6445 = vadd.f32 %v6060, %v6413
      %v6446 = vadd.f32 %v6061, %v6416
      %v6447 = vadd.f32 %v6062, %v6421
      %v6448 = vadd.f32 %v6063, %v6424
      %v6449 = vadd.f32 %v6064, %v6429
      %v6450 = vadd.f32 %v6065, %v6432
      %v6451 = vld [vmem:[%s5868] sm:$0xe]
      %v6452 = vld [vmem:[%s5868 + $0xc] sm:$0xe]
      %v6453 = vld [vmem:[%s5868 + $0x18] sm:$0xe]
      %v6454 = vld [vmem:[%s5868 + $0x24] sm:$0xe]
      %v6455 = vld [vmem:[%s5868 + $0x30] sm:$0xe]
      %v6456 = vld [vmem:[%s5868 + $0x3c] sm:$0xe]
      %v6457 = vld [vmem:[%s5868 + $0x48] sm:$0xe]
      %v6458 = vld [vmem:[%s5868 + $0x54] sm:$0xe]
      %v6483 = vrot.slane %v6451, 5
      %v6484 = vrot.slane %v6483, 4
      %v6485 = vrot.slane %v6067, 5
      %v6486 = vsel %vm1494, %v6484, %v6485
      %v6487 = vrot.slane %v6485, 4
      %v6488 = vrot.slane %v6068, 5
      %v6489 = vsel %vm1494, %v6487, %v6488
      %v6490 = vrot.slane %v6452, 5
      %v6491 = vrot.slane %v6490, 4
      %v6492 = vrot.slane %v6070, 5
      %v6493 = vsel %vm1494, %v6491, %v6492
      %v6494 = vrot.slane %v6492, 4
      %v6495 = vrot.slane %v6071, 5
      %v6496 = vsel %vm1494, %v6494, %v6495
      %v6497 = vrot.slane %v6453, 5
      %v6498 = vrot.slane %v6497, 4
      %v6499 = vrot.slane %v6073, 5
      %v6500 = vsel %vm1494, %v6498, %v6499
      %v6501 = vrot.slane %v6499, 4
      %v6502 = vrot.slane %v6074, 5
      %v6503 = vsel %vm1494, %v6501, %v6502
      %v6504 = vrot.slane %v6454, 5
      %v6505 = vrot.slane %v6504, 4
      %v6506 = vrot.slane %v6076, 5
      %v6507 = vsel %vm1494, %v6505, %v6506
      %v6508 = vrot.slane %v6506, 4
      %v6509 = vrot.slane %v6077, 5
      %v6510 = vsel %vm1494, %v6508, %v6509
      %v6511 = vrot.slane %v6455, 5
      %v6512 = vrot.slane %v6511, 4
      %v6513 = vrot.slane %v6079, 5
      %v6514 = vsel %vm1494, %v6512, %v6513
      %v6515 = vrot.slane %v6513, 4
      %v6516 = vrot.slane %v6080, 5
      %v6517 = vsel %vm1494, %v6515, %v6516
      %v6518 = vrot.slane %v6456, 5
      %v6519 = vrot.slane %v6518, 4
      %v6520 = vrot.slane %v6082, 5
      %v6521 = vsel %vm1494, %v6519, %v6520
      %v6522 = vrot.slane %v6520, 4
      %v6523 = vrot.slane %v6083, 5
      %v6524 = vsel %vm1494, %v6522, %v6523
      %v6525 = vrot.slane %v6457, 5
      %v6526 = vrot.slane %v6525, 4
      %v6527 = vrot.slane %v6085, 5
      %v6528 = vsel %vm1494, %v6526, %v6527
      %v6529 = vrot.slane %v6527, 4
      %v6530 = vrot.slane %v6086, 5
      %v6531 = vsel %vm1494, %v6529, %v6530
      %v6532 = vrot.slane %v6458, 5
      %v6533 = vrot.slane %v6532, 4
      %v6534 = vrot.slane %v6088, 5
      %v6535 = vsel %vm1494, %v6533, %v6534
      %v6536 = vrot.slane %v6534, 4
      %v6537 = vrot.slane %v6089, 5
      %v6538 = vsel %vm1494, %v6536, %v6537
      %v6539 = vld [vmem:[%s3 + $0x10] sm:$0x3]
      %v6540 = vunpack.c.l.b16 %v6486
      %v6541 = vunpack.c.l.b16 %v6489
      %v6542 = vunpack.c.l.b16 %v6493
      %v6543 = vunpack.c.l.b16 %v6496
      %v6544 = vunpack.c.l.b16 %v6500
      %v6545 = vunpack.c.l.b16 %v6503
      %v6546 = vunpack.c.l.b16 %v6507
      %v6547 = vunpack.c.l.b16 %v6510
      %v6548 = vunpack.c.l.b16 %v6514
      %v6549 = vunpack.c.l.b16 %v6517
      %v6550 = vunpack.c.l.b16 %v6521
      %v6551 = vunpack.c.l.b16 %v6524
      %v6552 = vunpack.c.l.b16 %v6528
      %v6553 = vunpack.c.l.b16 %v6531
      %v6554 = vunpack.c.l.b16 %v6535
      %v6555 = vunpack.c.l.b16 %v6538
      %v6556 = vpack.c.b16 %v6541, %v6540
      %v6557 = vpack.c.b16 %v6543, %v6542
      %v6558 = vpack.c.b16 %v6545, %v6544
      %v6559 = vpack.c.b16 %v6547, %v6546
      %v6560 = vpack.c.b16 %v6549, %v6548
      %v6561 = vpack.c.b16 %v6551, %v6550
      %v6562 = vpack.c.b16 %v6553, %v6552
      %v6563 = vpack.c.b16 %v6555, %v6554
      %v6565 = vsel %vm1118, %v6556, 0
      %v6568 = vsel %vm1118, %v6557, 0
      %v6571 = vsel %vm1118, %v6558, 0
      %v6574 = vsel %vm1118, %v6559, 0
      %v6577 = vsel %vm1118, %v6560, 0
      %v6580 = vsel %vm1118, %v6561, 0
      %v6583 = vsel %vm1118, %v6562, 0
      %v6586 = vsel %vm1118, %v6563, 0
      %v6589 = vsel %vm1149, %v6539, 0
      %6591 = vmatprep.subr.bf16.mxu0 0
      %6592 = vmatpush1.bf16.msra.mxu0 %v6589
      %6593 = vmatprep.subr.bf16.mxu0 0
      %6594 = vmatpush1.bf16.msra.mxu0 0
      %6595 = vmatprep.subr.bf16.mxu0 0
      %6596 = vmatpush1.bf16.msra.mxu0 0
      %6597 = vmatprep.subr.bf16.mxu0 0
      %6598 = vmatpush1.bf16.msra.mxu0 0
      %6599 = vmatprep.subr.bf16.mxu0 0
      %6600 = vmatpush1.bf16.msra.mxu0 0
      %6601 = vmatprep.subr.bf16.mxu0 0
      %6602 = vmatpush1.bf16.msra.mxu0 0
      %6603 = vmatprep.subr.bf16.mxu0 0
      %6604 = vmatpush1.bf16.msra.mxu0 0
      %6605 = vmatprep.subr.bf16.mxu0 0
      %6606 = vmatpush1.bf16.msra.mxu0 0
      %6607 = vmatprep.subr.bf16.mxu0 0
      %6608 = vmatpush1.bf16.msra.mxu0 0
      %6609 = vmatprep.subr.bf16.mxu0 0
      %6610 = vmatpush1.bf16.msra.mxu0 0
      %6611 = vmatprep.subr.bf16.mxu0 0
      %6612 = vmatpush1.bf16.msra.mxu0 0
      %6613 = vmatprep.subr.bf16.mxu0 0
      %6614 = vmatpush1.bf16.msra.mxu0 0
      %6615 = vmatprep.subr.bf16.mxu0 0
      %6616 = vmatpush1.bf16.msra.mxu0 0
      %6617 = vmatprep.subr.bf16.mxu0 0
      %6618 = vmatpush1.bf16.msra.mxu0 0
      %6619 = vmatprep.subr.bf16.mxu0 0
      %6620 = vmatpush1.bf16.msra.mxu0 0
      %6621 = vmatprep.subr.bf16.mxu0 0
      %6622 = vmatpush1.bf16.msra.mxu0 0
      %6623 = vmatprep.mubr.bf16.mxu0 0
      %6624 = vmatmul.mubr.bf16.gmra.mrb[0].mxu0 %v6565
      %v6625 = vpop.f32.mrb[0].mxu0
      %v6626 = vadd.f32 0.0, %v6625
      %v6627 = vpop.f32.mrb[0].mxu0
      %v6628 = vpop.f32.mrb[0].mxu0
      %v6629 = vadd.f32 0.0, %v6628
      %v6630 = vpop.f32.mrb[0].mxu0
      %6631 = vmatprep.mubr.bf16.mxu0 0
      %6632 = vmatmul.mubr.bf16.gmra.mrb[0].mxu0 %v6568
      %v6633 = vpop.f32.mrb[0].mxu0
      %v6634 = vadd.f32 0.0, %v6633
      %v6635 = vpop.f32.mrb[0].mxu0
      %v6636 = vpop.f32.mrb[0].mxu0
      %v6637 = vadd.f32 0.0, %v6636
      %v6638 = vpop.f32.mrb[0].mxu0
      %6639 = vmatprep.mubr.bf16.mxu0 0
      %6640 = vmatmul.mubr.bf16.gmra.mrb[0].mxu0 %v6571
      %v6641 = vpop.f32.mrb[0].mxu0
      %v6642 = vadd.f32 0.0, %v6641
      %v6643 = vpop.f32.mrb[0].mxu0
      %v6644 = vpop.f32.mrb[0].mxu0
      %v6645 = vadd.f32 0.0, %v6644
      %v6646 = vpop.f32.mrb[0].mxu0
      %6647 = vmatprep.mubr.bf16.mxu0 0
      %6648 = vmatmul.mubr.bf16.gmra.mrb[0].mxu0 %v6574
      %v6649 = vpop.f32.mrb[0].mxu0
      %v6650 = vadd.f32 0.0, %v6649
      %v6651 = vpop.f32.mrb[0].mxu0
      %v6652 = vpop.f32.mrb[0].mxu0
      %v6653 = vadd.f32 0.0, %v6652
      %v6654 = vpop.f32.mrb[0].mxu0
      %6655 = vmatprep.mubr.bf16.mxu0 0
      %6656 = vmatmul.mubr.bf16.gmra.mrb[0].mxu0 %v6577
      %v6657 = vpop.f32.mrb[0].mxu0
      %v6658 = vadd.f32 0.0, %v6657
      %v6659 = vpop.f32.mrb[0].mxu0
      %v6660 = vpop.f32.mrb[0].mxu0
      %v6661 = vadd.f32 0.0, %v6660
      %v6662 = vpop.f32.mrb[0].mxu0
      %6663 = vmatprep.mubr.bf16.mxu0 0
      %6664 = vmatmul.mubr.bf16.gmra.mrb[0].mxu0 %v6580
      %v6665 = vpop.f32.mrb[0].mxu0
      %v6666 = vadd.f32 0.0, %v6665
      %v6667 = vpop.f32.mrb[0].mxu0
      %v6668 = vpop.f32.mrb[0].mxu0
      %v6669 = vadd.f32 0.0, %v6668
      %v6670 = vpop.f32.mrb[0].mxu0
      %6671 = vmatprep.mubr.bf16.mxu0 0
      %6672 = vmatmul.mubr.bf16.gmra.mrb[0].mxu0 %v6583
      %v6673 = vpop.f32.mrb[0].mxu0
      %v6674 = vadd.f32 0.0, %v6673
      %v6675 = vpop.f32.mrb[0].mxu0
      %v6676 = vpop.f32.mrb[0].mxu0
      %v6677 = vadd.f32 0.0, %v6676
      %v6678 = vpop.f32.mrb[0].mxu0
      %6679 = vmatprep.mubr.bf16.mxu0 0
      %6680 = vmatmul.mubr.bf16.gmra.mrb[0].mxu0 %v6586
      %v6681 = vpop.f32.mrb[0].mxu0
      %v6682 = vadd.f32 0.0, %v6681
      %v6683 = vpop.f32.mrb[0].mxu0
      %v6684 = vpop.f32.mrb[0].mxu0
      %v6685 = vadd.f32 0.0, %v6684
      %v6686 = vpop.f32.mrb[0].mxu0
      %6687 = vdwg.mxu0
      %v6688 = vadd.f32 %v6435, %v6626
      %v6689 = vadd.f32 %v6436, %v6629
      %v6690 = vadd.f32 %v6437, %v6634
      %v6691 = vadd.f32 %v6438, %v6637
      %v6692 = vadd.f32 %v6439, %v6642
      %v6693 = vadd.f32 %v6440, %v6645
      %v6694 = vadd.f32 %v6441, %v6650
      %v6695 = vadd.f32 %v6442, %v6653
      %v6696 = vadd.f32 %v6443, %v6658
      %v6697 = vadd.f32 %v6444, %v6661
      %v6698 = vadd.f32 %v6445, %v6666
      %v6699 = vadd.f32 %v6446, %v6669
      %v6700 = vadd.f32 %v6447, %v6674
      %v6701 = vadd.f32 %v6448, %v6677
      %v6702 = vadd.f32 %v6449, %v6682
      %v6703 = vadd.f32 %v6450, %v6685
      %v6704 = vld [vmem:[%s4] sm:$0x1]
      %v6706 = vlaneseq
      %v6707 = vshrl.u32 %v6706, 7
      %v6708 = vsub.s32 0, %v6707
      %v6709 = vrot.slane %v6704, %v6708
      %v6711 = vadd.f32 %v6688, %v6709
      %v6712 = vadd.f32 %v6689, %v6709
      %v6713 = vadd.f32 %v6690, %v6709
      %v6714 = vadd.f32 %v6691, %v6709
      %v6715 = vadd.f32 %v6692, %v6709
      %v6716 = vadd.f32 %v6693, %v6709
      %v6717 = vadd.f32 %v6694, %v6709
      %v6718 = vadd.f32 %v6695, %v6709
      %v6719 = vadd.f32 %v6696, %v6709
      %v6720 = vadd.f32 %v6697, %v6709
      %v6721 = vadd.f32 %v6698, %v6709
      %v6722 = vadd.f32 %v6699, %v6709
      %v6723 = vadd.f32 %v6700, %v6709
      %v6724 = vadd.f32 %v6701, %v6709
      %v6725 = vadd.f32 %v6702, %v6709
      %v6726 = vadd.f32 %v6703, %v6709
      %v6727 = vadd.f32 %v6711, %v331
      %v6728 = vadd.f32 %v6712, %v332
      %v6729 = vadd.f32 %v6713, %v333
      %v6730 = vadd.f32 %v6714, %v334
      %v6731 = vadd.f32 %v6715, %v335
      %v6732 = vadd.f32 %v6716, %v336
      %v6733 = vadd.f32 %v6717, %v337
      %v6734 = vadd.f32 %v6718, %v338
      %v6735 = vadd.f32 %v6719, %v339
      %v6736 = vadd.f32 %v6720, %v340
      %v6737 = vadd.f32 %v6721, %v341
      %v6738 = vadd.f32 %v6722, %v342
      %v6739 = vadd.f32 %v6723, %v343
      %v6740 = vadd.f32 %v6724, %v344
      %v6741 = vadd.f32 %v6725, %v345
      %v6742 = vadd.f32 %v6726, %v346
      %v6743 = vmax.f32 %v6727, 0.0
      %v6744 = vmax.f32 %v6728, 0.0
      %v6745 = vmax.f32 %v6729, 0.0
      %v6746 = vmax.f32 %v6730, 0.0
      %v6747 = vmax.f32 %v6731, 0.0
      %v6748 = vmax.f32 %v6732, 0.0
      %v6749 = vmax.f32 %v6733, 0.0
      %v6750 = vmax.f32 %v6734, 0.0
      %v6751 = vmax.f32 %v6735, 0.0
      %v6752 = vmax.f32 %v6736, 0.0
      %v6753 = vmax.f32 %v6737, 0.0
      %v6754 = vmax.f32 %v6738, 0.0
      %v6755 = vmax.f32 %v6739, 0.0
      %v6756 = vmax.f32 %v6740, 0.0
      %v6757 = vmax.f32 %v6741, 0.0
      %v6758 = vmax.f32 %v6742, 0.0
      %6759 = vst.msk [vmem:[%s248] sm:$0xff] %vm1118, %v6743
      %6760 = vst.msk [vmem:[%s248 + $0x8] sm:$0xff] %vm1118, %v6744
      %6761 = vst.msk [vmem:[%s248 + $0x10] sm:$0xff] %vm1118, %v6745
      %6762 = vst.msk [vmem:[%s248 + $0x18] sm:$0xff] %vm1118, %v6746
      %6763 = vst.msk [vmem:[%s248 + $0x20] sm:$0xff] %vm1118, %v6747
      %6764 = vst.msk [vmem:[%s248 + $0x28] sm:$0xff] %vm1118, %v6748
      %6765 = vst.msk [vmem:[%s248 + $0x30] sm:$0xff] %vm1118, %v6749
      %6766 = vst.msk [vmem:[%s248 + $0x38] sm:$0xff] %vm1118, %v6750
      %6767 = vst.msk [vmem:[%s248 + $0x40] sm:$0xff] %vm1118, %v6751
      %6768 = vst.msk [vmem:[%s248 + $0x48] sm:$0xff] %vm1118, %v6752
      %6769 = vst.msk [vmem:[%s248 + $0x50] sm:$0xff] %vm1118, %v6753
      %6770 = vst.msk [vmem:[%s248 + $0x58] sm:$0xff] %vm1118, %v6754
      %6771 = vst.msk [vmem:[%s248 + $0x60] sm:$0xff] %vm1118, %v6755
      %6772 = vst.msk [vmem:[%s248 + $0x68] sm:$0xff] %vm1118, %v6756
      %6773 = vst.msk [vmem:[%s248 + $0x70] sm:$0xff] %vm1118, %v6757
      %6774 = vst.msk [vmem:[%s248 + $0x78] sm:$0xff] %vm1118, %v6758
      %s6775 = smul.u32 8, %s21
      %p6776 = scmp.lt.s32.totalorder %s20, 1
      %s6777 = scalar_select %p6776, %s20, 1
      %p6778 = scmp.lt.s32.totalorder %s6775, 15
      %s6779 = scalar_select %p6778, %s6775, 15
      %s6780 = smul.addr %s6779, 2
      %s6781 = smul.addr %s6777, 32
      %s6782 = sadd.s32 %s6780, %s6781
      %s6783 = smul.addr %s6782, 8
      %s6784 = scalar_lea.vmem %s5, %s6783
      // Predicated region
      $region65: #{tpu_custom_call.1} parent=39 // pred_check
        %p6785 = pneg %p158
      $region66: #{tpu_custom_call.1} parent=39 // pred_check_branch
        %6787 = sbr.rel (%p6785) target = $region68
      $region67: #{tpu_custom_call.1} parent=39 // pred_region
        %s6788 = smul.u32 8, %s21
      $region68: #{tpu_custom_call.1} parent=39 // pred_fallthru
        _
    $region40: #{tpu_custom_call.1} parent=5 // pred_fallthru
      _
    %p6789 = scmp.le.s32.totalorder 2, %s11
    // Predicated region
    $region69: #{tpu_custom_call.1} parent=5 // pred_check
      %p6790 = pneg %p6789
    $region70: #{tpu_custom_call.1} parent=5 // pred_check_branch
      %6792 = sbr.rel (%p6790) target = $region72
    $region71: #{tpu_custom_call.1} parent=5 // pred_region
      %s6793 = ssub.s32 %s11, 2
      // Predicated region
      $region73: #{tpu_custom_call.1} parent=71 // pred_check
        %p6794 = pneg %p164
      $region74: #{tpu_custom_call.1} parent=71 // pred_check_branch
        %6796 = sbr.rel (%p6794) target = $region76
      $region75: #{tpu_custom_call.1} parent=71 // pred_region
        %s6797 = smul.u32 8, %s23
        %p6798 = scmp.lt.s32.totalorder %s22, 1
        %s6799 = scalar_select %p6798, %s22, 1
        %p6800 = scmp.lt.s32.totalorder %s6797, 15
        %s6801 = scalar_select %p6800, %s6797, 15
        %s6802 = smul.addr %s6801, 2
        %s6803 = smul.addr %s6799, 32
        %s6804 = sadd.s32 %s6802, %s6803
        %s6805 = smul.addr %s6804, 8
        %s6806 = scalar_lea.vmem %s5, %s6805
      $region76: #{tpu_custom_call.1} parent=71 // pred_fallthru
        _
    $region72: #{tpu_custom_call.1} parent=5 // pred_fallthru
      _
  $region6: #{tpu_custom_call.1} parent=0 // loop_footer
    %s15 = sadd.s32 1, %s11
  $region7: #{tpu_custom_call.1} parent=0 // loop_footer_branch
    %10 = sbr.rel target = $region3
  $region8: #{tpu_custom_call.1} parent=0 // loop_exit
    _

</llo_original>
